<compile_context>
chip_gen: v7x
topology: tpu7x:2x2x1
jax: 0.10.0
libtpu: 0.0.40
codegen_flags: <defaults>
</compile_context>

<pallas_src>
import math
import functools

import jax
import jax.numpy as jnp
from jax.experimental import pallas as pl
from jax.experimental.pallas import tpu as pltpu


# ----------------------------------------------------------------------------
# Kernel 1: fused input projections (q / v_receiver / v_sender)
# ----------------------------------------------------------------------------
def _in_proj_kernel(x_ref, rvr_ref, svr_ref, rr_ref, rsd_ref,
                    qw_ref, rw_ref, sw_ref, mw_ref,
                    q_ref, vr_ref, vs_ref, *, mm_dtype):
    # a @ w.T with w kept in torch (out, in) layout (no HBM-level transpose).
    def mm(a, w_ref):
        return jax.lax.dot_general(
            a, w_ref[...], (((1,), (1,)), ((), ())),
            preferred_element_type=jnp.float32)

    x = x_ref[...].astype(mm_dtype)
    q_ref[...] = mm(x, qw_ref)
    vr_ref[...] = (mm(x, rw_ref)
                   + mm(rvr_ref[...].astype(mm_dtype), mw_ref)
                   + rr_ref[...])
    vs_ref[...] = (mm(x, sw_ref)
                   + mm(svr_ref[...].astype(mm_dtype), mw_ref)
                   + rsd_ref[...])


def fused_in_proj(x2, rvr2, svr2, rr2, rsd2, qw, rw, sw, mw,
                  *, mm_dtype=jnp.bfloat16, tm=256, tn=256):
    M, C = x2.shape
    tm = min(tm, M)
    tn = min(tn, C)
    grid = (pl.cdiv(M, tm), pl.cdiv(C, tn))
    act_spec = pl.BlockSpec((tm, C), lambda i, j: (i, 0))
    add_spec = pl.BlockSpec((tm, tn), lambda i, j: (i, j))
    w_spec = pl.BlockSpec((tn, C), lambda i, j: (j, 0))
    out_spec = pl.BlockSpec((tm, tn), lambda i, j: (i, j))
    oshape = jax.ShapeDtypeStruct((M, C), jnp.float32)
    return pl.pallas_call(
        functools.partial(_in_proj_kernel, mm_dtype=mm_dtype),
        out_shape=(oshape, oshape, oshape),
        grid=grid,
        in_specs=[act_spec, act_spec, act_spec, add_spec, add_spec,
                  w_spec, w_spec, w_spec, w_spec],
        out_specs=(out_spec, out_spec, out_spec),
        compiler_params=pltpu.CompilerParams(
            dimension_semantics=("parallel", "parallel")),
    )(x2, rvr2, svr2, rr2, rsd2, qw, rw, sw, mw)


# ----------------------------------------------------------------------------
# Kernel 2: TIE attention core (all heads of one batch element per grid step)
# ----------------------------------------------------------------------------
def _tie_attn_kernel(q_ref, vr_ref, vs_ref, mask_ref, o_ref,
                     *, scale, eps, num_heads, head_dim, mm_dtype):
    Dh = head_dim
    inv_d = jnp.float32(1.0 / Dh)
    neg_inf = jnp.float32(-jnp.inf)

    def dot_bt(a, b):  # a @ b.T, f32 accumulation on the MXU
        return jax.lax.dot_general(
            a, b, (((1,), (1,)), ((), ())), preferred_element_type=jnp.float32)

    ones_row = jnp.ones((1, Dh), jnp.float32)

    for h in range(num_heads):                     # static unroll, H is small
        sl = slice(h * Dh, (h + 1) * Dh)
        qh, vrh, vsh = q_ref[:, sl], vr_ref[:, sl], vs_ref[:, sl]   # (N, Dh) f32
        mask = mask_ref[h] != 0                                     # (N, N) bool

        qm = qh.astype(mm_dtype)
        vrm = vrh.astype(mm_dtype)
        vsm = vsh.astype(mm_dtype)

        # per-query (sublane-axis) statistics: cheap reductions
        mean_r = jnp.sum(vrh, axis=-1, keepdims=True) * inv_d       # (N, 1)
        r2 = jnp.sum(vrh * vrh, axis=-1, keepdims=True) * inv_d
        q_dot_vr = jnp.sum(qh * vrh, axis=-1, keepdims=True)
        q_sum = jnp.sum(qh, axis=-1, keepdims=True)

        # per-key statistics produced directly as lane rows (1, N) with one
        # K=Dh mat-vec each (replaces the old K=1 (N,N) outer-product matmuls).
        mean_s = dot_bt(ones_row, vsh) * inv_d                      # (1, N)
        s2 = dot_bt(ones_row, vsh * vsh) * inv_d                    # (1, N)

        mean_rs = mean_r + mean_s                                   # (N, N) via VPU bcast
        rs = dot_bt(vrm, vsm) * inv_d                               # (N, N) MXU (bf16 ops)
        var = r2 + 2.0 * rs + s2 - mean_rs * mean_rs
        inv_std = jax.lax.rsqrt(jnp.maximum(var, 0.0) + eps)        # one EUP rsqrt

        # raw interaction scores: q_i . (v_recv_i + v_send_j)
        attn = dot_bt(qm, vsm) + q_dot_vr
        attn = (attn - q_sum * mean_rs) * (inv_std * jnp.float32(scale))
        attn = jnp.where(mask, neg_inf, attn)

        m = jnp.max(attn, axis=-1, keepdims=True)
        p = jnp.exp(attn - m)                                       # masked lanes -> 0
        inv_den = 1.0 / jnp.sum(p, axis=-1, keepdims=True)          # (N, 1)
        attn_std = p * inv_den * inv_std

        xh = jnp.dot(attn_std.astype(mm_dtype), vsm,
                     preferred_element_type=jnp.float32)            # (N, Dh)
        xh = xh - jnp.sum(mean_rs * attn_std, axis=-1, keepdims=True)
        xh = xh + jnp.sum(attn_std, axis=-1, keepdims=True) * vrh
        o_ref[:, sl] = xh


def tie_attention_core(q, vr, vs, mask_i8, *, scale, eps, num_heads, mm_dtype):
    B, N, C = q.shape
    Dh = C // num_heads
    kernel = functools.partial(_tie_attn_kernel, scale=scale, eps=eps,
                               num_heads=num_heads, head_dim=Dh, mm_dtype=mm_dtype)
    spec_x = pl.BlockSpec((pl.Squeezed(), N, C), lambda b: (b, 0, 0))
    spec_m = pl.BlockSpec((pl.Squeezed(), num_heads, N, N), lambda b: (b, 0, 0, 0))
    return pl.pallas_call(
        kernel,
        out_shape=jax.ShapeDtypeStruct((B, N, C), jnp.float32),
        grid=(B,),                       # parallel -> splits across v7x TensorCores
        in_specs=[spec_x, spec_x, spec_x, spec_m],
        out_specs=spec_x,
        compiler_params=pltpu.CompilerParams(dimension_semantics=("parallel",)),
    )(q, vr, vs, mask_i8)


# ----------------------------------------------------------------------------
# Kernel 3: fused output projections (affine + proj / r_proj / s_proj)
# ----------------------------------------------------------------------------
def _out_proj_kernel(xa_ref, vr_ref, vs_ref, nw_ref, nb_ref,
                     pw_ref, pb_ref, rw_ref, rb_ref, sw_ref, sb_ref,
                     xo_ref, vro_ref, vso_ref, *, mm_dtype):
    def mm(a, w_ref):
        return jax.lax.dot_general(
            a.astype(mm_dtype), w_ref[...], (((1,), (1,)), ((), ())),
            preferred_element_type=jnp.float32)

    xn = xa_ref[...] * nw_ref[...] + nb_ref[...]   # n_weight / n_bias affine, f32
    xo_ref[...] = mm(xn, pw_ref) + pb_ref[...]
    vro_ref[...] = mm(vr_ref[...], rw_ref) + rb_ref[...]
    vso_ref[...] = mm(vs_ref[...], sw_ref) + sb_ref[...]


def fused_out_proj(xa2, vr2, vs2, nw, nb, pw, pb, rw, rb, sw, sb,
                   *, mm_dtype=jnp.bfloat16, tm=256, tn=256):
    M, C = xa2.shape
    tm = min(tm, M)
    tn = min(tn, C)
    grid = (pl.cdiv(M, tm), pl.cdiv(C, tn))
    act_spec = pl.BlockSpec((tm, C), lambda i, j: (i, 0))
    vec_spec = pl.BlockSpec((1, C), lambda i, j: (0, 0))
    w_spec = pl.BlockSpec((tn, C), lambda i, j: (j, 0))
    b_spec = pl.BlockSpec((1, tn), lambda i, j: (0, j))
    out_spec = pl.BlockSpec((tm, tn), lambda i, j: (i, j))
    oshape = jax.ShapeDtypeStruct((M, C), jnp.float32)
    return pl.pallas_call(
        functools.partial(_out_proj_kernel, mm_dtype=mm_dtype),
        out_shape=(oshape, oshape, oshape),
        grid=grid,
        in_specs=[act_spec, act_spec, act_spec, vec_spec, vec_spec,
                  w_spec, b_spec, w_spec, b_spec, w_spec, b_spec],
        out_specs=(out_spec, out_spec, out_spec),
        compiler_params=pltpu.CompilerParams(
            dimension_semantics=("parallel", "parallel")),
    )(xa2, vr2, vs2, nw, nb, pw, pb, rw, rb, sw, sb)


# ----------------------------------------------------------------------------
# Full AttentionTIE forward (JAX glue + Pallas kernels)
# ----------------------------------------------------------------------------
def attention_tie_forward(params, x, attn_mask, receiver_val_res, sender_val_res,
                          residual_receiver, residual_sender, *, num_heads, eps=1e-5,
                          matmul_dtype=jnp.bfloat16, tm=256, tn=256):
    # x etc.: (N_particles, B, C); attn_mask: (B, H, N, N), True/1 = masked.
    xb = jnp.transpose(x, (1, 0, 2))                     # (B, N, C)
    rvr = jnp.transpose(receiver_val_res, (1, 0, 2))
    svr = jnp.transpose(sender_val_res, (1, 0, 2))
    rr = jnp.transpose(residual_receiver, (1, 0, 2))
    rsd = jnp.transpose(residual_sender, (1, 0, 2))
    B, N, C = xb.shape
    H = num_heads
    Dh = C // H
    scale = Dh ** (-0.5)
    M = B * N

    rel = params["relation_attn"]                        # (C, 3C), y = v @ W.T layout
    mw = rel[:, :C].astype(matmul_dtype)                 # memory weight
    rw = rel[:, C:2 * C].astype(matmul_dtype)            # receiver weight
    sw = rel[:, 2 * C:].astype(matmul_dtype)             # sender weight
    qw = params["q_proj_w"].astype(matmul_dtype)

    q2, vr2, vs2 = fused_in_proj(
        xb.reshape(M, C), rvr.reshape(M, C), svr.reshape(M, C),
        rr.reshape(M, C), rsd.reshape(M, C),
        qw, rw, sw, mw, mm_dtype=matmul_dtype, tm=tm, tn=tn)

    mask_i8 = attn_mask.astype(jnp.int8)                 # 4x less mask HBM traffic
    x_attn = tie_attention_core(
        q2.reshape(B, N, C), vr2.reshape(B, N, C), vs2.reshape(B, N, C),
        mask_i8, scale=scale, eps=eps, num_heads=H, mm_dtype=matmul_dtype)

    # TODO(synk): key_padding_mask / output_mask / node_r_mask / dropout and the
    # s_attn/s_mean/s_std=False branches are not exercised (module defaults).
    xo2, vro2, vso2 = fused_out_proj(
        x_attn.reshape(M, C), vr2, vs2,
        params["n_weight"].reshape(1, C), params["n_bias"].reshape(1, C),
        params["proj_w"].astype(matmul_dtype), params["proj_b"].reshape(1, C),
        params["r_proj_w"].astype(matmul_dtype), params["r_proj_b"].reshape(1, C),
        params["s_proj_w"].astype(matmul_dtype), params["s_proj_b"].reshape(1, C),
        mm_dtype=matmul_dtype, tm=tm, tn=tn)

    def to_seq_major(t2):
        return jnp.transpose(t2.reshape(B, N, C), (1, 0, 2))

    return to_seq_major(xo2), to_seq_major(vro2), to_seq_major(vso2)


# ----------------------------------------------------------------------------
# Pure-JAX f32 reference (same math, no Pallas) for sanity checking
# ----------------------------------------------------------------------------
def reference_forward(params, x, attn_mask, rvr, svr, rr, rsd, *, num_heads, eps=1e-5):
    xb = jnp.transpose(x, (1, 0, 2))
    rvr = jnp.transpose(rvr, (1, 0, 2))
    svr = jnp.transpose(svr, (1, 0, 2))
    rr = jnp.transpose(rr, (1, 0, 2))
    rsd = jnp.transpose(rsd, (1, 0, 2))
    B, N, C = xb.shape
    H = num_heads
    Dh = C // H
    scale = Dh ** (-0.5)

    rel = params["relation_attn"]
    memory_w, receiver_w, sender_w = rel[:, :C], rel[:, C:2 * C], rel[:, 2 * C:]

    memory_r = rvr @ memory_w.T
    memory_s = svr @ memory_w.T
    v_receiver = xb @ receiver_w.T + memory_r + rr
    v_sender = xb @ sender_w.T + memory_s + rsd
    q = xb @ params["q_proj_w"].T

    def to_heads(t):
        return jnp.transpose(t.reshape(B, N, H, Dh), (0, 2, 1, 3))

    qh, vrh, vsh = to_heads(q), to_heads(v_receiver), to_heads(v_sender)

    mean_r = jnp.mean(vrh, -1, keepdims=True)
    mean_s = jnp.mean(vsh, -1, keepdims=True)
    mean_rs = mean_r + jnp.swapaxes(mean_s, -1, -2)
    r2 = jnp.mean(vrh * vrh, -1, keepdims=True)
    s2 = jnp.mean(vsh * vsh, -1, keepdims=True)
    rs = jnp.einsum("bhid,bhjd->bhij", vrh, vsh) / Dh
    std_rs = jnp.sqrt(r2 + 2.0 * rs + jnp.swapaxes(s2, -1, -2) - mean_rs ** 2 + eps)
    attn = jnp.einsum("bhid,bhjd->bhij", qh, vsh) + jnp.sum(qh * vrh, -1, keepdims=True)
    attn = (attn - jnp.sum(qh, -1, keepdims=True) * mean_rs) / std_rs
    attn = attn * scale
    attn = jnp.where(attn_mask, -jnp.inf, attn)
    attn = jax.nn.softmax(attn, axis=-1)
    attn = jnp.where(attn_mask, 0.0, attn)
    attn_std = attn / std_rs
    mean_w = mean_rs * attn_std
    xo = jnp.einsum("bhij,bhjd->bhid", attn_std, vsh) - jnp.sum(mean_w, -1, keepdims=True)
    xo = xo + jnp.sum(attn_std, -1, keepdims=True) * vrh
    xo = jnp.transpose(xo, (0, 2, 1, 3)).reshape(B, N, C)
    xo = xo * params["n_weight"].reshape(1, 1, -1) + params["n_bias"].reshape(1, 1, -1)

    xo = xo @ params["proj_w"].T + params["proj_b"]
    vro = v_receiver @ params["r_proj_w"].T + params["r_proj_b"]
    vso = v_sender @ params["s_proj_w"].T + params["s_proj_b"]
    return (jnp.transpose(xo, (1, 0, 2)),
            jnp.transpose(vro, (1, 0, 2)),
            jnp.transpose(vso, (1, 0, 2)))


# ----------------------------------------------------------------------------
# Deterministic parameter init + demo
# ----------------------------------------------------------------------------
def init_params(key, dim):
    ks = jax.random.split(key, 8)
    bound_rel = 1.0 / math.sqrt(3 * dim)          # kaiming_uniform(a=sqrt(5)) bound
    bound_lin = 1.0 / math.sqrt(dim)
    u = lambda k, shape, b: jax.random.uniform(k, shape, jnp.float32, -b, b)
    return {
        "relation_attn": u(ks[0], (dim, 3 * dim), bound_rel),
        "q_proj_w": u(ks[1], (dim, dim), bound_lin),
        "proj_w": u(ks[2], (dim, dim), bound_lin),
        "proj_b": u(ks[3], (dim,), bound_lin),
        "r_proj_w": u(ks[4], (dim, dim), bound_lin),
        "r_proj_b": u(ks[5], (dim,), bound_lin),
        "s_proj_w": u(ks[6], (dim, dim), bound_lin),
        "s_proj_b": u(ks[7], (dim,), bound_lin),
        "n_weight": jnp.ones((1, 1, dim), jnp.float32),
        "n_bias": jnp.zeros((1, 1, dim), jnp.float32),
    }


if __name__ == "__main__":
    N, B, C, H = 16, 2, 128, 2      # n_particles, batch, embed_dim, heads (Dh=64)
    key = jax.random.PRNGKey(0)
    kp, kx, kr, ks_, krr, krs, km = jax.random.split(key, 7)

    params = init_params(kp, C)
    x = jax.random.normal(kx, (N, B, C), jnp.float32)
    receiver_val_res = jax.random.normal(kr, (N, B, C), jnp.float32)
    sender_val_res = jax.random.normal(ks_, (N, B, C), jnp.float32)
    residual_receiver = jax.random.normal(krr, (N, B, C), jnp.float32)
    residual_sender = jax.random.normal(krs, (N, B, C), jnp.float32)

    # attn_mask: True = masked out; guarantee at least one valid key per row.
    attn_mask = jax.random.uniform(km, (B, H, N, N)) < 0.3
    attn_mask = attn_mask.at[..., 0].set(False)

    fwd = jax.jit(functools.partial(attention_tie_forward, num_heads=H, eps=1e-5))
    out = jax.block_until_ready(
        fwd(params, x, attn_mask, receiver_val_res, sender_val_res,
            residual_receiver, residual_sender))

    ref = jax.block_until_ready(reference_forward(
        params, x, attn_mask, receiver_val_res, sender_val_res,
        residual_receiver, residual_sender, num_heads=H, eps=1e-5))

    for o, r in zip(out, ref):
        assert o.shape == r.shape
        err = float(jnp.max(jnp.abs(o - r)))
        # bf16 MXU operands (kernel) vs f32 reference -> relaxed tolerance.
        assert jnp.allclose(o, r, rtol=5e-2, atol=5e-2), err

    print("KERNEL_OK")
</pallas_src>

<mosaic_0001>
module attributes {stable_mosaic.version = 11 : i64} {
  func.func @_tie_attn_kernel(%arg0: i32, %arg1: memref<1x16x128xf32, #tpu.memory_space<vmem>>, %arg2: memref<1x16x128xf32, #tpu.memory_space<vmem>>, %arg3: memref<1x16x128xf32, #tpu.memory_space<vmem>>, %arg4: memref<1x2x16x16xi8, #tpu.memory_space<vmem>>, %arg5: memref<1x16x128xf32, #tpu.memory_space<vmem>>) attributes {dimension_semantics = [#tpu.dimension_semantics<parallel>], iteration_bounds = array<i64: 2>, scalar_prefetch = 0 : i64, scratch_operands = 0 : i64, tpu.core_type = #tpu.core_type<tc>, window_params = [{transform_indices = @transform_0, window_bounds = array<i64: 1, 16, 128>}, {transform_indices = @transform_1, window_bounds = array<i64: 1, 16, 128>}, {transform_indices = @transform_2, window_bounds = array<i64: 1, 16, 128>}, {transform_indices = @transform_3, window_bounds = array<i64: 1, 2, 16, 16>}, {transform_indices = @transform_4, window_bounds = array<i64: 1, 16, 128>}]} {
    %cst = arith.constant 1.000000e+00 : f32
    %0 = vector.broadcast %cst : f32 to vector<1x64xf32>
    %c0 = arith.constant 0 : index
    %c0_0 = arith.constant 0 : index
    %c0_1 = arith.constant 0 : index
    %1 = vector.load %arg1[%c0, %c0_0, %c0_1] : memref<1x16x128xf32, #tpu.memory_space<vmem>>, vector<1x16x64xf32>
    %2 = vector.shape_cast %1 : vector<1x16x64xf32> to vector<16x64xf32>
    %c0_2 = arith.constant 0 : index
    %c0_3 = arith.constant 0 : index
    %c0_4 = arith.constant 0 : index
    %3 = vector.load %arg2[%c0_2, %c0_3, %c0_4] : memref<1x16x128xf32, #tpu.memory_space<vmem>>, vector<1x16x64xf32>
    %4 = vector.shape_cast %3 : vector<1x16x64xf32> to vector<16x64xf32>
    %c0_5 = arith.constant 0 : index
    %c0_6 = arith.constant 0 : index
    %c0_7 = arith.constant 0 : index
    %5 = vector.load %arg3[%c0_5, %c0_6, %c0_7] : memref<1x16x128xf32, #tpu.memory_space<vmem>>, vector<1x16x64xf32>
    %6 = vector.shape_cast %5 : vector<1x16x64xf32> to vector<16x64xf32>
    %c0_8 = arith.constant 0 : index
    %c0_9 = arith.constant 0 : index
    %c0_10 = arith.constant 0 : index
    %c0_11 = arith.constant 0 : index
    %7 = vector.load %arg4[%c0_8, %c0_9, %c0_10, %c0_11] : memref<1x2x16x16xi8, #tpu.memory_space<vmem>>, vector<1x1x16x16xi8>
    %8 = vector.shape_cast %7 : vector<1x1x16x16xi8> to vector<16x16xi8>
    %c0_i8 = arith.constant 0 : i8
    %9 = vector.broadcast %c0_i8 : i8 to vector<16x16xi8>
    %10 = arith.cmpi ne, %8, %9 : vector<16x16xi8>
    %11 = arith.truncf %2 : vector<16x64xf32> to vector<16x64xbf16>
    %12 = arith.truncf %4 : vector<16x64xf32> to vector<16x64xbf16>
    %13 = arith.truncf %6 : vector<16x64xf32> to vector<16x64xbf16>
    %cst_12 = arith.constant dense<0.000000e+00> : vector<16xf32>
    %14 = vector.multi_reduction <add>, %4, %cst_12 [1] : vector<16x64xf32> to vector<16xf32>
    %15 = vector.shape_cast %14 : vector<16xf32> to vector<16x1xf32>
    %cst_13 = arith.constant 1.562500e-02 : f32
    %16 = vector.broadcast %cst_13 : f32 to vector<16x1xf32>
    %17 = arith.mulf %15, %16 : vector<16x1xf32>
    %18 = arith.mulf %4, %4 : vector<16x64xf32>
    %cst_14 = arith.constant dense<0.000000e+00> : vector<16xf32>
    %19 = vector.multi_reduction <add>, %18, %cst_14 [1] : vector<16x64xf32> to vector<16xf32>
    %20 = vector.shape_cast %19 : vector<16xf32> to vector<16x1xf32>
    %cst_15 = arith.constant 1.562500e-02 : f32
    %21 = vector.broadcast %cst_15 : f32 to vector<16x1xf32>
    %22 = arith.mulf %20, %21 : vector<16x1xf32>
    %23 = arith.mulf %2, %4 : vector<16x64xf32>
    %cst_16 = arith.constant dense<0.000000e+00> : vector<16xf32>
    %24 = vector.multi_reduction <add>, %23, %cst_16 [1] : vector<16x64xf32> to vector<16xf32>
    %25 = vector.shape_cast %24 : vector<16xf32> to vector<16x1xf32>
    %cst_17 = arith.constant dense<0.000000e+00> : vector<16xf32>
    %26 = vector.multi_reduction <add>, %2, %cst_17 [1] : vector<16x64xf32> to vector<16xf32>
    %27 = vector.shape_cast %26 : vector<16xf32> to vector<16x1xf32>
    %cst_18 = arith.constant dense<0.000000e+00> : vector<1x16xf32>
    %28 = tpu.matmul %0, %6, %cst_18 {dimension_numbers = #tpu.dot_dimension_numbers<[1], [1], [0], [0], [0, 0, 1, 0], [], []>} : vector<1x64xf32>, vector<16x64xf32>, vector<1x16xf32> -> vector<1x16xf32>
    %cst_19 = arith.constant 1.562500e-02 : f32
    %29 = vector.broadcast %cst_19 : f32 to vector<1x16xf32>
    %30 = arith.mulf %28, %29 : vector<1x16xf32>
    %31 = arith.mulf %6, %6 : vector<16x64xf32>
    %cst_20 = arith.constant dense<0.000000e+00> : vector<1x16xf32>
    %32 = tpu.matmul %0, %31, %cst_20 {dimension_numbers = #tpu.dot_dimension_numbers<[1], [1], [0], [0], [0, 0, 1, 0], [], []>} : vector<1x64xf32>, vector<16x64xf32>, vector<1x16xf32> -> vector<1x16xf32>
    %cst_21 = arith.constant 1.562500e-02 : f32
    %33 = vector.broadcast %cst_21 : f32 to vector<1x16xf32>
    %34 = arith.mulf %32, %33 : vector<1x16xf32>
    %35 = vector.broadcast %17 : vector<16x1xf32> to vector<16x16xf32>
    %36 = vector.broadcast %30 : vector<1x16xf32> to vector<16x16xf32>
    %37 = arith.addf %35, %36 : vector<16x16xf32>
    %cst_22 = arith.constant dense<0.000000e+00> : vector<16x16xf32>
    %38 = tpu.matmul %12, %13, %cst_22 {dimension_numbers = #tpu.dot_dimension_numbers<[1], [1], [0], [0], [0, 0, 1, 0], [], []>} : vector<16x64xbf16>, vector<16x64xbf16>, vector<16x16xf32> -> vector<16x16xf32>
    %cst_23 = arith.constant 1.562500e-02 : f32
    %39 = vector.broadcast %cst_23 : f32 to vector<16x16xf32>
    %40 = arith.mulf %38, %39 : vector<16x16xf32>
    %cst_24 = arith.constant 2.000000e+00 : f32
    %41 = vector.broadcast %cst_24 : f32 to vector<16x16xf32>
    %42 = arith.mulf %41, %40 : vector<16x16xf32>
    %43 = vector.broadcast %22 : vector<16x1xf32> to vector<16x16xf32>
    %44 = arith.addf %43, %42 : vector<16x16xf32>
    %45 = vector.broadcast %34 : vector<1x16xf32> to vector<16x16xf32>
    %46 = arith.addf %44, %45 : vector<16x16xf32>
    %47 = arith.mulf %37, %37 : vector<16x16xf32>
    %48 = arith.subf %46, %47 : vector<16x16xf32>
    %cst_25 = arith.constant 0.000000e+00 : f32
    %49 = vector.broadcast %cst_25 : f32 to vector<16x16xf32>
    %50 = arith.maximumf %48, %49 : vector<16x16xf32>
    %cst_26 = arith.constant 9.99999974E-6 : f32
    %51 = vector.broadcast %cst_26 : f32 to vector<16x16xf32>
    %52 = arith.addf %50, %51 : vector<16x16xf32>
    %53 = math.rsqrt %52 : vector<16x16xf32>
    %cst_27 = arith.constant dense<0.000000e+00> : vector<16x16xf32>
    %54 = tpu.matmul %11, %13, %cst_27 {dimension_numbers = #tpu.dot_dimension_numbers<[1], [1], [0], [0], [0, 0, 1, 0], [], []>} : vector<16x64xbf16>, vector<16x64xbf16>, vector<16x16xf32> -> vector<16x16xf32>
    %55 = vector.broadcast %25 : vector<16x1xf32> to vector<16x16xf32>
    %56 = arith.addf %54, %55 : vector<16x16xf32>
    %57 = vector.broadcast %27 : vector<16x1xf32> to vector<16x16xf32>
    %58 = arith.mulf %57, %37 : vector<16x16xf32>
    %59 = arith.subf %56, %58 : vector<16x16xf32>
    %cst_28 = arith.constant 1.250000e-01 : f32
    %60 = vector.broadcast %cst_28 : f32 to vector<16x16xf32>
    %61 = arith.mulf %53, %60 : vector<16x16xf32>
    %62 = arith.mulf %59, %61 : vector<16x16xf32>
    %cst_29 = arith.constant 0xFF800000 : f32
    %63 = vector.broadcast %cst_29 : f32 to vector<16x16xf32>
    %64 = arith.select %10, %63, %62 : vector<16x16xi1>, vector<16x16xf32>
    %cst_30 = arith.constant dense<0xFF800000> : vector<16xf32>
    %65 = vector.multi_reduction <maximumf>, %64, %cst_30 [1] : vector<16x16xf32> to vector<16xf32>
    %66 = vector.shape_cast %65 : vector<16xf32> to vector<16x1xf32>
    %67 = vector.broadcast %66 : vector<16x1xf32> to vector<16x16xf32>
    %68 = arith.subf %64, %67 : vector<16x16xf32>
    %69 = math.exp %68 : vector<16x16xf32>
    %cst_31 = arith.constant dense<0.000000e+00> : vector<16xf32>
    %70 = vector.multi_reduction <add>, %69, %cst_31 [1] : vector<16x16xf32> to vector<16xf32>
    %71 = vector.shape_cast %70 : vector<16xf32> to vector<16x1xf32>
    %cst_32 = arith.constant 1.000000e+00 : f32
    %72 = vector.broadcast %cst_32 : f32 to vector<16x1xf32>
    %73 = arith.divf %72, %71 : vector<16x1xf32>
    %74 = vector.broadcast %73 : vector<16x1xf32> to vector<16x16xf32>
    %75 = arith.mulf %69, %74 : vector<16x16xf32>
    %76 = arith.mulf %75, %53 : vector<16x16xf32>
    %77 = arith.truncf %76 : vector<16x16xf32> to vector<16x16xbf16>
    %cst_33 = arith.constant dense<0.000000e+00> : vector<16x64xf32>
    %78 = tpu.matmul %77, %13, %cst_33 {dimension_numbers = #tpu.dot_dimension_numbers<[1], [0], [0], [1], [0, 0, 1, 1], [], []>} : vector<16x16xbf16>, vector<16x64xbf16>, vector<16x64xf32> -> vector<16x64xf32>
    %79 = arith.mulf %37, %76 : vector<16x16xf32>
    %cst_34 = arith.constant dense<0.000000e+00> : vector<16xf32>
    %80 = vector.multi_reduction <add>, %79, %cst_34 [1] : vector<16x16xf32> to vector<16xf32>
    %81 = vector.shape_cast %80 : vector<16xf32> to vector<16x1xf32>
    %82 = vector.broadcast %81 : vector<16x1xf32> to vector<16x64xf32>
    %83 = arith.subf %78, %82 : vector<16x64xf32>
    %cst_35 = arith.constant dense<0.000000e+00> : vector<16xf32>
    %84 = vector.multi_reduction <add>, %76, %cst_35 [1] : vector<16x16xf32> to vector<16xf32>
    %85 = vector.shape_cast %84 : vector<16xf32> to vector<16x1xf32>
    %86 = vector.broadcast %85 : vector<16x1xf32> to vector<16x64xf32>
    %87 = arith.mulf %86, %4 : vector<16x64xf32>
    %88 = arith.addf %83, %87 : vector<16x64xf32>
    %c0_36 = arith.constant 0 : index
    %c0_37 = arith.constant 0 : index
    %c0_38 = arith.constant 0 : index
    %89 = vector.load %arg5[%c0_36, %c0_37, %c0_38] : memref<1x16x128xf32, #tpu.memory_space<vmem>>, vector<1x16x64xf32>
    %90 = vector.shape_cast %89 : vector<1x16x64xf32> to vector<16x64xf32>
    %91 = vector.shape_cast %88 : vector<16x64xf32> to vector<1x16x64xf32>
    tpu.vector_store %arg5[%c0_36, %c0_37, %c0_38], %91 {strides = array<i32>} : memref<1x16x128xf32, #tpu.memory_space<vmem>>, vector<1x16x64xf32>,
    %c0_39 = arith.constant 0 : index
    %c0_40 = arith.constant 0 : index
    %c64 = arith.constant 64 : index
    %92 = vector.load %arg1[%c0_39, %c0_40, %c64] : memref<1x16x128xf32, #tpu.memory_space<vmem>>, vector<1x16x64xf32>
    %93 = vector.shape_cast %92 : vector<1x16x64xf32> to vector<16x64xf32>
    %c0_41 = arith.constant 0 : index
    %c0_42 = arith.constant 0 : index
    %c64_43 = arith.constant 64 : index
    %94 = vector.load %arg2[%c0_41, %c0_42, %c64_43] : memref<1x16x128xf32, #tpu.memory_space<vmem>>, vector<1x16x64xf32>
    %95 = vector.shape_cast %94 : vector<1x16x64xf32> to vector<16x64xf32>
    %c0_44 = arith.constant 0 : index
    %c0_45 = arith.constant 0 : index
    %c64_46 = arith.constant 64 : index
    %96 = vector.load %arg3[%c0_44, %c0_45, %c64_46] : memref<1x16x128xf32, #tpu.memory_space<vmem>>, vector<1x16x64xf32>
    %97 = vector.shape_cast %96 : vector<1x16x64xf32> to vector<16x64xf32>
    %c0_47 = arith.constant 0 : index
    %c1 = arith.constant 1 : index
    %c0_48 = arith.constant 0 : index
    %c0_49 = arith.constant 0 : index
    %98 = vector.load %arg4[%c0_47, %c1, %c0_48, %c0_49] : memref<1x2x16x16xi8, #tpu.memory_space<vmem>>, vector<1x1x16x16xi8>
    %99 = vector.shape_cast %98 : vector<1x1x16x16xi8> to vector<16x16xi8>
    %c0_i8_50 = arith.constant 0 : i8
    %100 = vector.broadcast %c0_i8_50 : i8 to vector<16x16xi8>
    %101 = arith.cmpi ne, %99, %100 : vector<16x16xi8>
    %102 = arith.truncf %93 : vector<16x64xf32> to vector<16x64xbf16>
    %103 = arith.truncf %95 : vector<16x64xf32> to vector<16x64xbf16>
    %104 = arith.truncf %97 : vector<16x64xf32> to vector<16x64xbf16>
    %cst_51 = arith.constant dense<0.000000e+00> : vector<16xf32>
    %105 = vector.multi_reduction <add>, %95, %cst_51 [1] : vector<16x64xf32> to vector<16xf32>
    %106 = vector.shape_cast %105 : vector<16xf32> to vector<16x1xf32>
    %cst_52 = arith.constant 1.562500e-02 : f32
    %107 = vector.broadcast %cst_52 : f32 to vector<16x1xf32>
    %108 = arith.mulf %106, %107 : vector<16x1xf32>
    %109 = arith.mulf %95, %95 : vector<16x64xf32>
    %cst_53 = arith.constant dense<0.000000e+00> : vector<16xf32>
    %110 = vector.multi_reduction <add>, %109, %cst_53 [1] : vector<16x64xf32> to vector<16xf32>
    %111 = vector.shape_cast %110 : vector<16xf32> to vector<16x1xf32>
    %cst_54 = arith.constant 1.562500e-02 : f32
    %112 = vector.broadcast %cst_54 : f32 to vector<16x1xf32>
    %113 = arith.mulf %111, %112 : vector<16x1xf32>
    %114 = arith.mulf %93, %95 : vector<16x64xf32>
    %cst_55 = arith.constant dense<0.000000e+00> : vector<16xf32>
    %115 = vector.multi_reduction <add>, %114, %cst_55 [1] : vector<16x64xf32> to vector<16xf32>
    %116 = vector.shape_cast %115 : vector<16xf32> to vector<16x1xf32>
    %cst_56 = arith.constant dense<0.000000e+00> : vector<16xf32>
    %117 = vector.multi_reduction <add>, %93, %cst_56 [1] : vector<16x64xf32> to vector<16xf32>
    %118 = vector.shape_cast %117 : vector<16xf32> to vector<16x1xf32>
    %cst_57 = arith.constant dense<0.000000e+00> : vector<1x16xf32>
    %119 = tpu.matmul %0, %97, %cst_57 {dimension_numbers = #tpu.dot_dimension_numbers<[1], [1], [0], [0], [0, 0, 1, 0], [], []>} : vector<1x64xf32>, vector<16x64xf32>, vector<1x16xf32> -> vector<1x16xf32>
    %cst_58 = arith.constant 1.562500e-02 : f32
    %120 = vector.broadcast %cst_58 : f32 to vector<1x16xf32>
    %121 = arith.mulf %119, %120 : vector<1x16xf32>
    %122 = arith.mulf %97, %97 : vector<16x64xf32>
    %cst_59 = arith.constant dense<0.000000e+00> : vector<1x16xf32>
    %123 = tpu.matmul %0, %122, %cst_59 {dimension_numbers = #tpu.dot_dimension_numbers<[1], [1], [0], [0], [0, 0, 1, 0], [], []>} : vector<1x64xf32>, vector<16x64xf32>, vector<1x16xf32> -> vector<1x16xf32>
    %cst_60 = arith.constant 1.562500e-02 : f32
    %124 = vector.broadcast %cst_60 : f32 to vector<1x16xf32>
    %125 = arith.mulf %123, %124 : vector<1x16xf32>
    %126 = vector.broadcast %108 : vector<16x1xf32> to vector<16x16xf32>
    %127 = vector.broadcast %121 : vector<1x16xf32> to vector<16x16xf32>
    %128 = arith.addf %126, %127 : vector<16x16xf32>
    %cst_61 = arith.constant dense<0.000000e+00> : vector<16x16xf32>
    %129 = tpu.matmul %103, %104, %cst_61 {dimension_numbers = #tpu.dot_dimension_numbers<[1], [1], [0], [0], [0, 0, 1, 0], [], []>} : vector<16x64xbf16>, vector<16x64xbf16>, vector<16x16xf32> -> vector<16x16xf32>
    %cst_62 = arith.constant 1.562500e-02 : f32
    %130 = vector.broadcast %cst_62 : f32 to vector<16x16xf32>
    %131 = arith.mulf %129, %130 : vector<16x16xf32>
    %cst_63 = arith.constant 2.000000e+00 : f32
    %132 = vector.broadcast %cst_63 : f32 to vector<16x16xf32>
    %133 = arith.mulf %132, %131 : vector<16x16xf32>
    %134 = vector.broadcast %113 : vector<16x1xf32> to vector<16x16xf32>
    %135 = arith.addf %134, %133 : vector<16x16xf32>
    %136 = vector.broadcast %125 : vector<1x16xf32> to vector<16x16xf32>
    %137 = arith.addf %135, %136 : vector<16x16xf32>
    %138 = arith.mulf %128, %128 : vector<16x16xf32>
    %139 = arith.subf %137, %138 : vector<16x16xf32>
    %cst_64 = arith.constant 0.000000e+00 : f32
    %140 = vector.broadcast %cst_64 : f32 to vector<16x16xf32>
    %141 = arith.maximumf %139, %140 : vector<16x16xf32>
    %cst_65 = arith.constant 9.99999974E-6 : f32
    %142 = vector.broadcast %cst_65 : f32 to vector<16x16xf32>
    %143 = arith.addf %141, %142 : vector<16x16xf32>
    %144 = math.rsqrt %143 : vector<16x16xf32>
    %cst_66 = arith.constant dense<0.000000e+00> : vector<16x16xf32>
    %145 = tpu.matmul %102, %104, %cst_66 {dimension_numbers = #tpu.dot_dimension_numbers<[1], [1], [0], [0], [0, 0, 1, 0], [], []>} : vector<16x64xbf16>, vector<16x64xbf16>, vector<16x16xf32> -> vector<16x16xf32>
    %146 = vector.broadcast %116 : vector<16x1xf32> to vector<16x16xf32>
    %147 = arith.addf %145, %146 : vector<16x16xf32>
    %148 = vector.broadcast %118 : vector<16x1xf32> to vector<16x16xf32>
    %149 = arith.mulf %148, %128 : vector<16x16xf32>
    %150 = arith.subf %147, %149 : vector<16x16xf32>
    %cst_67 = arith.constant 1.250000e-01 : f32
    %151 = vector.broadcast %cst_67 : f32 to vector<16x16xf32>
    %152 = arith.mulf %144, %151 : vector<16x16xf32>
    %153 = arith.mulf %150, %152 : vector<16x16xf32>
    %cst_68 = arith.constant 0xFF800000 : f32
    %154 = vector.broadcast %cst_68 : f32 to vector<16x16xf32>
    %155 = arith.select %101, %154, %153 : vector<16x16xi1>, vector<16x16xf32>
    %cst_69 = arith.constant dense<0xFF800000> : vector<16xf32>
    %156 = vector.multi_reduction <maximumf>, %155, %cst_69 [1] : vector<16x16xf32> to vector<16xf32>
    %157 = vector.shape_cast %156 : vector<16xf32> to vector<16x1xf32>
    %158 = vector.broadcast %157 : vector<16x1xf32> to vector<16x16xf32>
    %159 = arith.subf %155, %158 : vector<16x16xf32>
    %160 = math.exp %159 : vector<16x16xf32>
    %cst_70 = arith.constant dense<0.000000e+00> : vector<16xf32>
    %161 = vector.multi_reduction <add>, %160, %cst_70 [1] : vector<16x16xf32> to vector<16xf32>
    %162 = vector.shape_cast %161 : vector<16xf32> to vector<16x1xf32>
    %cst_71 = arith.constant 1.000000e+00 : f32
    %163 = vector.broadcast %cst_71 : f32 to vector<16x1xf32>
    %164 = arith.divf %163, %162 : vector<16x1xf32>
    %165 = vector.broadcast %164 : vector<16x1xf32> to vector<16x16xf32>
    %166 = arith.mulf %160, %165 : vector<16x16xf32>
    %167 = arith.mulf %166, %144 : vector<16x16xf32>
    %168 = arith.truncf %167 : vector<16x16xf32> to vector<16x16xbf16>
    %cst_72 = arith.constant dense<0.000000e+00> : vector<16x64xf32>
    %169 = tpu.matmul %168, %104, %cst_72 {dimension_numbers = #tpu.dot_dimension_numbers<[1], [0], [0], [1], [0, 0, 1, 1], [], []>} : vector<16x16xbf16>, vector<16x64xbf16>, vector<16x64xf32> -> vector<16x64xf32>
    %170 = arith.mulf %128, %167 : vector<16x16xf32>
    %cst_73 = arith.constant dense<0.000000e+00> : vector<16xf32>
    %171 = vector.multi_reduction <add>, %170, %cst_73 [1] : vector<16x16xf32> to vector<16xf32>
    %172 = vector.shape_cast %171 : vector<16xf32> to vector<16x1xf32>
    %173 = vector.broadcast %172 : vector<16x1xf32> to vector<16x64xf32>
    %174 = arith.subf %169, %173 : vector<16x64xf32>
    %cst_74 = arith.constant dense<0.000000e+00> : vector<16xf32>
    %175 = vector.multi_reduction <add>, %167, %cst_74 [1] : vector<16x16xf32> to vector<16xf32>
    %176 = vector.shape_cast %175 : vector<16xf32> to vector<16x1xf32>
    %177 = vector.broadcast %176 : vector<16x1xf32> to vector<16x64xf32>
    %178 = arith.mulf %177, %95 : vector<16x64xf32>
    %179 = arith.addf %174, %178 : vector<16x64xf32>
    %c0_75 = arith.constant 0 : index
    %c0_76 = arith.constant 0 : index
    %c64_77 = arith.constant 64 : index
    %180 = vector.load %arg5[%c0_75, %c0_76, %c64_77] : memref<1x16x128xf32, #tpu.memory_space<vmem>>, vector<1x16x64xf32>
    %181 = vector.shape_cast %180 : vector<1x16x64xf32> to vector<16x64xf32>
    %182 = vector.shape_cast %179 : vector<16x64xf32> to vector<1x16x64xf32>
    tpu.vector_store %arg5[%c0_75, %c0_76, %c64_77], %182 {strides = array<i32>} : memref<1x16x128xf32, #tpu.memory_space<vmem>>, vector<1x16x64xf32>,
    return
  }
  func.func @transform_0(%arg0: i32) -> (i32, i32, i32) {
    %c0_i32 = arith.constant 0 : i32
    %c0_i32_0 = arith.constant 0 : i32
    %c0_i32_1 = arith.constant 0 : i32
    return %arg0, %c0_i32, %c0_i32_0 : i32, i32, i32
  }
  func.func @transform_1(%arg0: i32) -> (i32, i32, i32) {
    %c0_i32 = arith.constant 0 : i32
    %c0_i32_0 = arith.constant 0 : i32
    %c0_i32_1 = arith.constant 0 : i32
    return %arg0, %c0_i32, %c0_i32_0 : i32, i32, i32
  }
  func.func @transform_2(%arg0: i32) -> (i32, i32, i32) {
    %c0_i32 = arith.constant 0 : i32
    %c0_i32_0 = arith.constant 0 : i32
    %c0_i32_1 = arith.constant 0 : i32
    return %arg0, %c0_i32, %c0_i32_0 : i32, i32, i32
  }
  func.func @transform_3(%arg0: i32) -> (i32, i32, i32, i32) {
    %c0_i32 = arith.constant 0 : i32
    %c0_i32_0 = arith.constant 0 : i32
    %c0_i32_1 = arith.constant 0 : i32
    %c0_i32_2 = arith.constant 0 : i32
    return %arg0, %c0_i32, %c0_i32_0, %c0_i32_1 : i32, i32, i32, i32
  }
  func.func @transform_4(%arg0: i32) -> (i32, i32, i32) {
    %c0_i32 = arith.constant 0 : i32
    %c0_i32_0 = arith.constant 0 : i32
    %c0_i32_1 = arith.constant 0 : i32
    return %arg0, %c0_i32, %c0_i32_0 : i32, i32, i32
  }
}

module attributes {stable_mosaic.version = 11 : i64} {
  func.func @_out_proj_kernel(%arg0: i32, %arg1: i32, %arg2: memref<32x128xf32, #tpu.memory_space<vmem>>, %arg3: memref<32x128xf32, #tpu.memory_space<vmem>>, %arg4: memref<32x128xf32, #tpu.memory_space<vmem>>, %arg5: memref<1x128xf32, #tpu.memory_space<vmem>>, %arg6: memref<1x128xf32, #tpu.memory_space<vmem>>, %arg7: memref<128x128xbf16, #tpu.memory_space<vmem>>, %arg8: memref<1x128xf32, #tpu.memory_space<vmem>>, %arg9: memref<128x128xbf16, #tpu.memory_space<vmem>>, %arg10: memref<1x128xf32, #tpu.memory_space<vmem>>, %arg11: memref<128x128xbf16, #tpu.memory_space<vmem>>, %arg12: memref<1x128xf32, #tpu.memory_space<vmem>>, %arg13: memref<32x128xf32, #tpu.memory_space<vmem>>, %arg14: memref<32x128xf32, #tpu.memory_space<vmem>>, %arg15: memref<32x128xf32, #tpu.memory_space<vmem>>) attributes {dimension_semantics = [#tpu.dimension_semantics<parallel>, #tpu.dimension_semantics<parallel>], iteration_bounds = array<i64: 1, 1>, scalar_prefetch = 0 : i64, scratch_operands = 0 : i64, tpu.core_type = #tpu.core_type<tc>, window_params = [{transform_indices = @transform_0, window_bounds = array<i64: 32, 128>}, {transform_indices = @transform_1, window_bounds = array<i64: 32, 128>}, {transform_indices = @transform_2, window_bounds = array<i64: 32, 128>}, {pipeline_mode = #tpu.pipeline_mode<synchronous>, transform_indices = @transform_3, window_bounds = array<i64: 1, 128>}, {pipeline_mode = #tpu.pipeline_mode<synchronous>, transform_indices = @transform_4, window_bounds = array<i64: 1, 128>}, {transform_indices = @transform_5, window_bounds = array<i64: 128, 128>}, {transform_indices = @transform_6, window_bounds = array<i64: 1, 128>}, {transform_indices = @transform_7, window_bounds = array<i64: 128, 128>}, {transform_indices = @transform_8, window_bounds = array<i64: 1, 128>}, {transform_indices = @transform_9, window_bounds = array<i64: 128, 128>}, {transform_indices = @transform_10, window_bounds = array<i64: 1, 128>}, {transform_indices = @transform_11, window_bounds = array<i64: 32, 128>}, {transform_indices = @transform_12, window_bounds = array<i64: 32, 128>}, {transform_indices = @transform_13, window_bounds = array<i64: 32, 128>}]} {
    %c0 = arith.constant 0 : index
    %c0_0 = arith.constant 0 : index
    %0 = vector.load %arg2[%c0, %c0_0] : memref<32x128xf32, #tpu.memory_space<vmem>>, vector<32x128xf32>
    %c0_1 = arith.constant 0 : index
    %c0_2 = arith.constant 0 : index
    %1 = vector.load %arg5[%c0_1, %c0_2] : memref<1x128xf32, #tpu.memory_space<vmem>>, vector<1x128xf32>
    %2 = vector.broadcast %1 : vector<1x128xf32> to vector<32x128xf32>
    %3 = arith.mulf %0, %2 : vector<32x128xf32>
    %c0_3 = arith.constant 0 : index
    %c0_4 = arith.constant 0 : index
    %4 = vector.load %arg6[%c0_3, %c0_4] : memref<1x128xf32, #tpu.memory_space<vmem>>, vector<1x128xf32>
    %5 = vector.broadcast %4 : vector<1x128xf32> to vector<32x128xf32>
    %6 = arith.addf %3, %5 : vector<32x128xf32>
    %7 = arith.truncf %6 : vector<32x128xf32> to vector<32x128xbf16>
    %c0_5 = arith.constant 0 : index
    %c0_6 = arith.constant 0 : index
    %8 = vector.load %arg7[%c0_5, %c0_6] : memref<128x128xbf16, #tpu.memory_space<vmem>>, vector<128x128xbf16>
    %cst = arith.constant dense<0.000000e+00> : vector<32x128xf32>
    %9 = tpu.matmul %7, %8, %cst {dimension_numbers = #tpu.dot_dimension_numbers<[1], [1], [0], [0], [0, 0, 1, 0], [], []>} : vector<32x128xbf16>, vector<128x128xbf16>, vector<32x128xf32> -> vector<32x128xf32>
    %c0_7 = arith.constant 0 : index
    %c0_8 = arith.constant 0 : index
    %10 = vector.load %arg8[%c0_7, %c0_8] : memref<1x128xf32, #tpu.memory_space<vmem>>, vector<1x128xf32>
    %11 = vector.broadcast %10 : vector<1x128xf32> to vector<32x128xf32>
    %12 = arith.addf %9, %11 : vector<32x128xf32>
    %c0_9 = arith.constant 0 : index
    %c0_10 = arith.constant 0 : index
    %13 = vector.load %arg13[%c0_9, %c0_10] : memref<32x128xf32, #tpu.memory_space<vmem>>, vector<32x128xf32>
    tpu.vector_store %arg13[%c0_9, %c0_10], %12 {strides = array<i32>} : memref<32x128xf32, #tpu.memory_space<vmem>>, vector<32x128xf32>,
    %c0_11 = arith.constant 0 : index
    %c0_12 = arith.constant 0 : index
    %14 = vector.load %arg3[%c0_11, %c0_12] : memref<32x128xf32, #tpu.memory_space<vmem>>, vector<32x128xf32>
    %15 = arith.truncf %14 : vector<32x128xf32> to vector<32x128xbf16>
    %c0_13 = arith.constant 0 : index
    %c0_14 = arith.constant 0 : index
    %16 = vector.load %arg9[%c0_13, %c0_14] : memref<128x128xbf16, #tpu.memory_space<vmem>>, vector<128x128xbf16>
    %cst_15 = arith.constant dense<0.000000e+00> : vector<32x128xf32>
    %17 = tpu.matmul %15, %16, %cst_15 {dimension_numbers = #tpu.dot_dimension_numbers<[1], [1], [0], [0], [0, 0, 1, 0], [], []>} : vector<32x128xbf16>, vector<128x128xbf16>, vector<32x128xf32> -> vector<32x128xf32>
    %c0_16 = arith.constant 0 : index
    %c0_17 = arith.constant 0 : index
    %18 = vector.load %arg10[%c0_16, %c0_17] : memref<1x128xf32, #tpu.memory_space<vmem>>, vector<1x128xf32>
    %19 = vector.broadcast %18 : vector<1x128xf32> to vector<32x128xf32>
    %20 = arith.addf %17, %19 : vector<32x128xf32>
    %c0_18 = arith.constant 0 : index
    %c0_19 = arith.constant 0 : index
    %21 = vector.load %arg14[%c0_18, %c0_19] : memref<32x128xf32, #tpu.memory_space<vmem>>, vector<32x128xf32>
    tpu.vector_store %arg14[%c0_18, %c0_19], %20 {strides = array<i32>} : memref<32x128xf32, #tpu.memory_space<vmem>>, vector<32x128xf32>,
    %c0_20 = arith.constant 0 : index
    %c0_21 = arith.constant 0 : index
    %22 = vector.load %arg4[%c0_20, %c0_21] : memref<32x128xf32, #tpu.memory_space<vmem>>, vector<32x128xf32>
    %23 = arith.truncf %22 : vector<32x128xf32> to vector<32x128xbf16>
    %c0_22 = arith.constant 0 : index
    %c0_23 = arith.constant 0 : index
    %24 = vector.load %arg11[%c0_22, %c0_23] : memref<128x128xbf16, #tpu.memory_space<vmem>>, vector<128x128xbf16>
    %cst_24 = arith.constant dense<0.000000e+00> : vector<32x128xf32>
    %25 = tpu.matmul %23, %24, %cst_24 {dimension_numbers = #tpu.dot_dimension_numbers<[1], [1], [0], [0], [0, 0, 1, 0], [], []>} : vector<32x128xbf16>, vector<128x128xbf16>, vector<32x128xf32> -> vector<32x128xf32>
    %c0_25 = arith.constant 0 : index
    %c0_26 = arith.constant 0 : index
    %26 = vector.load %arg12[%c0_25, %c0_26] : memref<1x128xf32, #tpu.memory_space<vmem>>, vector<1x128xf32>
    %27 = vector.broadcast %26 : vector<1x128xf32> to vector<32x128xf32>
    %28 = arith.addf %25, %27 : vector<32x128xf32>
    %c0_27 = arith.constant 0 : index
    %c0_28 = arith.constant 0 : index
    %29 = vector.load %arg15[%c0_27, %c0_28] : memref<32x128xf32, #tpu.memory_space<vmem>>, vector<32x128xf32>
    tpu.vector_store %arg15[%c0_27, %c0_28], %28 {strides = array<i32>} : memref<32x128xf32, #tpu.memory_space<vmem>>, vector<32x128xf32>,
    return
  }
  func.func @transform_0(%arg0: i32, %arg1: i32) -> (i32, i32) {
    %c0_i32 = arith.constant 0 : i32
    %c0_i32_0 = arith.constant 0 : i32
    return %arg0, %c0_i32 : i32, i32
  }
  func.func @transform_1(%arg0: i32, %arg1: i32) -> (i32, i32) {
    %c0_i32 = arith.constant 0 : i32
    %c0_i32_0 = arith.constant 0 : i32
    return %arg0, %c0_i32 : i32, i32
  }
  func.func @transform_2(%arg0: i32, %arg1: i32) -> (i32, i32) {
    %c0_i32 = arith.constant 0 : i32
    %c0_i32_0 = arith.constant 0 : i32
    return %arg0, %c0_i32 : i32, i32
  }
  func.func @transform_3(%arg0: i32, %arg1: i32) -> (i32, i32) {
    %c0_i32 = arith.constant 0 : i32
    %c0_i32_0 = arith.constant 0 : i32
    %c0_i32_1 = arith.constant 0 : i32
    return %c0_i32, %c0_i32_0 : i32, i32
  }
  func.func @transform_4(%arg0: i32, %arg1: i32) -> (i32, i32) {
    %c0_i32 = arith.constant 0 : i32
    %c0_i32_0 = arith.constant 0 : i32
    %c0_i32_1 = arith.constant 0 : i32
    return %c0_i32, %c0_i32_0 : i32, i32
  }
  func.func @transform_5(%arg0: i32, %arg1: i32) -> (i32, i32) {
    %c0_i32 = arith.constant 0 : i32
    %c0_i32_0 = arith.constant 0 : i32
    return %arg1, %c0_i32 : i32, i32
  }
  func.func @transform_6(%arg0: i32, %arg1: i32) -> (i32, i32) {
    %c0_i32 = arith.constant 0 : i32
    %c0_i32_0 = arith.constant 0 : i32
    return %c0_i32, %arg1 : i32, i32
  }
  func.func @transform_7(%arg0: i32, %arg1: i32) -> (i32, i32) {
    %c0_i32 = arith.constant 0 : i32
    %c0_i32_0 = arith.constant 0 : i32
    return %arg1, %c0_i32 : i32, i32
  }
  func.func @transform_8(%arg0: i32, %arg1: i32) -> (i32, i32) {
    %c0_i32 = arith.constant 0 : i32
    %c0_i32_0 = arith.constant 0 : i32
    return %c0_i32, %arg1 : i32, i32
  }
  func.func @transform_9(%arg0: i32, %arg1: i32) -> (i32, i32) {
    %c0_i32 = arith.constant 0 : i32
    %c0_i32_0 = arith.constant 0 : i32
    return %arg1, %c0_i32 : i32, i32
  }
  func.func @transform_10(%arg0: i32, %arg1: i32) -> (i32, i32) {
    %c0_i32 = arith.constant 0 : i32
    %c0_i32_0 = arith.constant 0 : i32
    return %c0_i32, %arg1 : i32, i32
  }
  func.func @transform_11(%arg0: i32, %arg1: i32) -> (i32, i32) {
    %c0_i32 = arith.constant 0 : i32
    return %arg0, %arg1 : i32, i32
  }
  func.func @transform_12(%arg0: i32, %arg1: i32) -> (i32, i32) {
    %c0_i32 = arith.constant 0 : i32
    return %arg0, %arg1 : i32, i32
  }
  func.func @transform_13(%arg0: i32, %arg1: i32) -> (i32, i32) {
    %c0_i32 = arith.constant 0 : i32
    return %arg0, %arg1 : i32, i32
  }
}

module attributes {stable_mosaic.version = 11 : i64} {
  func.func @_in_proj_kernel(%arg0: i32, %arg1: i32, %arg2: memref<32x128xf32, #tpu.memory_space<vmem>>, %arg3: memref<32x128xf32, #tpu.memory_space<vmem>>, %arg4: memref<32x128xf32, #tpu.memory_space<vmem>>, %arg5: memref<32x128xf32, #tpu.memory_space<vmem>>, %arg6: memref<32x128xf32, #tpu.memory_space<vmem>>, %arg7: memref<128x128xbf16, #tpu.memory_space<vmem>>, %arg8: memref<128x128xbf16, #tpu.memory_space<vmem>>, %arg9: memref<128x128xbf16, #tpu.memory_space<vmem>>, %arg10: memref<128x128xbf16, #tpu.memory_space<vmem>>, %arg11: memref<32x128xf32, #tpu.memory_space<vmem>>, %arg12: memref<32x128xf32, #tpu.memory_space<vmem>>, %arg13: memref<32x128xf32, #tpu.memory_space<vmem>>) attributes {dimension_semantics = [#tpu.dimension_semantics<parallel>, #tpu.dimension_semantics<parallel>], iteration_bounds = array<i64: 1, 1>, scalar_prefetch = 0 : i64, scratch_operands = 0 : i64, tpu.core_type = #tpu.core_type<tc>, window_params = [{transform_indices = @transform_0, window_bounds = array<i64: 32, 128>}, {transform_indices = @transform_1, window_bounds = array<i64: 32, 128>}, {transform_indices = @transform_2, window_bounds = array<i64: 32, 128>}, {transform_indices = @transform_3, window_bounds = array<i64: 32, 128>}, {transform_indices = @transform_4, window_bounds = array<i64: 32, 128>}, {transform_indices = @transform_5, window_bounds = array<i64: 128, 128>}, {transform_indices = @transform_6, window_bounds = array<i64: 128, 128>}, {transform_indices = @transform_7, window_bounds = array<i64: 128, 128>}, {transform_indices = @transform_8, window_bounds = array<i64: 128, 128>}, {transform_indices = @transform_9, window_bounds = array<i64: 32, 128>}, {transform_indices = @transform_10, window_bounds = array<i64: 32, 128>}, {transform_indices = @transform_11, window_bounds = array<i64: 32, 128>}]} {
    %c0 = arith.constant 0 : index
    %c0_0 = arith.constant 0 : index
    %0 = vector.load %arg2[%c0, %c0_0] : memref<32x128xf32, #tpu.memory_space<vmem>>, vector<32x128xf32>
    %1 = arith.truncf %0 : vector<32x128xf32> to vector<32x128xbf16>
    %c0_1 = arith.constant 0 : index
    %c0_2 = arith.constant 0 : index
    %2 = vector.load %arg7[%c0_1, %c0_2] : memref<128x128xbf16, #tpu.memory_space<vmem>>, vector<128x128xbf16>
    %cst = arith.constant dense<0.000000e+00> : vector<32x128xf32>
    %3 = tpu.matmul %1, %2, %cst {dimension_numbers = #tpu.dot_dimension_numbers<[1], [1], [0], [0], [0, 0, 1, 0], [], []>} : vector<32x128xbf16>, vector<128x128xbf16>, vector<32x128xf32> -> vector<32x128xf32>
    %c0_3 = arith.constant 0 : index
    %c0_4 = arith.constant 0 : index
    %4 = vector.load %arg11[%c0_3, %c0_4] : memref<32x128xf32, #tpu.memory_space<vmem>>, vector<32x128xf32>
    tpu.vector_store %arg11[%c0_3, %c0_4], %3 {strides = array<i32>} : memref<32x128xf32, #tpu.memory_space<vmem>>, vector<32x128xf32>,
    %c0_5 = arith.constant 0 : index
    %c0_6 = arith.constant 0 : index
    %5 = vector.load %arg8[%c0_5, %c0_6] : memref<128x128xbf16, #tpu.memory_space<vmem>>, vector<128x128xbf16>
    %cst_7 = arith.constant dense<0.000000e+00> : vector<32x128xf32>
    %6 = tpu.matmul %1, %5, %cst_7 {dimension_numbers = #tpu.dot_dimension_numbers<[1], [1], [0], [0], [0, 0, 1, 0], [], []>} : vector<32x128xbf16>, vector<128x128xbf16>, vector<32x128xf32> -> vector<32x128xf32>
    %c0_8 = arith.constant 0 : index
    %c0_9 = arith.constant 0 : index
    %7 = vector.load %arg3[%c0_8, %c0_9] : memref<32x128xf32, #tpu.memory_space<vmem>>, vector<32x128xf32>
    %8 = arith.truncf %7 : vector<32x128xf32> to vector<32x128xbf16>
    %c0_10 = arith.constant 0 : index
    %c0_11 = arith.constant 0 : index
    %9 = vector.load %arg10[%c0_10, %c0_11] : memref<128x128xbf16, #tpu.memory_space<vmem>>, vector<128x128xbf16>
    %cst_12 = arith.constant dense<0.000000e+00> : vector<32x128xf32>
    %10 = tpu.matmul %8, %9, %cst_12 {dimension_numbers = #tpu.dot_dimension_numbers<[1], [1], [0], [0], [0, 0, 1, 0], [], []>} : vector<32x128xbf16>, vector<128x128xbf16>, vector<32x128xf32> -> vector<32x128xf32>
    %11 = arith.addf %6, %10 : vector<32x128xf32>
    %c0_13 = arith.constant 0 : index
    %c0_14 = arith.constant 0 : index
    %12 = vector.load %arg5[%c0_13, %c0_14] : memref<32x128xf32, #tpu.memory_space<vmem>>, vector<32x128xf32>
    %13 = arith.addf %11, %12 : vector<32x128xf32>
    %c0_15 = arith.constant 0 : index
    %c0_16 = arith.constant 0 : index
    %14 = vector.load %arg12[%c0_15, %c0_16] : memref<32x128xf32, #tpu.memory_space<vmem>>, vector<32x128xf32>
    tpu.vector_store %arg12[%c0_15, %c0_16], %13 {strides = array<i32>} : memref<32x128xf32, #tpu.memory_space<vmem>>, vector<32x128xf32>,
    %c0_17 = arith.constant 0 : index
    %c0_18 = arith.constant 0 : index
    %15 = vector.load %arg9[%c0_17, %c0_18] : memref<128x128xbf16, #tpu.memory_space<vmem>>, vector<128x128xbf16>
    %cst_19 = arith.constant dense<0.000000e+00> : vector<32x128xf32>
    %16 = tpu.matmul %1, %15, %cst_19 {dimension_numbers = #tpu.dot_dimension_numbers<[1], [1], [0], [0], [0, 0, 1, 0], [], []>} : vector<32x128xbf16>, vector<128x128xbf16>, vector<32x128xf32> -> vector<32x128xf32>
    %c0_20 = arith.constant 0 : index
    %c0_21 = arith.constant 0 : index
    %17 = vector.load %arg4[%c0_20, %c0_21] : memref<32x128xf32, #tpu.memory_space<vmem>>, vector<32x128xf32>
    %18 = arith.truncf %17 : vector<32x128xf32> to vector<32x128xbf16>
    %c0_22 = arith.constant 0 : index
    %c0_23 = arith.constant 0 : index
    %19 = vector.load %arg10[%c0_22, %c0_23] : memref<128x128xbf16, #tpu.memory_space<vmem>>, vector<128x128xbf16>
    %cst_24 = arith.constant dense<0.000000e+00> : vector<32x128xf32>
    %20 = tpu.matmul %18, %19, %cst_24 {dimension_numbers = #tpu.dot_dimension_numbers<[1], [1], [0], [0], [0, 0, 1, 0], [], []>} : vector<32x128xbf16>, vector<128x128xbf16>, vector<32x128xf32> -> vector<32x128xf32>
    %21 = arith.addf %16, %20 : vector<32x128xf32>
    %c0_25 = arith.constant 0 : index
    %c0_26 = arith.constant 0 : index
    %22 = vector.load %arg6[%c0_25, %c0_26] : memref<32x128xf32, #tpu.memory_space<vmem>>, vector<32x128xf32>
    %23 = arith.addf %21, %22 : vector<32x128xf32>
    %c0_27 = arith.constant 0 : index
    %c0_28 = arith.constant 0 : index
    %24 = vector.load %arg13[%c0_27, %c0_28] : memref<32x128xf32, #tpu.memory_space<vmem>>, vector<32x128xf32>
    tpu.vector_store %arg13[%c0_27, %c0_28], %23 {strides = array<i32>} : memref<32x128xf32, #tpu.memory_space<vmem>>, vector<32x128xf32>,
    return
  }
  func.func @transform_0(%arg0: i32, %arg1: i32) -> (i32, i32) {
    %c0_i32 = arith.constant 0 : i32
    %c0_i32_0 = arith.constant 0 : i32
    return %arg0, %c0_i32 : i32, i32
  }
  func.func @transform_1(%arg0: i32, %arg1: i32) -> (i32, i32) {
    %c0_i32 = arith.constant 0 : i32
    %c0_i32_0 = arith.constant 0 : i32
    return %arg0, %c0_i32 : i32, i32
  }
  func.func @transform_2(%arg0: i32, %arg1: i32) -> (i32, i32) {
    %c0_i32 = arith.constant 0 : i32
    %c0_i32_0 = arith.constant 0 : i32
    return %arg0, %c0_i32 : i32, i32
  }
  func.func @transform_3(%arg0: i32, %arg1: i32) -> (i32, i32) {
    %c0_i32 = arith.constant 0 : i32
    return %arg0, %arg1 : i32, i32
  }
  func.func @transform_4(%arg0: i32, %arg1: i32) -> (i32, i32) {
    %c0_i32 = arith.constant 0 : i32
    return %arg0, %arg1 : i32, i32
  }
  func.func @transform_5(%arg0: i32, %arg1: i32) -> (i32, i32) {
    %c0_i32 = arith.constant 0 : i32
    %c0_i32_0 = arith.constant 0 : i32
    return %arg1, %c0_i32 : i32, i32
  }
  func.func @transform_6(%arg0: i32, %arg1: i32) -> (i32, i32) {
    %c0_i32 = arith.constant 0 : i32
    %c0_i32_0 = arith.constant 0 : i32
    return %arg1, %c0_i32 : i32, i32
  }
  func.func @transform_7(%arg0: i32, %arg1: i32) -> (i32, i32) {
    %c0_i32 = arith.constant 0 : i32
    %c0_i32_0 = arith.constant 0 : i32
    return %arg1, %c0_i32 : i32, i32
  }
  func.func @transform_8(%arg0: i32, %arg1: i32) -> (i32, i32) {
    %c0_i32 = arith.constant 0 : i32
    %c0_i32_0 = arith.constant 0 : i32
    return %arg1, %c0_i32 : i32, i32
  }
  func.func @transform_9(%arg0: i32, %arg1: i32) -> (i32, i32) {
    %c0_i32 = arith.constant 0 : i32
    return %arg0, %arg1 : i32, i32
  }
  func.func @transform_10(%arg0: i32, %arg1: i32) -> (i32, i32) {
    %c0_i32 = arith.constant 0 : i32
    return %arg0, %arg1 : i32, i32
  }
  func.func @transform_11(%arg0: i32, %arg1: i32) -> (i32, i32) {
    %c0_i32 = arith.constant 0 : i32
    return %arg0, %arg1 : i32, i32
  }
}

</mosaic_0001>

<llo_original>
// kernel: attention_tie_forward.3
$region0: #{attention_tie_forward.3}
  #allocation0 [shape = 'u32[]', space=smem, size = 0x4, offset = 0x4, fixed_abs, tag = 'smem constant byte address 0x4 - core index']
  #allocation1 [shape = 'u32[144,128]{1,0:T(1,128)}', space=vmem, size = 0x12000, scoped, tag = 'internal scratch']
  %s0 = inlined_call_operand.vmem [shape: f32[32,128], index: 0, kind: input, shape index: {}]
  %s1 = inlined_call_operand.vmem [shape: f32[32,128], index: 1, kind: input, shape index: {}]
  %s2 = inlined_call_operand.vmem [shape: f32[32,128], index: 2, kind: input, shape index: {}]
  %s3 = inlined_call_operand.vmem [shape: f32[32,128], index: 3, kind: input, shape index: {}]
  %s4 = inlined_call_operand.vmem [shape: f32[32,128], index: 4, kind: input, shape index: {}]
  %s5 = inlined_call_operand.vmem [shape: bf16[128,128], index: 5, kind: input, shape index: {}]
  %s6 = inlined_call_operand.vmem [shape: bf16[128,128], index: 6, kind: input, shape index: {}]
  %s7 = inlined_call_operand.vmem [shape: bf16[128,128], index: 7, kind: input, shape index: {}]
  %s8 = inlined_call_operand.vmem [shape: bf16[128,128], index: 8, kind: input, shape index: {}]
  %s9 = inlined_call_operand.vmem [shape: f32[32,128], index: 9, kind: output, shape index: {0}]
  %s10 = inlined_call_operand.vmem [shape: f32[32,128], index: 10, kind: output, shape index: {1}]
  %s11 = inlined_call_operand.vmem [shape: f32[32,128], index: 11, kind: output, shape index: {2}]
  %12 = xla_tuple %s9, %s10, %s11
  %s13 = sld [smem:[#allocation0]]
  $region62: #{attention_tie_forward.3} parent=0
    _
  %s15 = ssub.s32 1, %s13
  %s16 = scalar_select 0, %s15, %s13
  // Predicated region
  $region2: #{attention_tie_forward.3} parent=0 // pred_check
    _
  $region3: #{attention_tie_forward.3} parent=0 // pred_check_branch
    %18 = sbr.rel (0) target = $region5
  $region4: #{attention_tie_forward.3} parent=0 // pred_region
    _
  $region5: #{attention_tie_forward.3} parent=0 // pred_fallthru
    _
  // Predicated region
  $region6: #{attention_tie_forward.3} parent=0 // pred_check
    _
  $region7: #{attention_tie_forward.3} parent=0 // pred_check_branch
    %20 = sbr.rel (0) target = $region9
  $region8: #{attention_tie_forward.3} parent=0 // pred_region
    _
  $region9: #{attention_tie_forward.3} parent=0 // pred_fallthru
    _
  // Predicated region
  $region10: #{attention_tie_forward.3} parent=0 // pred_check
    _
  $region11: #{attention_tie_forward.3} parent=0 // pred_check_branch
    %22 = sbr.rel (0) target = $region13
  $region12: #{attention_tie_forward.3} parent=0 // pred_region
    _
  $region13: #{attention_tie_forward.3} parent=0 // pred_fallthru
    _
  // Predicated region
  $region14: #{attention_tie_forward.3} parent=0 // pred_check
    _
  $region15: #{attention_tie_forward.3} parent=0 // pred_check_branch
    %24 = sbr.rel (0) target = $region17
  $region16: #{attention_tie_forward.3} parent=0 // pred_region
    _
  $region17: #{attention_tie_forward.3} parent=0 // pred_fallthru
    _
  // Predicated region
  $region18: #{attention_tie_forward.3} parent=0 // pred_check
    _
  $region19: #{attention_tie_forward.3} parent=0 // pred_check_branch
    %26 = sbr.rel (0) target = $region21
  $region20: #{attention_tie_forward.3} parent=0 // pred_region
    _
  $region21: #{attention_tie_forward.3} parent=0 // pred_fallthru
    _
  // Predicated region
  $region22: #{attention_tie_forward.3} parent=0 // pred_check
    _
  $region23: #{attention_tie_forward.3} parent=0 // pred_check_branch
    %28 = sbr.rel (0) target = $region25
  $region24: #{attention_tie_forward.3} parent=0 // pred_region
    _
  $region25: #{attention_tie_forward.3} parent=0 // pred_fallthru
    _
  // Predicated region
  $region26: #{attention_tie_forward.3} parent=0 // pred_check
    _
  $region27: #{attention_tie_forward.3} parent=0 // pred_check_branch
    %30 = sbr.rel (0) target = $region29
  $region28: #{attention_tie_forward.3} parent=0 // pred_region
    _
  $region29: #{attention_tie_forward.3} parent=0 // pred_fallthru
    _
  // Predicated region
  $region30: #{attention_tie_forward.3} parent=0 // pred_check
    _
  $region31: #{attention_tie_forward.3} parent=0 // pred_check_branch
    %32 = sbr.rel (0) target = $region33
  $region32: #{attention_tie_forward.3} parent=0 // pred_region
    _
  $region33: #{attention_tie_forward.3} parent=0 // pred_fallthru
    _
  // Predicated region
  $region34: #{attention_tie_forward.3} parent=0 // pred_check
    _
  $region35: #{attention_tie_forward.3} parent=0 // pred_check_branch
    %34 = sbr.rel (0) target = $region37
  $region36: #{attention_tie_forward.3} parent=0 // pred_region
    _
  $region37: #{attention_tie_forward.3} parent=0 // pred_fallthru
    _
  %v36 = vld [vmem:[%s0] sm:$0xff]
  %v37 = vld [vmem:[%s0 + $0x8] sm:$0xff]
  %v38 = vld [vmem:[%s0 + $0x10] sm:$0xff]
  %v39 = vld [vmem:[%s0 + $0x18] sm:$0xff]
  %v40 = vpack.c.bf16 %v37, %v36
  %v41 = vpack.c.bf16 %v39, %v38
  %v42 = vld [vmem:[%s5] sm:$0xf]
  %v43 = vld [vmem:[%s5 + $0x4] sm:$0xf]
  %v44 = vld [vmem:[%s5 + $0x8] sm:$0xf]
  %v45 = vld [vmem:[%s5 + $0xc] sm:$0xf]
  %v46 = vld [vmem:[%s5 + $0x10] sm:$0xf]
  %v47 = vld [vmem:[%s5 + $0x14] sm:$0xf]
  %v48 = vld [vmem:[%s5 + $0x18] sm:$0xf]
  %v49 = vld [vmem:[%s5 + $0x1c] sm:$0xf]
  %v50 = vld [vmem:[%s5 + $0x20] sm:$0xf]
  %v51 = vld [vmem:[%s5 + $0x24] sm:$0xf]
  %v52 = vld [vmem:[%s5 + $0x28] sm:$0xf]
  %v53 = vld [vmem:[%s5 + $0x2c] sm:$0xf]
  %v54 = vld [vmem:[%s5 + $0x30] sm:$0xf]
  %v55 = vld [vmem:[%s5 + $0x34] sm:$0xf]
  %v56 = vld [vmem:[%s5 + $0x38] sm:$0xf]
  %v57 = vld [vmem:[%s5 + $0x3c] sm:$0xf]
  %v74 = vunpack.c.l.b16 %v42
  %v75 = vunpack.c.l.b16 %v43
  %v76 = vunpack.c.l.b16 %v44
  %v77 = vunpack.c.l.b16 %v45
  %v78 = vunpack.c.l.b16 %v46
  %v79 = vunpack.c.l.b16 %v47
  %v80 = vunpack.c.l.b16 %v48
  %v81 = vunpack.c.l.b16 %v49
  %v82 = vunpack.c.l.b16 %v50
  %v83 = vunpack.c.l.b16 %v51
  %v84 = vunpack.c.l.b16 %v52
  %v85 = vunpack.c.l.b16 %v53
  %v86 = vunpack.c.l.b16 %v54
  %v87 = vunpack.c.l.b16 %v55
  %v88 = vunpack.c.l.b16 %v56
  %v89 = vunpack.c.l.b16 %v57
  %v90 = vpack.c.b16 %v75, %v74
  %v91 = vpack.c.b16 %v77, %v76
  %v92 = vpack.c.b16 %v79, %v78
  %v93 = vpack.c.b16 %v81, %v80
  %v94 = vpack.c.b16 %v83, %v82
  %v95 = vpack.c.b16 %v85, %v84
  %v96 = vpack.c.b16 %v87, %v86
  %v97 = vpack.c.b16 %v89, %v88
  %106 = vmatprep.subr.bf16.mxu0 0
  %107 = vmatpush1.bf16.xpose.msra.mxu0 %v90
  %108 = vmatprep.subr.bf16.mxu0 0
  %109 = vmatpush1.bf16.xpose.msra.mxu0 %v91
  %110 = vmatprep.subr.bf16.mxu0 0
  %111 = vmatpush1.bf16.xpose.msra.mxu0 %v92
  %112 = vmatprep.subr.bf16.mxu0 0
  %113 = vmatpush1.bf16.xpose.msra.mxu0 %v93
  %114 = vmatprep.subr.bf16.mxu0 0
  %115 = vmatpush1.bf16.xpose.msra.mxu0 %v94
  %116 = vmatprep.subr.bf16.mxu0 0
  %117 = vmatpush1.bf16.xpose.msra.mxu0 %v95
  %118 = vmatprep.subr.bf16.mxu0 0
  %119 = vmatpush1.bf16.xpose.msra.mxu0 %v96
  %120 = vmatprep.subr.bf16.mxu0 0
  %121 = vmatpush1.bf16.xpose.msra.mxu0 %v97
  %122 = vmatprep.subr.bf16.mxu0 0
  %123 = vmatpush1.bf16.xpose.msra.mxu0 0
  %124 = vmatprep.subr.bf16.mxu0 0
  %125 = vmatpush1.bf16.xpose.msra.mxu0 0
  %126 = vmatprep.subr.bf16.mxu0 0
  %127 = vmatpush1.bf16.xpose.msra.mxu0 0
  %128 = vmatprep.subr.bf16.mxu0 0
  %129 = vmatpush1.bf16.xpose.msra.mxu0 0
  %130 = vmatprep.subr.bf16.mxu0 0
  %131 = vmatpush1.bf16.xpose.msra.mxu0 0
  %132 = vmatprep.subr.bf16.mxu0 0
  %133 = vmatpush1.bf16.xpose.msra.mxu0 0
  %134 = vmatprep.subr.bf16.mxu0 0
  %135 = vmatpush1.bf16.xpose.msra.mxu0 0
  %136 = vmatprep.subr.bf16.mxu0 0
  %137 = vmatpush1.bf16.xpose.msra.mxu0 0
  %138 = vmatprep.mubr.bf16.mxu0 0
  %139 = vmatmul.mubr.bf16.gmra.mrb[0].mxu0 %v40
  %v140 = vpop.f32.mrb[0].mxu0
  %v141 = vadd.f32 0.0, %v140
  %v142 = vpop.f32.mrb[0].mxu0
  %v143 = vpop.f32.mrb[0].mxu0
  %v144 = vadd.f32 0.0, %v143
  %v145 = vpop.f32.mrb[0].mxu0
  %146 = vmatprep.mubr.bf16.mxu0 0
  %147 = vmatmul.mubr.bf16.gmra.mrb[0].mxu0 %v41
  %v148 = vpop.f32.mrb[0].mxu0
  %v149 = vadd.f32 0.0, %v148
  %v150 = vpop.f32.mrb[0].mxu0
  %v151 = vpop.f32.mrb[0].mxu0
  %v152 = vadd.f32 0.0, %v151
  %v153 = vpop.f32.mrb[0].mxu0
  %154 = vdwg.mxu0
  %155 = vst [vmem:[%s9] sm:$0xff] %v141
  %156 = vst [vmem:[%s9 + $0x8] sm:$0xff] %v144
  %157 = vst [vmem:[%s9 + $0x10] sm:$0xff] %v149
  %158 = vst [vmem:[%s9 + $0x18] sm:$0xff] %v152
  %v159 = vld [vmem:[%s6] sm:$0xf]
  %v160 = vld [vmem:[%s6 + $0x4] sm:$0xf]
  %v161 = vld [vmem:[%s6 + $0x8] sm:$0xf]
  %v162 = vld [vmem:[%s6 + $0xc] sm:$0xf]
  %v163 = vld [vmem:[%s6 + $0x10] sm:$0xf]
  %v164 = vld [vmem:[%s6 + $0x14] sm:$0xf]
  %v165 = vld [vmem:[%s6 + $0x18] sm:$0xf]
  %v166 = vld [vmem:[%s6 + $0x1c] sm:$0xf]
  %v167 = vld [vmem:[%s6 + $0x20] sm:$0xf]
  %v168 = vld [vmem:[%s6 + $0x24] sm:$0xf]
  %v169 = vld [vmem:[%s6 + $0x28] sm:$0xf]
  %v170 = vld [vmem:[%s6 + $0x2c] sm:$0xf]
  %v171 = vld [vmem:[%s6 + $0x30] sm:$0xf]
  %v172 = vld [vmem:[%s6 + $0x34] sm:$0xf]
  %v173 = vld [vmem:[%s6 + $0x38] sm:$0xf]
  %v174 = vld [vmem:[%s6 + $0x3c] sm:$0xf]
  %v175 = vld [vmem:[%s1] sm:$0xff]
  %v176 = vld [vmem:[%s1 + $0x8] sm:$0xff]
  %v177 = vld [vmem:[%s1 + $0x10] sm:$0xff]
  %v178 = vld [vmem:[%s1 + $0x18] sm:$0xff]
  %v179 = vpack.c.bf16 %v176, %v175
  %v180 = vpack.c.bf16 %v178, %v177
  %v181 = vld [vmem:[%s8] sm:$0xf]
  %v182 = vld [vmem:[%s8 + $0x4] sm:$0xf]
  %v183 = vld [vmem:[%s8 + $0x8] sm:$0xf]
  %v184 = vld [vmem:[%s8 + $0xc] sm:$0xf]
  %v185 = vld [vmem:[%s8 + $0x10] sm:$0xf]
  %v186 = vld [vmem:[%s8 + $0x14] sm:$0xf]
  %v187 = vld [vmem:[%s8 + $0x18] sm:$0xf]
  %v188 = vld [vmem:[%s8 + $0x1c] sm:$0xf]
  %v189 = vld [vmem:[%s8 + $0x20] sm:$0xf]
  %v190 = vld [vmem:[%s8 + $0x24] sm:$0xf]
  %v191 = vld [vmem:[%s8 + $0x28] sm:$0xf]
  %v192 = vld [vmem:[%s8 + $0x2c] sm:$0xf]
  %v193 = vld [vmem:[%s8 + $0x30] sm:$0xf]
  %v194 = vld [vmem:[%s8 + $0x34] sm:$0xf]
  %v195 = vld [vmem:[%s8 + $0x38] sm:$0xf]
  %v196 = vld [vmem:[%s8 + $0x3c] sm:$0xf]
  %v213 = vunpack.c.l.b16 %v181
  %v214 = vunpack.c.l.b16 %v182
  %v215 = vunpack.c.l.b16 %v183
  %v216 = vunpack.c.l.b16 %v184
  %v217 = vunpack.c.l.b16 %v185
  %v218 = vunpack.c.l.b16 %v186
  %v219 = vunpack.c.l.b16 %v187
  %v220 = vunpack.c.l.b16 %v188
  %v221 = vunpack.c.l.b16 %v189
  %v222 = vunpack.c.l.b16 %v190
  %v223 = vunpack.c.l.b16 %v191
  %v224 = vunpack.c.l.b16 %v192
  %v225 = vunpack.c.l.b16 %v193
  %v226 = vunpack.c.l.b16 %v194
  %v227 = vunpack.c.l.b16 %v195
  %v228 = vunpack.c.l.b16 %v196
  %v229 = vpack.c.b16 %v214, %v213
  %v230 = vpack.c.b16 %v216, %v215
  %v231 = vpack.c.b16 %v218, %v217
  %v232 = vpack.c.b16 %v220, %v219
  %v233 = vpack.c.b16 %v222, %v221
  %v234 = vpack.c.b16 %v224, %v223
  %v235 = vpack.c.b16 %v226, %v225
  %v236 = vpack.c.b16 %v228, %v227
  %245 = vmatprep.subr.bf16.mxu0 0
  %246 = vmatpush1.bf16.xpose.msra.mxu0 %v229
  %247 = vmatprep.subr.bf16.mxu0 0
  %248 = vmatpush1.bf16.xpose.msra.mxu0 %v230
  %249 = vmatprep.subr.bf16.mxu0 0
  %250 = vmatpush1.bf16.xpose.msra.mxu0 %v231
  %251 = vmatprep.subr.bf16.mxu0 0
  %252 = vmatpush1.bf16.xpose.msra.mxu0 %v232
  %253 = vmatprep.subr.bf16.mxu0 0
  %254 = vmatpush1.bf16.xpose.msra.mxu0 %v233
  %255 = vmatprep.subr.bf16.mxu0 0
  %256 = vmatpush1.bf16.xpose.msra.mxu0 %v234
  %257 = vmatprep.subr.bf16.mxu0 0
  %258 = vmatpush1.bf16.xpose.msra.mxu0 %v235
  %259 = vmatprep.subr.bf16.mxu0 0
  %260 = vmatpush1.bf16.xpose.msra.mxu0 %v236
  %261 = vmatprep.subr.bf16.mxu0 0
  %262 = vmatpush1.bf16.xpose.msra.mxu0 0
  %263 = vmatprep.subr.bf16.mxu0 0
  %264 = vmatpush1.bf16.xpose.msra.mxu0 0
  %265 = vmatprep.subr.bf16.mxu0 0
  %266 = vmatpush1.bf16.xpose.msra.mxu0 0
  %267 = vmatprep.subr.bf16.mxu0 0
  %268 = vmatpush1.bf16.xpose.msra.mxu0 0
  %269 = vmatprep.subr.bf16.mxu0 0
  %270 = vmatpush1.bf16.xpose.msra.mxu0 0
  %271 = vmatprep.subr.bf16.mxu0 0
  %272 = vmatpush1.bf16.xpose.msra.mxu0 0
  %273 = vmatprep.subr.bf16.mxu0 0
  %274 = vmatpush1.bf16.xpose.msra.mxu0 0
  %275 = vmatprep.subr.bf16.mxu0 0
  %276 = vmatpush1.bf16.xpose.msra.mxu0 0
  %277 = vmatprep.mubr.bf16.mxu0 0
  %278 = vmatmul.mubr.bf16.gmra.mrb[0].mxu0 %v179
  %v279 = vpop.f32.mrb[0].mxu0
  %v280 = vadd.f32 0.0, %v279
  %v281 = vpop.f32.mrb[0].mxu0
  %v282 = vpop.f32.mrb[0].mxu0
  %v283 = vadd.f32 0.0, %v282
  %v284 = vpop.f32.mrb[0].mxu0
  %285 = vmatprep.mubr.bf16.mxu0 0
  %286 = vmatmul.mubr.bf16.gmra.mrb[0].mxu0 %v180
  %v287 = vpop.f32.mrb[0].mxu0
  %v288 = vadd.f32 0.0, %v287
  %v289 = vpop.f32.mrb[0].mxu0
  %v290 = vpop.f32.mrb[0].mxu0
  %v291 = vadd.f32 0.0, %v290
  %v292 = vpop.f32.mrb[0].mxu0
  %293 = vdwg.mxu0
  %v310 = vunpack.c.l.b16 %v159
  %v311 = vunpack.c.l.b16 %v160
  %v312 = vunpack.c.l.b16 %v161
  %v313 = vunpack.c.l.b16 %v162
  %v314 = vunpack.c.l.b16 %v163
  %v315 = vunpack.c.l.b16 %v164
  %v316 = vunpack.c.l.b16 %v165
  %v317 = vunpack.c.l.b16 %v166
  %v318 = vunpack.c.l.b16 %v167
  %v319 = vunpack.c.l.b16 %v168
  %v320 = vunpack.c.l.b16 %v169
  %v321 = vunpack.c.l.b16 %v170
  %v322 = vunpack.c.l.b16 %v171
  %v323 = vunpack.c.l.b16 %v172
  %v324 = vunpack.c.l.b16 %v173
  %v325 = vunpack.c.l.b16 %v174
  %v326 = vpack.c.b16 %v311, %v310
  %v327 = vpack.c.b16 %v313, %v312
  %v328 = vpack.c.b16 %v315, %v314
  %v329 = vpack.c.b16 %v317, %v316
  %v330 = vpack.c.b16 %v319, %v318
  %v331 = vpack.c.b16 %v321, %v320
  %v332 = vpack.c.b16 %v323, %v322
  %v333 = vpack.c.b16 %v325, %v324
  %342 = vmatprep.subr.bf16.mxu0 0
  %343 = vmatpush1.bf16.xpose.msra.mxu0 %v326
  %344 = vmatprep.subr.bf16.mxu0 0
  %345 = vmatpush1.bf16.xpose.msra.mxu0 %v327
  %346 = vmatprep.subr.bf16.mxu0 0
  %347 = vmatpush1.bf16.xpose.msra.mxu0 %v328
  %348 = vmatprep.subr.bf16.mxu0 0
  %349 = vmatpush1.bf16.xpose.msra.mxu0 %v329
  %350 = vmatprep.subr.bf16.mxu0 0
  %351 = vmatpush1.bf16.xpose.msra.mxu0 %v330
  %352 = vmatprep.subr.bf16.mxu0 0
  %353 = vmatpush1.bf16.xpose.msra.mxu0 %v331
  %354 = vmatprep.subr.bf16.mxu0 0
  %355 = vmatpush1.bf16.xpose.msra.mxu0 %v332
  %356 = vmatprep.subr.bf16.mxu0 0
  %357 = vmatpush1.bf16.xpose.msra.mxu0 %v333
  %358 = vmatprep.subr.bf16.mxu0 0
  %359 = vmatpush1.bf16.xpose.msra.mxu0 0
  %360 = vmatprep.subr.bf16.mxu0 0
  %361 = vmatpush1.bf16.xpose.msra.mxu0 0
  %362 = vmatprep.subr.bf16.mxu0 0
  %363 = vmatpush1.bf16.xpose.msra.mxu0 0
  %364 = vmatprep.subr.bf16.mxu0 0
  %365 = vmatpush1.bf16.xpose.msra.mxu0 0
  %366 = vmatprep.subr.bf16.mxu0 0
  %367 = vmatpush1.bf16.xpose.msra.mxu0 0
  %368 = vmatprep.subr.bf16.mxu0 0
  %369 = vmatpush1.bf16.xpose.msra.mxu0 0
  %370 = vmatprep.subr.bf16.mxu0 0
  %371 = vmatpush1.bf16.xpose.msra.mxu0 0
  %372 = vmatprep.subr.bf16.mxu0 0
  %373 = vmatpush1.bf16.xpose.msra.mxu0 0
  %374 = vmatprep.mubr.bf16.mxu0 0
  %375 = vmatmul.mubr.bf16.gmra.mrb[0].mxu0 %v40
  %v376 = vpop.f32.mrb[0].mxu0
  %v377 = vadd.f32 %v280, %v376
  %v378 = vpop.f32.mrb[0].mxu0
  %v379 = vpop.f32.mrb[0].mxu0
  %v380 = vadd.f32 %v283, %v379
  %v381 = vpop.f32.mrb[0].mxu0
  %382 = vmatprep.mubr.bf16.mxu0 0
  %383 = vmatmul.mubr.bf16.gmra.mrb[0].mxu0 %v41
  %v384 = vpop.f32.mrb[0].mxu0
  %v385 = vadd.f32 %v288, %v384
  %v386 = vpop.f32.mrb[0].mxu0
  %v387 = vpop.f32.mrb[0].mxu0
  %v388 = vadd.f32 %v291, %v387
  %v389 = vpop.f32.mrb[0].mxu0
  %390 = vdwg.mxu0
  %v391 = vld [vmem:[%s3] sm:$0xff]
  %v392 = vld [vmem:[%s3 + $0x8] sm:$0xff]
  %v393 = vld [vmem:[%s3 + $0x10] sm:$0xff]
  %v394 = vld [vmem:[%s3 + $0x18] sm:$0xff]
  %v395 = vadd.f32 %v377, %v391
  %v396 = vadd.f32 %v380, %v392
  %v397 = vadd.f32 %v385, %v393
  %v398 = vadd.f32 %v388, %v394
  %399 = vst [vmem:[%s10] sm:$0xff] %v395
  %400 = vst [vmem:[%s10 + $0x8] sm:$0xff] %v396
  %401 = vst [vmem:[%s10 + $0x10] sm:$0xff] %v397
  %402 = vst [vmem:[%s10 + $0x18] sm:$0xff] %v398
  %v403 = vld [vmem:[%s7] sm:$0xf]
  %v404 = vld [vmem:[%s7 + $0x4] sm:$0xf]
  %v405 = vld [vmem:[%s7 + $0x8] sm:$0xf]
  %v406 = vld [vmem:[%s7 + $0xc] sm:$0xf]
  %v407 = vld [vmem:[%s7 + $0x10] sm:$0xf]
  %v408 = vld [vmem:[%s7 + $0x14] sm:$0xf]
  %v409 = vld [vmem:[%s7 + $0x18] sm:$0xf]
  %v410 = vld [vmem:[%s7 + $0x1c] sm:$0xf]
  %v411 = vld [vmem:[%s7 + $0x20] sm:$0xf]
  %v412 = vld [vmem:[%s7 + $0x24] sm:$0xf]
  %v413 = vld [vmem:[%s7 + $0x28] sm:$0xf]
  %v414 = vld [vmem:[%s7 + $0x2c] sm:$0xf]
  %v415 = vld [vmem:[%s7 + $0x30] sm:$0xf]
  %v416 = vld [vmem:[%s7 + $0x34] sm:$0xf]
  %v417 = vld [vmem:[%s7 + $0x38] sm:$0xf]
  %v418 = vld [vmem:[%s7 + $0x3c] sm:$0xf]
  %v419 = vld [vmem:[%s2] sm:$0xff]
  %v420 = vld [vmem:[%s2 + $0x8] sm:$0xff]
  %v421 = vld [vmem:[%s2 + $0x10] sm:$0xff]
  %v422 = vld [vmem:[%s2 + $0x18] sm:$0xff]
  %v423 = vpack.c.bf16 %v420, %v419
  %v424 = vpack.c.bf16 %v422, %v421
  %v425 = vld [vmem:[%s8] sm:$0xf]
  %v426 = vld [vmem:[%s8 + $0x4] sm:$0xf]
  %v427 = vld [vmem:[%s8 + $0x8] sm:$0xf]
  %v428 = vld [vmem:[%s8 + $0xc] sm:$0xf]
  %v429 = vld [vmem:[%s8 + $0x10] sm:$0xf]
  %v430 = vld [vmem:[%s8 + $0x14] sm:$0xf]
  %v431 = vld [vmem:[%s8 + $0x18] sm:$0xf]
  %v432 = vld [vmem:[%s8 + $0x1c] sm:$0xf]
  %v433 = vld [vmem:[%s8 + $0x20] sm:$0xf]
  %v434 = vld [vmem:[%s8 + $0x24] sm:$0xf]
  %v435 = vld [vmem:[%s8 + $0x28] sm:$0xf]
  %v436 = vld [vmem:[%s8 + $0x2c] sm:$0xf]
  %v437 = vld [vmem:[%s8 + $0x30] sm:$0xf]
  %v438 = vld [vmem:[%s8 + $0x34] sm:$0xf]
  %v439 = vld [vmem:[%s8 + $0x38] sm:$0xf]
  %v440 = vld [vmem:[%s8 + $0x3c] sm:$0xf]
  %v457 = vunpack.c.l.b16 %v425
  %v458 = vunpack.c.l.b16 %v426
  %v459 = vunpack.c.l.b16 %v427
  %v460 = vunpack.c.l.b16 %v428
  %v461 = vunpack.c.l.b16 %v429
  %v462 = vunpack.c.l.b16 %v430
  %v463 = vunpack.c.l.b16 %v431
  %v464 = vunpack.c.l.b16 %v432
  %v465 = vunpack.c.l.b16 %v433
  %v466 = vunpack.c.l.b16 %v434
  %v467 = vunpack.c.l.b16 %v435
  %v468 = vunpack.c.l.b16 %v436
  %v469 = vunpack.c.l.b16 %v437
  %v470 = vunpack.c.l.b16 %v438
  %v471 = vunpack.c.l.b16 %v439
  %v472 = vunpack.c.l.b16 %v440
  %v473 = vpack.c.b16 %v458, %v457
  %v474 = vpack.c.b16 %v460, %v459
  %v475 = vpack.c.b16 %v462, %v461
  %v476 = vpack.c.b16 %v464, %v463
  %v477 = vpack.c.b16 %v466, %v465
  %v478 = vpack.c.b16 %v468, %v467
  %v479 = vpack.c.b16 %v470, %v469
  %v480 = vpack.c.b16 %v472, %v471
  %489 = vmatprep.subr.bf16.mxu0 0
  %490 = vmatpush1.bf16.xpose.msra.mxu0 %v473
  %491 = vmatprep.subr.bf16.mxu0 0
  %492 = vmatpush1.bf16.xpose.msra.mxu0 %v474
  %493 = vmatprep.subr.bf16.mxu0 0
  %494 = vmatpush1.bf16.xpose.msra.mxu0 %v475
  %495 = vmatprep.subr.bf16.mxu0 0
  %496 = vmatpush1.bf16.xpose.msra.mxu0 %v476
  %497 = vmatprep.subr.bf16.mxu0 0
  %498 = vmatpush1.bf16.xpose.msra.mxu0 %v477
  %499 = vmatprep.subr.bf16.mxu0 0
  %500 = vmatpush1.bf16.xpose.msra.mxu0 %v478
  %501 = vmatprep.subr.bf16.mxu0 0
  %502 = vmatpush1.bf16.xpose.msra.mxu0 %v479
  %503 = vmatprep.subr.bf16.mxu0 0
  %504 = vmatpush1.bf16.xpose.msra.mxu0 %v480
  %505 = vmatprep.subr.bf16.mxu0 0
  %506 = vmatpush1.bf16.xpose.msra.mxu0 0
  %507 = vmatprep.subr.bf16.mxu0 0
  %508 = vmatpush1.bf16.xpose.msra.mxu0 0
  %509 = vmatprep.subr.bf16.mxu0 0
  %510 = vmatpush1.bf16.xpose.msra.mxu0 0
  %511 = vmatprep.subr.bf16.mxu0 0
  %512 = vmatpush1.bf16.xpose.msra.mxu0 0
  %513 = vmatprep.subr.bf16.mxu0 0
  %514 = vmatpush1.bf16.xpose.msra.mxu0 0
  %515 = vmatprep.subr.bf16.mxu0 0
  %516 = vmatpush1.bf16.xpose.msra.mxu0 0
  %517 = vmatprep.subr.bf16.mxu0 0
  %518 = vmatpush1.bf16.xpose.msra.mxu0 0
  %519 = vmatprep.subr.bf16.mxu0 0
  %520 = vmatpush1.bf16.xpose.msra.mxu0 0
  %521 = vmatprep.mubr.bf16.mxu0 0
  %522 = vmatmul.mubr.bf16.gmra.mrb[0].mxu0 %v423
  %v523 = vpop.f32.mrb[0].mxu0
  %v524 = vadd.f32 0.0, %v523
  %v525 = vpop.f32.mrb[0].mxu0
  %v526 = vpop.f32.mrb[0].mxu0
  %v527 = vadd.f32 0.0, %v526
  %v528 = vpop.f32.mrb[0].mxu0
  %529 = vmatprep.mubr.bf16.mxu0 0
  %530 = vmatmul.mubr.bf16.gmra.mrb[0].mxu0 %v424
  %v531 = vpop.f32.mrb[0].mxu0
  %v532 = vadd.f32 0.0, %v531
  %v533 = vpop.f32.mrb[0].mxu0
  %v534 = vpop.f32.mrb[0].mxu0
  %v535 = vadd.f32 0.0, %v534
  %v536 = vpop.f32.mrb[0].mxu0
  %537 = vdwg.mxu0
  %v554 = vunpack.c.l.b16 %v403
  %v555 = vunpack.c.l.b16 %v404
  %v556 = vunpack.c.l.b16 %v405
  %v557 = vunpack.c.l.b16 %v406
  %v558 = vunpack.c.l.b16 %v407
  %v559 = vunpack.c.l.b16 %v408
  %v560 = vunpack.c.l.b16 %v409
  %v561 = vunpack.c.l.b16 %v410
  %v562 = vunpack.c.l.b16 %v411
  %v563 = vunpack.c.l.b16 %v412
  %v564 = vunpack.c.l.b16 %v413
  %v565 = vunpack.c.l.b16 %v414
  %v566 = vunpack.c.l.b16 %v415
  %v567 = vunpack.c.l.b16 %v416
  %v568 = vunpack.c.l.b16 %v417
  %v569 = vunpack.c.l.b16 %v418
  %v570 = vpack.c.b16 %v555, %v554
  %v571 = vpack.c.b16 %v557, %v556
  %v572 = vpack.c.b16 %v559, %v558
  %v573 = vpack.c.b16 %v561, %v560
  %v574 = vpack.c.b16 %v563, %v562
  %v575 = vpack.c.b16 %v565, %v564
  %v576 = vpack.c.b16 %v567, %v566
  %v577 = vpack.c.b16 %v569, %v568
  %586 = vmatprep.subr.bf16.mxu0 0
  %587 = vmatpush1.bf16.xpose.msra.mxu0 %v570
  %588 = vmatprep.subr.bf16.mxu0 0
  %589 = vmatpush1.bf16.xpose.msra.mxu0 %v571
  %590 = vmatprep.subr.bf16.mxu0 0
  %591 = vmatpush1.bf16.xpose.msra.mxu0 %v572
  %592 = vmatprep.subr.bf16.mxu0 0
  %593 = vmatpush1.bf16.xpose.msra.mxu0 %v573
  %594 = vmatprep.subr.bf16.mxu0 0
  %595 = vmatpush1.bf16.xpose.msra.mxu0 %v574
  %596 = vmatprep.subr.bf16.mxu0 0
  %597 = vmatpush1.bf16.xpose.msra.mxu0 %v575
  %598 = vmatprep.subr.bf16.mxu0 0
  %599 = vmatpush1.bf16.xpose.msra.mxu0 %v576
  %600 = vmatprep.subr.bf16.mxu0 0
  %601 = vmatpush1.bf16.xpose.msra.mxu0 %v577
  %602 = vmatprep.subr.bf16.mxu0 0
  %603 = vmatpush1.bf16.xpose.msra.mxu0 0
  %604 = vmatprep.subr.bf16.mxu0 0
  %605 = vmatpush1.bf16.xpose.msra.mxu0 0
  %606 = vmatprep.subr.bf16.mxu0 0
  %607 = vmatpush1.bf16.xpose.msra.mxu0 0
  %608 = vmatprep.subr.bf16.mxu0 0
  %609 = vmatpush1.bf16.xpose.msra.mxu0 0
  %610 = vmatprep.subr.bf16.mxu0 0
  %611 = vmatpush1.bf16.xpose.msra.mxu0 0
  %612 = vmatprep.subr.bf16.mxu0 0
  %613 = vmatpush1.bf16.xpose.msra.mxu0 0
  %614 = vmatprep.subr.bf16.mxu0 0
  %615 = vmatpush1.bf16.xpose.msra.mxu0 0
  %616 = vmatprep.subr.bf16.mxu0 0
  %617 = vmatpush1.bf16.xpose.msra.mxu0 0
  %618 = vmatprep.mubr.bf16.mxu0 0
  %619 = vmatmul.mubr.bf16.gmra.mrb[0].mxu0 %v40
  %v620 = vpop.f32.mrb[0].mxu0
  %v621 = vadd.f32 %v524, %v620
  %v622 = vpop.f32.mrb[0].mxu0
  %v623 = vpop.f32.mrb[0].mxu0
  %v624 = vadd.f32 %v527, %v623
  %v625 = vpop.f32.mrb[0].mxu0
  %626 = vmatprep.mubr.bf16.mxu0 0
  %627 = vmatmul.mubr.bf16.gmra.mrb[0].mxu0 %v41
  %v628 = vpop.f32.mrb[0].mxu0
  %v629 = vadd.f32 %v532, %v628
  %v630 = vpop.f32.mrb[0].mxu0
  %v631 = vpop.f32.mrb[0].mxu0
  %v632 = vadd.f32 %v535, %v631
  %v633 = vpop.f32.mrb[0].mxu0
  %634 = vdwg.mxu0
  %v635 = vld [vmem:[%s4] sm:$0xff]
  %v636 = vld [vmem:[%s4 + $0x8] sm:$0xff]
  %v637 = vld [vmem:[%s4 + $0x10] sm:$0xff]
  %v638 = vld [vmem:[%s4 + $0x18] sm:$0xff]
  %v639 = vadd.f32 %v621, %v635
  %v640 = vadd.f32 %v624, %v636
  %v641 = vadd.f32 %v629, %v637
  %v642 = vadd.f32 %v632, %v638
  %643 = vst [vmem:[%s11] sm:$0xff] %v639
  %644 = vst [vmem:[%s11 + $0x8] sm:$0xff] %v640
  %645 = vst [vmem:[%s11 + $0x10] sm:$0xff] %v641
  %646 = vst [vmem:[%s11 + $0x18] sm:$0xff] %v642
  // Predicated region
  $region38: #{attention_tie_forward.3} parent=0 // pred_check
    _
  $region39: #{attention_tie_forward.3} parent=0 // pred_check_branch
    %648 = sbr.rel (0) target = $region41
  $region40: #{attention_tie_forward.3} parent=0 // pred_region
    _
  $region41: #{attention_tie_forward.3} parent=0 // pred_fallthru
    _
  // Predicated region
  $region42: #{attention_tie_forward.3} parent=0 // pred_check
    _
  $region43: #{attention_tie_forward.3} parent=0 // pred_check_branch
    %650 = sbr.rel (0) target = $region45
  $region44: #{attention_tie_forward.3} parent=0 // pred_region
    _
  $region45: #{attention_tie_forward.3} parent=0 // pred_fallthru
    _
  // Predicated region
  $region46: #{attention_tie_forward.3} parent=0 // pred_check
    _
  $region47: #{attention_tie_forward.3} parent=0 // pred_check_branch
    %652 = sbr.rel (0) target = $region49
  $region48: #{attention_tie_forward.3} parent=0 // pred_region
    _
  $region49: #{attention_tie_forward.3} parent=0 // pred_fallthru
    _
  // Predicated region
  $region50: #{attention_tie_forward.3} parent=0 // pred_check
    _
  $region51: #{attention_tie_forward.3} parent=0 // pred_check_branch
    %654 = sbr.rel (0) target = $region53
  $region52: #{attention_tie_forward.3} parent=0 // pred_region
    _
  $region53: #{attention_tie_forward.3} parent=0 // pred_fallthru
    _
  // Predicated region
  $region54: #{attention_tie_forward.3} parent=0 // pred_check
    _
  $region55: #{attention_tie_forward.3} parent=0 // pred_check_branch
    %656 = sbr.rel (0) target = $region57
  $region56: #{attention_tie_forward.3} parent=0 // pred_region
    _
  $region57: #{attention_tie_forward.3} parent=0 // pred_fallthru
    _
  // Predicated region
  $region58: #{attention_tie_forward.3} parent=0 // pred_check
    _
  $region59: #{attention_tie_forward.3} parent=0 // pred_check_branch
    %658 = sbr.rel (0) target = $region61
  $region60: #{attention_tie_forward.3} parent=0 // pred_region
    _
  $region61: #{attention_tie_forward.3} parent=0 // pred_fallthru
    _

// kernel: attention_tie_forward.5
$region0: #{attention_tie_forward.5}
  #allocation0 [shape = 'u32[]', space=smem, size = 0x4, offset = 0x4, fixed_abs, tag = 'smem constant byte address 0x4 - core index']
  #allocation1 [shape = 'u32[144,128]{1,0:T(1,128)}', space=vmem, size = 0x12000, scoped, tag = 'internal scratch']
  %s0 = inlined_call_operand.vmem [shape: f32[32,128], index: 0, kind: input, shape index: {}]
  %s1 = inlined_call_operand.vmem [shape: f32[32,128], index: 1, kind: input, shape index: {}]
  %s2 = inlined_call_operand.vmem [shape: f32[32,128], index: 2, kind: input, shape index: {}]
  %s3 = inlined_call_operand.vmem [shape: f32[1,128], index: 3, kind: input, shape index: {}]
  %s4 = inlined_call_operand.vmem [shape: f32[1,128], index: 4, kind: input, shape index: {}]
  %s5 = inlined_call_operand.vmem [shape: bf16[128,128], index: 5, kind: input, shape index: {}]
  %s6 = inlined_call_operand.vmem [shape: f32[1,128], index: 6, kind: input, shape index: {}]
  %s7 = inlined_call_operand.vmem [shape: bf16[128,128], index: 7, kind: input, shape index: {}]
  %s8 = inlined_call_operand.vmem [shape: f32[1,128], index: 8, kind: input, shape index: {}]
  %s9 = inlined_call_operand.vmem [shape: bf16[128,128], index: 9, kind: input, shape index: {}]
  %s10 = inlined_call_operand.vmem [shape: f32[1,128], index: 10, kind: input, shape index: {}]
  %s11 = inlined_call_operand.vmem [shape: f32[32,128], index: 11, kind: output, shape index: {0}]
  %s12 = inlined_call_operand.vmem [shape: f32[32,128], index: 12, kind: output, shape index: {1}]
  %s13 = inlined_call_operand.vmem [shape: f32[32,128], index: 13, kind: output, shape index: {2}]
  %14 = xla_tuple %s11, %s12, %s13
  %s15 = sld [smem:[#allocation0]]
  $region70: #{attention_tie_forward.5} parent=0
    _
  %s17 = ssub.s32 1, %s15
  %s18 = scalar_select 0, %s17, %s15
  // Predicated region
  $region2: #{attention_tie_forward.5} parent=0 // pred_check
    _
  $region3: #{attention_tie_forward.5} parent=0 // pred_check_branch
    %20 = sbr.rel (0) target = $region5
  $region4: #{attention_tie_forward.5} parent=0 // pred_region
    _
  $region5: #{attention_tie_forward.5} parent=0 // pred_fallthru
    _
  // Predicated region
  $region6: #{attention_tie_forward.5} parent=0 // pred_check
    _
  $region7: #{attention_tie_forward.5} parent=0 // pred_check_branch
    %22 = sbr.rel (0) target = $region9
  $region8: #{attention_tie_forward.5} parent=0 // pred_region
    _
  $region9: #{attention_tie_forward.5} parent=0 // pred_fallthru
    _
  // Predicated region
  $region10: #{attention_tie_forward.5} parent=0 // pred_check
    _
  $region11: #{attention_tie_forward.5} parent=0 // pred_check_branch
    %24 = sbr.rel (0) target = $region13
  $region12: #{attention_tie_forward.5} parent=0 // pred_region
    _
  $region13: #{attention_tie_forward.5} parent=0 // pred_fallthru
    _
  // Predicated region
  $region14: #{attention_tie_forward.5} parent=0 // pred_check
    _
  $region15: #{attention_tie_forward.5} parent=0 // pred_check_branch
    %26 = sbr.rel (0) target = $region17
  $region16: #{attention_tie_forward.5} parent=0 // pred_region
    _
  $region17: #{attention_tie_forward.5} parent=0 // pred_fallthru
    _
  // Predicated region
  $region18: #{attention_tie_forward.5} parent=0 // pred_check
    _
  $region19: #{attention_tie_forward.5} parent=0 // pred_check_branch
    %28 = sbr.rel (0) target = $region21
  $region20: #{attention_tie_forward.5} parent=0 // pred_region
    _
  $region21: #{attention_tie_forward.5} parent=0 // pred_fallthru
    _
  // Predicated region
  $region22: #{attention_tie_forward.5} parent=0 // pred_check
    _
  $region23: #{attention_tie_forward.5} parent=0 // pred_check_branch
    %30 = sbr.rel (0) target = $region25
  $region24: #{attention_tie_forward.5} parent=0 // pred_region
    _
  $region25: #{attention_tie_forward.5} parent=0 // pred_fallthru
    _
  // Predicated region
  $region26: #{attention_tie_forward.5} parent=0 // pred_check
    _
  $region27: #{attention_tie_forward.5} parent=0 // pred_check_branch
    %32 = sbr.rel (0) target = $region29
  $region28: #{attention_tie_forward.5} parent=0 // pred_region
    _
  $region29: #{attention_tie_forward.5} parent=0 // pred_fallthru
    _
  // Predicated region
  $region30: #{attention_tie_forward.5} parent=0 // pred_check
    _
  $region31: #{attention_tie_forward.5} parent=0 // pred_check_branch
    %34 = sbr.rel (0) target = $region33
  $region32: #{attention_tie_forward.5} parent=0 // pred_region
    _
  $region33: #{attention_tie_forward.5} parent=0 // pred_fallthru
    _
  // Predicated region
  $region34: #{attention_tie_forward.5} parent=0 // pred_check
    _
  $region35: #{attention_tie_forward.5} parent=0 // pred_check_branch
    %36 = sbr.rel (0) target = $region37
  $region36: #{attention_tie_forward.5} parent=0 // pred_region
    _
  $region37: #{attention_tie_forward.5} parent=0 // pred_fallthru
    _
  // Predicated region
  $region38: #{attention_tie_forward.5} parent=0 // pred_check
    _
  $region39: #{attention_tie_forward.5} parent=0 // pred_check_branch
    %38 = sbr.rel (0) target = $region41
  $region40: #{attention_tie_forward.5} parent=0 // pred_region
    _
  $region41: #{attention_tie_forward.5} parent=0 // pred_fallthru
    _
  // Predicated region
  $region42: #{attention_tie_forward.5} parent=0 // pred_check
    _
  $region43: #{attention_tie_forward.5} parent=0 // pred_check_branch
    %40 = sbr.rel (0) target = $region45
  $region44: #{attention_tie_forward.5} parent=0 // pred_region
    _
  $region45: #{attention_tie_forward.5} parent=0 // pred_fallthru
    _
  %v42 = vld [vmem:[%s0] sm:$0xff]
  %v43 = vld [vmem:[%s0 + $0x8] sm:$0xff]
  %v44 = vld [vmem:[%s0 + $0x10] sm:$0xff]
  %v45 = vld [vmem:[%s0 + $0x18] sm:$0xff]
  %v46 = vld [vmem:[%s3] sm:$0x1]
  %v48 = vlaneseq
  %v49 = vshrl.u32 %v48, 7
  %v50 = vsub.s32 0, %v49
  %v51 = vrot.slane %v46, %v50
  %v53 = vmul.f32 %v42, %v51
  %v54 = vmul.f32 %v43, %v51
  %v55 = vmul.f32 %v44, %v51
  %v56 = vmul.f32 %v45, %v51
  %v57 = vld [vmem:[%s4] sm:$0x1]
  %v59 = vlaneseq
  %v60 = vshrl.u32 %v59, 7
  %v61 = vsub.s32 0, %v60
  %v62 = vrot.slane %v57, %v61
  %v64 = vadd.f32 %v53, %v62
  %v65 = vadd.f32 %v54, %v62
  %v66 = vadd.f32 %v55, %v62
  %v67 = vadd.f32 %v56, %v62
  %v68 = vpack.c.bf16 %v65, %v64
  %v69 = vpack.c.bf16 %v67, %v66
  %v70 = vld [vmem:[%s5] sm:$0xf]
  %v71 = vld [vmem:[%s5 + $0x4] sm:$0xf]
  %v72 = vld [vmem:[%s5 + $0x8] sm:$0xf]
  %v73 = vld [vmem:[%s5 + $0xc] sm:$0xf]
  %v74 = vld [vmem:[%s5 + $0x10] sm:$0xf]
  %v75 = vld [vmem:[%s5 + $0x14] sm:$0xf]
  %v76 = vld [vmem:[%s5 + $0x18] sm:$0xf]
  %v77 = vld [vmem:[%s5 + $0x1c] sm:$0xf]
  %v78 = vld [vmem:[%s5 + $0x20] sm:$0xf]
  %v79 = vld [vmem:[%s5 + $0x24] sm:$0xf]
  %v80 = vld [vmem:[%s5 + $0x28] sm:$0xf]
  %v81 = vld [vmem:[%s5 + $0x2c] sm:$0xf]
  %v82 = vld [vmem:[%s5 + $0x30] sm:$0xf]
  %v83 = vld [vmem:[%s5 + $0x34] sm:$0xf]
  %v84 = vld [vmem:[%s5 + $0x38] sm:$0xf]
  %v85 = vld [vmem:[%s5 + $0x3c] sm:$0xf]
  %v86 = vld [vmem:[%s6] sm:$0x1]
  %v88 = vlaneseq
  %v89 = vshrl.u32 %v88, 7
  %v90 = vsub.s32 0, %v89
  %v91 = vrot.slane %v86, %v90
  %v109 = vunpack.c.l.b16 %v70
  %v110 = vunpack.c.l.b16 %v71
  %v111 = vunpack.c.l.b16 %v72
  %v112 = vunpack.c.l.b16 %v73
  %v113 = vunpack.c.l.b16 %v74
  %v114 = vunpack.c.l.b16 %v75
  %v115 = vunpack.c.l.b16 %v76
  %v116 = vunpack.c.l.b16 %v77
  %v117 = vunpack.c.l.b16 %v78
  %v118 = vunpack.c.l.b16 %v79
  %v119 = vunpack.c.l.b16 %v80
  %v120 = vunpack.c.l.b16 %v81
  %v121 = vunpack.c.l.b16 %v82
  %v122 = vunpack.c.l.b16 %v83
  %v123 = vunpack.c.l.b16 %v84
  %v124 = vunpack.c.l.b16 %v85
  %v125 = vpack.c.b16 %v110, %v109
  %v126 = vpack.c.b16 %v112, %v111
  %v127 = vpack.c.b16 %v114, %v113
  %v128 = vpack.c.b16 %v116, %v115
  %v129 = vpack.c.b16 %v118, %v117
  %v130 = vpack.c.b16 %v120, %v119
  %v131 = vpack.c.b16 %v122, %v121
  %v132 = vpack.c.b16 %v124, %v123
  %141 = vmatprep.subr.bf16.mxu0 0
  %142 = vmatpush1.bf16.xpose.msra.mxu0 %v125
  %143 = vmatprep.subr.bf16.mxu0 0
  %144 = vmatpush1.bf16.xpose.msra.mxu0 %v126
  %145 = vmatprep.subr.bf16.mxu0 0
  %146 = vmatpush1.bf16.xpose.msra.mxu0 %v127
  %147 = vmatprep.subr.bf16.mxu0 0
  %148 = vmatpush1.bf16.xpose.msra.mxu0 %v128
  %149 = vmatprep.subr.bf16.mxu0 0
  %150 = vmatpush1.bf16.xpose.msra.mxu0 %v129
  %151 = vmatprep.subr.bf16.mxu0 0
  %152 = vmatpush1.bf16.xpose.msra.mxu0 %v130
  %153 = vmatprep.subr.bf16.mxu0 0
  %154 = vmatpush1.bf16.xpose.msra.mxu0 %v131
  %155 = vmatprep.subr.bf16.mxu0 0
  %156 = vmatpush1.bf16.xpose.msra.mxu0 %v132
  %157 = vmatprep.subr.bf16.mxu0 0
  %158 = vmatpush1.bf16.xpose.msra.mxu0 0
  %159 = vmatprep.subr.bf16.mxu0 0
  %160 = vmatpush1.bf16.xpose.msra.mxu0 0
  %161 = vmatprep.subr.bf16.mxu0 0
  %162 = vmatpush1.bf16.xpose.msra.mxu0 0
  %163 = vmatprep.subr.bf16.mxu0 0
  %164 = vmatpush1.bf16.xpose.msra.mxu0 0
  %165 = vmatprep.subr.bf16.mxu0 0
  %166 = vmatpush1.bf16.xpose.msra.mxu0 0
  %167 = vmatprep.subr.bf16.mxu0 0
  %168 = vmatpush1.bf16.xpose.msra.mxu0 0
  %169 = vmatprep.subr.bf16.mxu0 0
  %170 = vmatpush1.bf16.xpose.msra.mxu0 0
  %171 = vmatprep.subr.bf16.mxu0 0
  %172 = vmatpush1.bf16.xpose.msra.mxu0 0
  %173 = vmatprep.mubr.bf16.mxu0 0
  %174 = vmatmul.mubr.bf16.gmra.mrb[0].mxu0 %v68
  %v175 = vpop.f32.mrb[0].mxu0
  %v176 = vadd.f32 %v91, %v175
  %v177 = vpop.f32.mrb[0].mxu0
  %v178 = vpop.f32.mrb[0].mxu0
  %v179 = vadd.f32 %v91, %v178
  %v180 = vpop.f32.mrb[0].mxu0
  %181 = vmatprep.mubr.bf16.mxu0 0
  %182 = vmatmul.mubr.bf16.gmra.mrb[0].mxu0 %v69
  %v183 = vpop.f32.mrb[0].mxu0
  %v184 = vadd.f32 %v91, %v183
  %v185 = vpop.f32.mrb[0].mxu0
  %v186 = vpop.f32.mrb[0].mxu0
  %v187 = vadd.f32 %v91, %v186
  %v188 = vpop.f32.mrb[0].mxu0
  %189 = vdwg.mxu0
  %190 = vst [vmem:[%s11] sm:$0xff] %v176
  %191 = vst [vmem:[%s11 + $0x8] sm:$0xff] %v179
  %192 = vst [vmem:[%s11 + $0x10] sm:$0xff] %v184
  %193 = vst [vmem:[%s11 + $0x18] sm:$0xff] %v187
  %v194 = vld [vmem:[%s1] sm:$0xff]
  %v195 = vld [vmem:[%s1 + $0x8] sm:$0xff]
  %v196 = vld [vmem:[%s1 + $0x10] sm:$0xff]
  %v197 = vld [vmem:[%s1 + $0x18] sm:$0xff]
  %v198 = vpack.c.bf16 %v195, %v194
  %v199 = vpack.c.bf16 %v197, %v196
  %v200 = vld [vmem:[%s7] sm:$0xf]
  %v201 = vld [vmem:[%s7 + $0x4] sm:$0xf]
  %v202 = vld [vmem:[%s7 + $0x8] sm:$0xf]
  %v203 = vld [vmem:[%s7 + $0xc] sm:$0xf]
  %v204 = vld [vmem:[%s7 + $0x10] sm:$0xf]
  %v205 = vld [vmem:[%s7 + $0x14] sm:$0xf]
  %v206 = vld [vmem:[%s7 + $0x18] sm:$0xf]
  %v207 = vld [vmem:[%s7 + $0x1c] sm:$0xf]
  %v208 = vld [vmem:[%s7 + $0x20] sm:$0xf]
  %v209 = vld [vmem:[%s7 + $0x24] sm:$0xf]
  %v210 = vld [vmem:[%s7 + $0x28] sm:$0xf]
  %v211 = vld [vmem:[%s7 + $0x2c] sm:$0xf]
  %v212 = vld [vmem:[%s7 + $0x30] sm:$0xf]
  %v213 = vld [vmem:[%s7 + $0x34] sm:$0xf]
  %v214 = vld [vmem:[%s7 + $0x38] sm:$0xf]
  %v215 = vld [vmem:[%s7 + $0x3c] sm:$0xf]
  %v216 = vld [vmem:[%s8] sm:$0x1]
  %v218 = vlaneseq
  %v219 = vshrl.u32 %v218, 7
  %v220 = vsub.s32 0, %v219
  %v221 = vrot.slane %v216, %v220
  %v239 = vunpack.c.l.b16 %v200
  %v240 = vunpack.c.l.b16 %v201
  %v241 = vunpack.c.l.b16 %v202
  %v242 = vunpack.c.l.b16 %v203
  %v243 = vunpack.c.l.b16 %v204
  %v244 = vunpack.c.l.b16 %v205
  %v245 = vunpack.c.l.b16 %v206
  %v246 = vunpack.c.l.b16 %v207
  %v247 = vunpack.c.l.b16 %v208
  %v248 = vunpack.c.l.b16 %v209
  %v249 = vunpack.c.l.b16 %v210
  %v250 = vunpack.c.l.b16 %v211
  %v251 = vunpack.c.l.b16 %v212
  %v252 = vunpack.c.l.b16 %v213
  %v253 = vunpack.c.l.b16 %v214
  %v254 = vunpack.c.l.b16 %v215
  %v255 = vpack.c.b16 %v240, %v239
  %v256 = vpack.c.b16 %v242, %v241
  %v257 = vpack.c.b16 %v244, %v243
  %v258 = vpack.c.b16 %v246, %v245
  %v259 = vpack.c.b16 %v248, %v247
  %v260 = vpack.c.b16 %v250, %v249
  %v261 = vpack.c.b16 %v252, %v251
  %v262 = vpack.c.b16 %v254, %v253
  %271 = vmatprep.subr.bf16.mxu0 0
  %272 = vmatpush1.bf16.xpose.msra.mxu0 %v255
  %273 = vmatprep.subr.bf16.mxu0 0
  %274 = vmatpush1.bf16.xpose.msra.mxu0 %v256
  %275 = vmatprep.subr.bf16.mxu0 0
  %276 = vmatpush1.bf16.xpose.msra.mxu0 %v257
  %277 = vmatprep.subr.bf16.mxu0 0
  %278 = vmatpush1.bf16.xpose.msra.mxu0 %v258
  %279 = vmatprep.subr.bf16.mxu0 0
  %280 = vmatpush1.bf16.xpose.msra.mxu0 %v259
  %281 = vmatprep.subr.bf16.mxu0 0
  %282 = vmatpush1.bf16.xpose.msra.mxu0 %v260
  %283 = vmatprep.subr.bf16.mxu0 0
  %284 = vmatpush1.bf16.xpose.msra.mxu0 %v261
  %285 = vmatprep.subr.bf16.mxu0 0
  %286 = vmatpush1.bf16.xpose.msra.mxu0 %v262
  %287 = vmatprep.subr.bf16.mxu0 0
  %288 = vmatpush1.bf16.xpose.msra.mxu0 0
  %289 = vmatprep.subr.bf16.mxu0 0
  %290 = vmatpush1.bf16.xpose.msra.mxu0 0
  %291 = vmatprep.subr.bf16.mxu0 0
  %292 = vmatpush1.bf16.xpose.msra.mxu0 0
  %293 = vmatprep.subr.bf16.mxu0 0
  %294 = vmatpush1.bf16.xpose.msra.mxu0 0
  %295 = vmatprep.subr.bf16.mxu0 0
  %296 = vmatpush1.bf16.xpose.msra.mxu0 0
  %297 = vmatprep.subr.bf16.mxu0 0
  %298 = vmatpush1.bf16.xpose.msra.mxu0 0
  %299 = vmatprep.subr.bf16.mxu0 0
  %300 = vmatpush1.bf16.xpose.msra.mxu0 0
  %301 = vmatprep.subr.bf16.mxu0 0
  %302 = vmatpush1.bf16.xpose.msra.mxu0 0
  %303 = vmatprep.mubr.bf16.mxu0 0
  %304 = vmatmul.mubr.bf16.gmra.mrb[0].mxu0 %v198
  %v305 = vpop.f32.mrb[0].mxu0
  %v306 = vadd.f32 %v221, %v305
  %v307 = vpop.f32.mrb[0].mxu0
  %v308 = vpop.f32.mrb[0].mxu0
  %v309 = vadd.f32 %v221, %v308
  %v310 = vpop.f32.mrb[0].mxu0
  %311 = vmatprep.mubr.bf16.mxu0 0
  %312 = vmatmul.mubr.bf16.gmra.mrb[0].mxu0 %v199
  %v313 = vpop.f32.mrb[0].mxu0
  %v314 = vadd.f32 %v221, %v313
  %v315 = vpop.f32.mrb[0].mxu0
  %v316 = vpop.f32.mrb[0].mxu0
  %v317 = vadd.f32 %v221, %v316
  %v318 = vpop.f32.mrb[0].mxu0
  %319 = vdwg.mxu0
  %320 = vst [vmem:[%s12] sm:$0xff] %v306
  %321 = vst [vmem:[%s12 + $0x8] sm:$0xff] %v309
  %322 = vst [vmem:[%s12 + $0x10] sm:$0xff] %v314
  %323 = vst [vmem:[%s12 + $0x18] sm:$0xff] %v317
  %v324 = vld [vmem:[%s2] sm:$0xff]
  %v325 = vld [vmem:[%s2 + $0x8] sm:$0xff]
  %v326 = vld [vmem:[%s2 + $0x10] sm:$0xff]
  %v327 = vld [vmem:[%s2 + $0x18] sm:$0xff]
  %v328 = vpack.c.bf16 %v325, %v324
  %v329 = vpack.c.bf16 %v327, %v326
  %v330 = vld [vmem:[%s9] sm:$0xf]
  %v331 = vld [vmem:[%s9 + $0x4] sm:$0xf]
  %v332 = vld [vmem:[%s9 + $0x8] sm:$0xf]
  %v333 = vld [vmem:[%s9 + $0xc] sm:$0xf]
  %v334 = vld [vmem:[%s9 + $0x10] sm:$0xf]
  %v335 = vld [vmem:[%s9 + $0x14] sm:$0xf]
  %v336 = vld [vmem:[%s9 + $0x18] sm:$0xf]
  %v337 = vld [vmem:[%s9 + $0x1c] sm:$0xf]
  %v338 = vld [vmem:[%s9 + $0x20] sm:$0xf]
  %v339 = vld [vmem:[%s9 + $0x24] sm:$0xf]
  %v340 = vld [vmem:[%s9 + $0x28] sm:$0xf]
  %v341 = vld [vmem:[%s9 + $0x2c] sm:$0xf]
  %v342 = vld [vmem:[%s9 + $0x30] sm:$0xf]
  %v343 = vld [vmem:[%s9 + $0x34] sm:$0xf]
  %v344 = vld [vmem:[%s9 + $0x38] sm:$0xf]
  %v345 = vld [vmem:[%s9 + $0x3c] sm:$0xf]
  %v346 = vld [vmem:[%s10] sm:$0x1]
  %v348 = vlaneseq
  %v349 = vshrl.u32 %v348, 7
  %v350 = vsub.s32 0, %v349
  %v351 = vrot.slane %v346, %v350
  %v369 = vunpack.c.l.b16 %v330
  %v370 = vunpack.c.l.b16 %v331
  %v371 = vunpack.c.l.b16 %v332
  %v372 = vunpack.c.l.b16 %v333
  %v373 = vunpack.c.l.b16 %v334
  %v374 = vunpack.c.l.b16 %v335
  %v375 = vunpack.c.l.b16 %v336
  %v376 = vunpack.c.l.b16 %v337
  %v377 = vunpack.c.l.b16 %v338
  %v378 = vunpack.c.l.b16 %v339
  %v379 = vunpack.c.l.b16 %v340
  %v380 = vunpack.c.l.b16 %v341
  %v381 = vunpack.c.l.b16 %v342
  %v382 = vunpack.c.l.b16 %v343
  %v383 = vunpack.c.l.b16 %v344
  %v384 = vunpack.c.l.b16 %v345
  %v385 = vpack.c.b16 %v370, %v369
  %v386 = vpack.c.b16 %v372, %v371
  %v387 = vpack.c.b16 %v374, %v373
  %v388 = vpack.c.b16 %v376, %v375
  %v389 = vpack.c.b16 %v378, %v377
  %v390 = vpack.c.b16 %v380, %v379
  %v391 = vpack.c.b16 %v382, %v381
  %v392 = vpack.c.b16 %v384, %v383
  %401 = vmatprep.subr.bf16.mxu0 0
  %402 = vmatpush1.bf16.xpose.msra.mxu0 %v385
  %403 = vmatprep.subr.bf16.mxu0 0
  %404 = vmatpush1.bf16.xpose.msra.mxu0 %v386
  %405 = vmatprep.subr.bf16.mxu0 0
  %406 = vmatpush1.bf16.xpose.msra.mxu0 %v387
  %407 = vmatprep.subr.bf16.mxu0 0
  %408 = vmatpush1.bf16.xpose.msra.mxu0 %v388
  %409 = vmatprep.subr.bf16.mxu0 0
  %410 = vmatpush1.bf16.xpose.msra.mxu0 %v389
  %411 = vmatprep.subr.bf16.mxu0 0
  %412 = vmatpush1.bf16.xpose.msra.mxu0 %v390
  %413 = vmatprep.subr.bf16.mxu0 0
  %414 = vmatpush1.bf16.xpose.msra.mxu0 %v391
  %415 = vmatprep.subr.bf16.mxu0 0
  %416 = vmatpush1.bf16.xpose.msra.mxu0 %v392
  %417 = vmatprep.subr.bf16.mxu0 0
  %418 = vmatpush1.bf16.xpose.msra.mxu0 0
  %419 = vmatprep.subr.bf16.mxu0 0
  %420 = vmatpush1.bf16.xpose.msra.mxu0 0
  %421 = vmatprep.subr.bf16.mxu0 0
  %422 = vmatpush1.bf16.xpose.msra.mxu0 0
  %423 = vmatprep.subr.bf16.mxu0 0
  %424 = vmatpush1.bf16.xpose.msra.mxu0 0
  %425 = vmatprep.subr.bf16.mxu0 0
  %426 = vmatpush1.bf16.xpose.msra.mxu0 0
  %427 = vmatprep.subr.bf16.mxu0 0
  %428 = vmatpush1.bf16.xpose.msra.mxu0 0
  %429 = vmatprep.subr.bf16.mxu0 0
  %430 = vmatpush1.bf16.xpose.msra.mxu0 0
  %431 = vmatprep.subr.bf16.mxu0 0
  %432 = vmatpush1.bf16.xpose.msra.mxu0 0
  %433 = vmatprep.mubr.bf16.mxu0 0
  %434 = vmatmul.mubr.bf16.gmra.mrb[0].mxu0 %v328
  %v435 = vpop.f32.mrb[0].mxu0
  %v436 = vadd.f32 %v351, %v435
  %v437 = vpop.f32.mrb[0].mxu0
  %v438 = vpop.f32.mrb[0].mxu0
  %v439 = vadd.f32 %v351, %v438
  %v440 = vpop.f32.mrb[0].mxu0
  %441 = vmatprep.mubr.bf16.mxu0 0
  %442 = vmatmul.mubr.bf16.gmra.mrb[0].mxu0 %v329
  %v443 = vpop.f32.mrb[0].mxu0
  %v444 = vadd.f32 %v351, %v443
  %v445 = vpop.f32.mrb[0].mxu0
  %v446 = vpop.f32.mrb[0].mxu0
  %v447 = vadd.f32 %v351, %v446
  %v448 = vpop.f32.mrb[0].mxu0
  %449 = vdwg.mxu0
  %450 = vst [vmem:[%s13] sm:$0xff] %v436
  %451 = vst [vmem:[%s13 + $0x8] sm:$0xff] %v439
  %452 = vst [vmem:[%s13 + $0x10] sm:$0xff] %v444
  %453 = vst [vmem:[%s13 + $0x18] sm:$0xff] %v447
  // Predicated region
  $region46: #{attention_tie_forward.5} parent=0 // pred_check
    _
  $region47: #{attention_tie_forward.5} parent=0 // pred_check_branch
    %455 = sbr.rel (0) target = $region49
  $region48: #{attention_tie_forward.5} parent=0 // pred_region
    _
  $region49: #{attention_tie_forward.5} parent=0 // pred_fallthru
    _
  // Predicated region
  $region50: #{attention_tie_forward.5} parent=0 // pred_check
    _
  $region51: #{attention_tie_forward.5} parent=0 // pred_check_branch
    %457 = sbr.rel (0) target = $region53
  $region52: #{attention_tie_forward.5} parent=0 // pred_region
    _
  $region53: #{attention_tie_forward.5} parent=0 // pred_fallthru
    _
  // Predicated region
  $region54: #{attention_tie_forward.5} parent=0 // pred_check
    _
  $region55: #{attention_tie_forward.5} parent=0 // pred_check_branch
    %459 = sbr.rel (0) target = $region57
  $region56: #{attention_tie_forward.5} parent=0 // pred_region
    _
  $region57: #{attention_tie_forward.5} parent=0 // pred_fallthru
    _
  // Predicated region
  $region58: #{attention_tie_forward.5} parent=0 // pred_check
    _
  $region59: #{attention_tie_forward.5} parent=0 // pred_check_branch
    %461 = sbr.rel (0) target = $region61
  $region60: #{attention_tie_forward.5} parent=0 // pred_region
    _
  $region61: #{attention_tie_forward.5} parent=0 // pred_fallthru
    _
  // Predicated region
  $region62: #{attention_tie_forward.5} parent=0 // pred_check
    _
  $region63: #{attention_tie_forward.5} parent=0 // pred_check_branch
    %463 = sbr.rel (0) target = $region65
  $region64: #{attention_tie_forward.5} parent=0 // pred_region
    _
  $region65: #{attention_tie_forward.5} parent=0 // pred_fallthru
    _
  // Predicated region
  $region66: #{attention_tie_forward.5} parent=0 // pred_check
    _
  $region67: #{attention_tie_forward.5} parent=0 // pred_check_branch
    %465 = sbr.rel (0) target = $region69
  $region68: #{attention_tie_forward.5} parent=0 // pred_region
    _
  $region69: #{attention_tie_forward.5} parent=0 // pred_fallthru
    _

// kernel: attention_tie_forward.4
$region0: #{attention_tie_forward.4}
  #allocation0 [shape = 'u32[]', space=smem, size = 0x4, offset = 0x4, fixed_abs, tag = 'smem constant byte address 0x4 - core index']
  #allocation1 [shape = 'u32[144,128]{1,0:T(1,128)}', space=vmem, size = 0x12000, scoped, tag = 'internal scratch']
  %s0 = inlined_call_operand.vmem [shape: f32[2,16,128], index: 0, kind: input, shape index: {}]
  %s1 = inlined_call_operand.vmem [shape: f32[2,16,128], index: 1, kind: input, shape index: {}]
  %s2 = inlined_call_operand.vmem [shape: f32[2,16,128], index: 2, kind: input, shape index: {}]
  %s3 = inlined_call_operand.vmem [shape: s8[2,2,16,16], index: 3, kind: input, shape index: {}]
  %s4 = inlined_call_operand.vmem [shape: f32[2,16,128], index: 4, kind: output, shape index: {}]
  %s5 = sld [smem:[#allocation0]]
  $region49: #{attention_tie_forward.4} parent=0
    _
  %s7 = ssub.s32 1, %s5
  %s8 = scalar_select 0, %s7, %s5
  loop: start=0, step=1, limit=4
  $region2: #{attention_tie_forward.4} parent=0 // loop_pre_header
    _
  $region3: #{attention_tie_forward.4} parent=0 // loop_header
    %s10 = sphi 0, %s14
    %p11 = scmp.ge.s32.totalorder %s10, 4
    %s20 = sphi 0, %s22
    %s23 = sphi 0, %s20
    %s24 = sphi 0, %s23
    %s40 = sphi 0, %s24
    %s46 = sphi 0, %s48
    %s49 = sphi 0, %s46
    %s50 = sphi 0, %s49
    %s66 = sphi 0, %s50
    %s72 = sphi 0, %s74
    %s75 = sphi 0, %s72
    %s76 = sphi 0, %s75
    %s92 = sphi 0, %s76
    %s98 = sphi 0, %s100
    %s101 = sphi 0, %s98
    %s102 = sphi 0, %s101
    %s118 = sphi 0, %s102
    %s124 = sphi 0, %s126
    %s127 = sphi 0, %s124
    %s128 = sphi 0, %s127
    %s144 = sphi 0, %s128
  $region4: #{attention_tie_forward.4} parent=0 // loop_header_branch
    %13 = sbr.rel (%p11) target = $region8
  $region5: #{attention_tie_forward.4} parent=0 // loop_body
    %s15 = ssub.s32 %s10, 1
    %s16 = ssub.s32 %s10, 2
    %s17 = sadd.s32 %s10, 1
    %s18 = ssub.s32 %s10, %s17
    %p19 = scmp.eq.s32.totalorder %s18, 0
    %s21 = sadd.s32 %s20, 1
    %s22 = scalar_select %p19, %s20, %s21
    %p25 = pneg %p19
    %p26 = scmp.eq.s32.totalorder %s10, 1
    %p27 = por %p25, %p26
    %p28 = scmp.ne.s32.totalorder %s20, %s23
    %p29 = scmp.eq.s32.totalorder %s10, 0
    %p30 = por %p28, %p29
    %p31 = scmp.ne.s32.totalorder %s20, %s23
    %p32 = scmp.eq.s32.totalorder %s15, 1
    %p33 = por %p31, %p32
    %p34 = scmp.ne.s32.totalorder %s23, %s24
    %p35 = scmp.eq.s32.totalorder %s15, 0
    %p36 = por %p34, %p35
    %p37 = scmp.ne.s32.totalorder %s23, %s24
    %p38 = scmp.eq.s32.totalorder %s16, 1
    %p39 = por %p37, %p38
    %p41 = scmp.ne.s32.totalorder %s24, %s40
    %p42 = scmp.eq.s32.totalorder %s16, 0
    %p43 = por %p41, %p42
    %s44 = ssub.s32 %s10, %s17
    %p45 = scmp.eq.s32.totalorder %s44, 0
    %s47 = sadd.s32 %s46, 1
    %s48 = scalar_select %p45, %s46, %s47
    %p51 = pneg %p45
    %p52 = scmp.eq.s32.totalorder %s10, 1
    %p53 = por %p51, %p52
    %p54 = scmp.ne.s32.totalorder %s46, %s49
    %p55 = scmp.eq.s32.totalorder %s10, 0
    %p56 = por %p54, %p55
    %p57 = scmp.ne.s32.totalorder %s46, %s49
    %p58 = scmp.eq.s32.totalorder %s15, 1
    %p59 = por %p57, %p58
    %p60 = scmp.ne.s32.totalorder %s49, %s50
    %p61 = scmp.eq.s32.totalorder %s15, 0
    %p62 = por %p60, %p61
    %p63 = scmp.ne.s32.totalorder %s49, %s50
    %p64 = scmp.eq.s32.totalorder %s16, 1
    %p65 = por %p63, %p64
    %p67 = scmp.ne.s32.totalorder %s50, %s66
    %p68 = scmp.eq.s32.totalorder %s16, 0
    %p69 = por %p67, %p68
    %s70 = ssub.s32 %s10, %s17
    %p71 = scmp.eq.s32.totalorder %s70, 0
    %s73 = sadd.s32 %s72, 1
    %s74 = scalar_select %p71, %s72, %s73
    %p77 = pneg %p71
    %p78 = scmp.eq.s32.totalorder %s10, 1
    %p79 = por %p77, %p78
    %p80 = scmp.ne.s32.totalorder %s72, %s75
    %p81 = scmp.eq.s32.totalorder %s10, 0
    %p82 = por %p80, %p81
    %p83 = scmp.ne.s32.totalorder %s72, %s75
    %p84 = scmp.eq.s32.totalorder %s15, 1
    %p85 = por %p83, %p84
    %p86 = scmp.ne.s32.totalorder %s75, %s76
    %p87 = scmp.eq.s32.totalorder %s15, 0
    %p88 = por %p86, %p87
    %p89 = scmp.ne.s32.totalorder %s75, %s76
    %p90 = scmp.eq.s32.totalorder %s16, 1
    %p91 = por %p89, %p90
    %p93 = scmp.ne.s32.totalorder %s76, %s92
    %p94 = scmp.eq.s32.totalorder %s16, 0
    %p95 = por %p93, %p94
    %s96 = ssub.s32 %s10, %s17
    %p97 = scmp.eq.s32.totalorder %s96, 0
    %s99 = sadd.s32 %s98, 1
    %s100 = scalar_select %p97, %s98, %s99
    %p103 = pneg %p97
    %p104 = scmp.eq.s32.totalorder %s10, 1
    %p105 = por %p103, %p104
    %p106 = scmp.ne.s32.totalorder %s98, %s101
    %p107 = scmp.eq.s32.totalorder %s10, 0
    %p108 = por %p106, %p107
    %p109 = scmp.ne.s32.totalorder %s98, %s101
    %p110 = scmp.eq.s32.totalorder %s15, 1
    %p111 = por %p109, %p110
    %p112 = scmp.ne.s32.totalorder %s101, %s102
    %p113 = scmp.eq.s32.totalorder %s15, 0
    %p114 = por %p112, %p113
    %p115 = scmp.ne.s32.totalorder %s101, %s102
    %p116 = scmp.eq.s32.totalorder %s16, 1
    %p117 = por %p115, %p116
    %p119 = scmp.ne.s32.totalorder %s102, %s118
    %p120 = scmp.eq.s32.totalorder %s16, 0
    %p121 = por %p119, %p120
    %s122 = ssub.s32 %s10, %s17
    %p123 = scmp.eq.s32.totalorder %s122, 0
    %s125 = sadd.s32 %s124, 1
    %s126 = scalar_select %p123, %s124, %s125
    %p129 = pneg %p123
    %p130 = scmp.eq.s32.totalorder %s10, 1
    %p131 = por %p129, %p130
    %p132 = scmp.ne.s32.totalorder %s124, %s127
    %p133 = scmp.eq.s32.totalorder %s10, 0
    %p134 = por %p132, %p133
    %p135 = scmp.ne.s32.totalorder %s124, %s127
    %p136 = scmp.eq.s32.totalorder %s15, 1
    %p137 = por %p135, %p136
    %p138 = scmp.ne.s32.totalorder %s127, %s128
    %p139 = scmp.eq.s32.totalorder %s15, 0
    %p140 = por %p138, %p139
    %p141 = scmp.ne.s32.totalorder %s127, %s128
    %p142 = scmp.eq.s32.totalorder %s16, 1
    %p143 = por %p141, %p142
    %p145 = scmp.ne.s32.totalorder %s128, %s144
    %p146 = scmp.eq.s32.totalorder %s16, 0
    %p147 = por %p145, %p146
    %p148 = scmp.le.s32.totalorder 1, %s10
    %p149 = scmp.lt.s32.totalorder %s10, 3
    %p150 = pnand %p148, %p149
    %p151 = pneg %p150
    // Predicated region
    $region9: #{attention_tie_forward.4} parent=5 // pred_check
      _
    $region10: #{attention_tie_forward.4} parent=5 // pred_check_branch
      %153 = sbr.rel (%p150) target = $region12
    $region11: #{attention_tie_forward.4} parent=5 // pred_region
      %s154 = ssub.s32 %s10, 1
    $region12: #{attention_tie_forward.4} parent=5 // pred_fallthru
      _
    %p155 = scmp.lt.s32.totalorder %s10, 2
    // Predicated region
    $region13: #{attention_tie_forward.4} parent=5 // pred_check
      %p156 = pneg %p155
    $region14: #{attention_tie_forward.4} parent=5 // pred_check_branch
      %158 = sbr.rel (%p156) target = $region16
    $region15: #{attention_tie_forward.4} parent=5 // pred_region
      // Predicated region
      $region17: #{attention_tie_forward.4} parent=15 // pred_check
        %p159 = pneg %p30
      $region18: #{attention_tie_forward.4} parent=15 // pred_check_branch
        %161 = sbr.rel (%p159) target = $region20
      $region19: #{attention_tie_forward.4} parent=15 // pred_region
        %p162 = scmp.lt.s32.totalorder %s10, 1
        %s163 = scalar_select %p162, %s10, 1
        %s164 = smul.addr %s163, 2
        %s165 = smul.addr %s164, 8
        %s166 = scalar_lea.vmem %s0, %s165
      $region20: #{attention_tie_forward.4} parent=15 // pred_fallthru
        _
      // Predicated region
      $region21: #{attention_tie_forward.4} parent=15 // pred_check
        %p167 = pneg %p56
      $region22: #{attention_tie_forward.4} parent=15 // pred_check_branch
        %169 = sbr.rel (%p167) target = $region24
      $region23: #{attention_tie_forward.4} parent=15 // pred_region
        %p170 = scmp.lt.s32.totalorder %s10, 1
        %s171 = scalar_select %p170, %s10, 1
        %s172 = smul.addr %s171, 2
        %s173 = smul.addr %s172, 8
        %s174 = scalar_lea.vmem %s1, %s173
      $region24: #{attention_tie_forward.4} parent=15 // pred_fallthru
        _
      // Predicated region
      $region25: #{attention_tie_forward.4} parent=15 // pred_check
        %p175 = pneg %p82
      $region26: #{attention_tie_forward.4} parent=15 // pred_check_branch
        %177 = sbr.rel (%p175) target = $region28
      $region27: #{attention_tie_forward.4} parent=15 // pred_region
        %p178 = scmp.lt.s32.totalorder %s10, 1
        %s179 = scalar_select %p178, %s10, 1
        %s180 = smul.addr %s179, 2
        %s181 = smul.addr %s180, 8
        %s182 = scalar_lea.vmem %s2, %s181
      $region28: #{attention_tie_forward.4} parent=15 // pred_fallthru
        _
      // Predicated region
      $region29: #{attention_tie_forward.4} parent=15 // pred_check
        %p183 = pneg %p108
      $region30: #{attention_tie_forward.4} parent=15 // pred_check_branch
        %185 = sbr.rel (%p183) target = $region32
      $region31: #{attention_tie_forward.4} parent=15 // pred_region
        %p186 = scmp.lt.s32.totalorder %s10, 1
        %s187 = scalar_select %p186, %s10, 1
        %s188 = smul.addr %s187, 4
        %s189 = smul.addr %s188, 2
        %s190 = scalar_lea.vmem %s3, %s189
      $region32: #{attention_tie_forward.4} parent=15 // pred_fallthru
        _
    $region16: #{attention_tie_forward.4} parent=5 // pred_fallthru
      _
    %p191 = scmp.le.s32.totalorder 1, %s10
    %p192 = scmp.lt.s32.totalorder %s10, 3
    %p193 = pnand %p191, %p192
    %p194 = pneg %p193
    // Predicated region
    $region33: #{attention_tie_forward.4} parent=5 // pred_check
      _
    $region34: #{attention_tie_forward.4} parent=5 // pred_check_branch
      %196 = sbr.rel (%p193) target = $region36
    $region35: #{attention_tie_forward.4} parent=5 // pred_region
      %s197 = ssub.s32 %s10, 1
      %p198 = scmp.lt.s32.totalorder %s15, 1
      %s199 = scalar_select %p198, %s15, 1
      %s200 = smul.addr %s199, 2
      %s201 = smul.addr %s200, 8
      %s202 = scalar_lea.vmem %s0, %s201
      %p203 = pneg %p36
      %p204 = pneg %p33
      %p205 = scmp.lt.s32.totalorder %s15, 1
      %s206 = scalar_select %p205, %s15, 1
      %s207 = smul.addr %s206, 2
      %s208 = smul.addr %s207, 8
      %s209 = scalar_lea.vmem %s1, %s208
      %p210 = pneg %p62
      %p211 = pneg %p59
      %p212 = scmp.lt.s32.totalorder %s15, 1
      %s213 = scalar_select %p212, %s15, 1
      %s214 = smul.addr %s213, 2
      %s215 = smul.addr %s214, 8
      %s216 = scalar_lea.vmem %s2, %s215
      %p217 = pneg %p88
      %p218 = pneg %p85
      %p219 = scmp.lt.s32.totalorder %s15, 1
      %s220 = scalar_select %p219, %s15, 1
      %s221 = smul.addr %s220, 4
      %s222 = smul.addr %s221, 2
      %s223 = scalar_lea.vmem %s3, %s222
      %p224 = pneg %p114
      %p225 = pneg %p111
      %p226 = pneg %p140
      %p227 = pneg %p137
      %p228 = scmp.lt.s32.totalorder %s15, 1
      %s229 = scalar_select %p228, %s15, 1
      %s230 = smul.addr %s229, 2
      %s231 = smul.addr %s230, 8
      %s232 = scalar_lea.vmem %s4, %s231
      %p233 = scmp.lt.s32.totalorder %s15, 1
      %s234 = scalar_select %p233, %s15, 1
      %s235 = smul.addr %s234, 2
      %s236 = smul.addr %s235, 8
      %s237 = scalar_lea.vmem %s0, %s236
      %p238 = scmp.lt.s32.totalorder %s15, 1
      %s239 = scalar_select %p238, %s15, 1
      %s240 = smul.addr %s239, 2
      %s241 = smul.addr %s240, 8
      %s242 = scalar_lea.vmem %s1, %s241
      %p243 = scmp.lt.s32.totalorder %s15, 1
      %s244 = scalar_select %p243, %s15, 1
      %s245 = smul.addr %s244, 2
      %s246 = smul.addr %s245, 8
      %s247 = scalar_lea.vmem %s2, %s246
      %p248 = scmp.lt.s32.totalorder %s15, 1
      %s249 = scalar_select %p248, %s15, 1
      %s250 = smul.addr %s249, 4
      %s251 = smul.addr %s250, 2
      %s252 = scalar_lea.vmem %s3, %s251
      %p253 = scmp.lt.s32.totalorder %s15, 1
      %s254 = scalar_select %p253, %s15, 1
      %s255 = smul.addr %s254, 2
      %s256 = smul.addr %s255, 8
      %s257 = scalar_lea.vmem %s4, %s256
      %v261 = vld [vmem:[%s237] sm:$0xff]
      %v262 = vld [vmem:[%s237 + $0x8] sm:$0xff]
      %v263 = vld [vmem:[%s242] sm:$0xff]
      %v264 = vld [vmem:[%s242 + $0x8] sm:$0xff]
      %v265 = vld [vmem:[%s247] sm:$0xff]
      %v266 = vld [vmem:[%s247 + $0x8] sm:$0xff]
      %v267 = vld [vmem:[%s252] sm:$0x3]
      %v268 = vld [vmem:[%s252 + $0x2] sm:$0x3]
      %vm269 = vnez %v267
      %vm270 = vnez %v268
      %v271 = vpack.c.bf16 %v262, %v261
      %v272 = vpack.c.bf16 %v264, %v263
      %v273 = vpack.c.bf16 %v266, %v265
      %vm274 = vcmask 523264
      %v275 = vsel %vm274, %v263, 0.0
      %276 = vadd.xlane.f32.xlu0 %v275
      %v277 = vpop.xlane.xlu0 %276
      %v278 = vsel %vm274, %v264, 0.0
      %279 = vadd.xlane.f32.xlu0 %v278
      %v280 = vpop.xlane.xlu0 %279
      %v281 = vmul.f32 %v277, 0.015625
      %v282 = vmul.f32 %v280, 0.015625
      %v283 = vmul.f32 %v263, %v263
      %v284 = vmul.f32 %v264, %v264
      %v285 = vsel %vm274, %v283, 0.0
      %286 = vadd.xlane.f32.xlu0 %v285
      %v287 = vpop.xlane.xlu0 %286
      %v288 = vsel %vm274, %v284, 0.0
      %289 = vadd.xlane.f32.xlu0 %v288
      %v290 = vpop.xlane.xlu0 %289
      %v291 = vmul.f32 %v287, 0.015625
      %v292 = vmul.f32 %v290, 0.015625
      %v293 = vmul.f32 %v261, %v263
      %v294 = vmul.f32 %v262, %v264
      %v295 = vsel %vm274, %v293, 0.0
      %296 = vadd.xlane.f32.xlu0 %v295
      %v297 = vpop.xlane.xlu0 %296
      %v298 = vsel %vm274, %v294, 0.0
      %299 = vadd.xlane.f32.xlu0 %v298
      %v300 = vpop.xlane.xlu0 %299
      %v301 = vsel %vm274, %v261, 0.0
      %302 = vadd.xlane.f32.xlu0 %v301
      %v303 = vpop.xlane.xlu0 %302
      %v304 = vsel %vm274, %v262, 0.0
      %305 = vadd.xlane.f32.xlu0 %v304
      %v306 = vpop.xlane.xlu0 %305
      %v308 = vsel %vm274, 1.0, 0
      %v311 = vsel %vm274, %v265, 0
      %v314 = vsel %vm274, %v266, 0
      %316 = vmatprep.subr.mxu0 0.0
      %317 = vmatpush1.xpose.msra.mxu0 %v311
      %318 = vmatprep.subr.mxu0 0.0
      %319 = vmatpush1.xpose.msra.mxu0 %v314
      %320 = vmatprep.subr.mxu0 0.0
      %321 = vmatpush1.xpose.msra.mxu0 0.0
      %322 = vmatprep.subr.mxu0 0.0
      %323 = vmatpush1.xpose.msra.mxu0 0.0
      %324 = vmatprep.subr.mxu0 0.0
      %325 = vmatpush1.xpose.msra.mxu0 0.0
      %326 = vmatprep.subr.mxu0 0.0
      %327 = vmatpush1.xpose.msra.mxu0 0.0
      %328 = vmatprep.subr.mxu0 0.0
      %329 = vmatpush1.xpose.msra.mxu0 0.0
      %330 = vmatprep.subr.mxu0 0.0
      %331 = vmatpush1.xpose.msra.mxu0 0.0
      %332 = vmatprep.subr.mxu0 0.0
      %333 = vmatpush1.xpose.msra.mxu0 0.0
      %334 = vmatprep.subr.mxu0 0.0
      %335 = vmatpush1.xpose.msra.mxu0 0.0
      %336 = vmatprep.subr.mxu0 0.0
      %337 = vmatpush1.xpose.msra.mxu0 0.0
      %338 = vmatprep.subr.mxu0 0.0
      %339 = vmatpush1.xpose.msra.mxu0 0.0
      %340 = vmatprep.subr.mxu0 0.0
      %341 = vmatpush1.xpose.msra.mxu0 0.0
      %342 = vmatprep.subr.mxu0 0.0
      %343 = vmatpush1.xpose.msra.mxu0 0.0
      %344 = vmatprep.subr.mxu0 0.0
      %345 = vmatpush1.xpose.msra.mxu0 0.0
      %346 = vmatprep.subr.mxu0 0.0
      %347 = vmatpush1.xpose.msra.mxu0 0.0
      %348 = vmatprep.subr.mxu0 0.0
      %349 = vmatpush1.xpose.msra.mxu0 0.0
      %350 = vmatprep.subr.mxu0 0.0
      %351 = vmatpush1.xpose.msra.mxu0 0.0
      %352 = vmatprep.subr.mxu0 0.0
      %353 = vmatpush1.xpose.msra.mxu0 0.0
      %354 = vmatprep.subr.mxu0 0.0
      %355 = vmatpush1.xpose.msra.mxu0 0.0
      %356 = vmatprep.subr.mxu0 0.0
      %357 = vmatpush1.xpose.msra.mxu0 0.0
      %358 = vmatprep.subr.mxu0 0.0
      %359 = vmatpush1.xpose.msra.mxu0 0.0
      %360 = vmatprep.subr.mxu0 0.0
      %361 = vmatpush1.xpose.msra.mxu0 0.0
      %362 = vmatprep.subr.mxu0 0.0
      %363 = vmatpush1.xpose.msra.mxu0 0.0
      %364 = vmatprep.subr.mxu0 0.0
      %365 = vmatpush1.xpose.msra.mxu0 0.0
      %366 = vmatprep.subr.mxu0 0.0
      %367 = vmatpush1.xpose.msra.mxu0 0.0
      %368 = vmatprep.subr.mxu0 0.0
      %369 = vmatpush1.xpose.msra.mxu0 0.0
      %370 = vmatprep.subr.mxu0 0.0
      %371 = vmatpush1.xpose.msra.mxu0 0.0
      %372 = vmatprep.subr.mxu0 0.0
      %373 = vmatpush1.xpose.msra.mxu0 0.0
      %374 = vmatprep.subr.mxu0 0.0
      %375 = vmatpush1.xpose.msra.mxu0 0.0
      %376 = vmatprep.subr.mxu0 0.0
      %377 = vmatpush1.xpose.msra.mxu0 0.0
      %378 = vmatprep.subr.mxu0 0.0
      %379 = vmatpush1.xpose.msra.mxu0 0.0
      %380 = vmatprep.mubr.f32.mxu0 0.0
      %381 = vmatmul.mubr.f32.gmra.mrb[0].mxu0 %v308
      %v382 = vpop.f32.mrb[0].mxu0
      %v383 = vadd.f32 0.0, %v382
      %v384 = vpop.f32.mrb[0].mxu0
      %385 = vdwg.mxu0
      %v386 = vmul.f32 %v383, 0.015625
      %v387 = vmul.f32 %v265, %v265
      %v388 = vmul.f32 %v266, %v266
      %v390 = vsel %vm274, %v387, 0
      %v393 = vsel %vm274, %v388, 0
      %395 = vmatprep.subr.mxu0 0.0
      %396 = vmatpush1.xpose.msra.mxu0 %v390
      %397 = vmatprep.subr.mxu0 0.0
      %398 = vmatpush1.xpose.msra.mxu0 %v393
      %399 = vmatprep.subr.mxu0 0.0
      %400 = vmatpush1.xpose.msra.mxu0 0.0
      %401 = vmatprep.subr.mxu0 0.0
      %402 = vmatpush1.xpose.msra.mxu0 0.0
      %403 = vmatprep.subr.mxu0 0.0
      %404 = vmatpush1.xpose.msra.mxu0 0.0
      %405 = vmatprep.subr.mxu0 0.0
      %406 = vmatpush1.xpose.msra.mxu0 0.0
      %407 = vmatprep.subr.mxu0 0.0
      %408 = vmatpush1.xpose.msra.mxu0 0.0
      %409 = vmatprep.subr.mxu0 0.0
      %410 = vmatpush1.xpose.msra.mxu0 0.0
      %411 = vmatprep.subr.mxu0 0.0
      %412 = vmatpush1.xpose.msra.mxu0 0.0
      %413 = vmatprep.subr.mxu0 0.0
      %414 = vmatpush1.xpose.msra.mxu0 0.0
      %415 = vmatprep.subr.mxu0 0.0
      %416 = vmatpush1.xpose.msra.mxu0 0.0
      %417 = vmatprep.subr.mxu0 0.0
      %418 = vmatpush1.xpose.msra.mxu0 0.0
      %419 = vmatprep.subr.mxu0 0.0
      %420 = vmatpush1.xpose.msra.mxu0 0.0
      %421 = vmatprep.subr.mxu0 0.0
      %422 = vmatpush1.xpose.msra.mxu0 0.0
      %423 = vmatprep.subr.mxu0 0.0
      %424 = vmatpush1.xpose.msra.mxu0 0.0
      %425 = vmatprep.subr.mxu0 0.0
      %426 = vmatpush1.xpose.msra.mxu0 0.0
      %427 = vmatprep.subr.mxu0 0.0
      %428 = vmatpush1.xpose.msra.mxu0 0.0
      %429 = vmatprep.subr.mxu0 0.0
      %430 = vmatpush1.xpose.msra.mxu0 0.0
      %431 = vmatprep.subr.mxu0 0.0
      %432 = vmatpush1.xpose.msra.mxu0 0.0
      %433 = vmatprep.subr.mxu0 0.0
      %434 = vmatpush1.xpose.msra.mxu0 0.0
      %435 = vmatprep.subr.mxu0 0.0
      %436 = vmatpush1.xpose.msra.mxu0 0.0
      %437 = vmatprep.subr.mxu0 0.0
      %438 = vmatpush1.xpose.msra.mxu0 0.0
      %439 = vmatprep.subr.mxu0 0.0
      %440 = vmatpush1.xpose.msra.mxu0 0.0
      %441 = vmatprep.subr.mxu0 0.0
      %442 = vmatpush1.xpose.msra.mxu0 0.0
      %443 = vmatprep.subr.mxu0 0.0
      %444 = vmatpush1.xpose.msra.mxu0 0.0
      %445 = vmatprep.subr.mxu0 0.0
      %446 = vmatpush1.xpose.msra.mxu0 0.0
      %447 = vmatprep.subr.mxu0 0.0
      %448 = vmatpush1.xpose.msra.mxu0 0.0
      %449 = vmatprep.subr.mxu0 0.0
      %450 = vmatpush1.xpose.msra.mxu0 0.0
      %451 = vmatprep.subr.mxu0 0.0
      %452 = vmatpush1.xpose.msra.mxu0 0.0
      %453 = vmatprep.subr.mxu0 0.0
      %454 = vmatpush1.xpose.msra.mxu0 0.0
      %455 = vmatprep.subr.mxu0 0.0
      %456 = vmatpush1.xpose.msra.mxu0 0.0
      %457 = vmatprep.subr.mxu0 0.0
      %458 = vmatpush1.xpose.msra.mxu0 0.0
      %459 = vmatprep.mubr.f32.mxu0 0.0
      %460 = vmatmul.mubr.f32.gmra.mrb[0].mxu0 %v308
      %v461 = vpop.f32.mrb[0].mxu0
      %v462 = vadd.f32 0.0, %v461
      %v463 = vpop.f32.mrb[0].mxu0
      %464 = vdwg.mxu0
      %v465 = vmul.f32 %v462, 0.015625
      %v466 = vlaneseq
      %v467 = vshrl.u32 %v466, 7
      %v468 = vsub.s32 0, %v467
      %v469 = vrot.slane %v386, %v468
      %v470 = vadd.f32 %v281, %v469
      %v471 = vadd.f32 %v282, %v469
      %v473 = vsel %vm274, %v272, 0
      %v476 = vsel %vm274, %v273, 0
      %478 = vmatprep.subr.bf16.mxu0 0
      %479 = vmatpush1.bf16.xpose.msra.mxu0 %v476
      %480 = vmatprep.subr.bf16.mxu0 0
      %481 = vmatpush1.bf16.xpose.msra.mxu0 0
      %482 = vmatprep.subr.bf16.mxu0 0
      %483 = vmatpush1.bf16.xpose.msra.mxu0 0
      %484 = vmatprep.subr.bf16.mxu0 0
      %485 = vmatpush1.bf16.xpose.msra.mxu0 0
      %486 = vmatprep.subr.bf16.mxu0 0
      %487 = vmatpush1.bf16.xpose.msra.mxu0 0
      %488 = vmatprep.subr.bf16.mxu0 0
      %489 = vmatpush1.bf16.xpose.msra.mxu0 0
      %490 = vmatprep.subr.bf16.mxu0 0
      %491 = vmatpush1.bf16.xpose.msra.mxu0 0
      %492 = vmatprep.subr.bf16.mxu0 0
      %493 = vmatpush1.bf16.xpose.msra.mxu0 0
      %494 = vmatprep.subr.bf16.mxu0 0
      %495 = vmatpush1.bf16.xpose.msra.mxu0 0
      %496 = vmatprep.subr.bf16.mxu0 0
      %497 = vmatpush1.bf16.xpose.msra.mxu0 0
      %498 = vmatprep.subr.bf16.mxu0 0
      %499 = vmatpush1.bf16.xpose.msra.mxu0 0
      %500 = vmatprep.subr.bf16.mxu0 0
      %501 = vmatpush1.bf16.xpose.msra.mxu0 0
      %502 = vmatprep.subr.bf16.mxu0 0
      %503 = vmatpush1.bf16.xpose.msra.mxu0 0
      %504 = vmatprep.subr.bf16.mxu0 0
      %505 = vmatpush1.bf16.xpose.msra.mxu0 0
      %506 = vmatprep.subr.bf16.mxu0 0
      %507 = vmatpush1.bf16.xpose.msra.mxu0 0
      %508 = vmatprep.subr.bf16.mxu0 0
      %509 = vmatpush1.bf16.xpose.msra.mxu0 0
      %510 = vmatprep.mubr.bf16.mxu0 0
      %511 = vmatmul.mubr.bf16.gmra.mrb[0].mxu0 %v473
      %v512 = vpop.f32.mrb[0].mxu0
      %v513 = vadd.f32 0.0, %v512
      %v514 = vpop.f32.mrb[0].mxu0
      %v515 = vpop.f32.mrb[0].mxu0
      %v516 = vadd.f32 0.0, %v515
      %v517 = vpop.f32.mrb[0].mxu0
      %518 = vdwg.mxu0
      %v519 = vmul.f32 %v513, 0.015625
      %v520 = vmul.f32 %v516, 0.015625
      %v521 = vmul.f32 %v519, 2.0
      %v522 = vmul.f32 %v520, 2.0
      %v523 = vadd.f32 %v291, %v521
      %v524 = vadd.f32 %v292, %v522
      %v525 = vlaneseq
      %v526 = vshrl.u32 %v525, 7
      %v527 = vsub.s32 0, %v526
      %v528 = vrot.slane %v465, %v527
      %v529 = vadd.f32 %v523, %v528
      %v530 = vadd.f32 %v524, %v528
      %v531 = vmul.f32 %v470, %v470
      %v532 = vmul.f32 %v471, %v471
      %v533 = vsub.f32 %v529, %v531
      %v534 = vsub.f32 %v530, %v532
      %v535 = vmax.f32 %v533, 0.0
      %v536 = vmax.f32 %v534, 0.0
      %v537 = vadd.f32 %v535, 1e-05
      %v538 = vadd.f32 %v536, 1e-05
      %v539 = vrsqrt.pop %v537
      %v540 = vrsqrt.pop %v538
      %v542 = vsel %vm274, %v271, 0
      %544 = vmatprep.subr.bf16.mxu0 0
      %545 = vmatpush1.bf16.xpose.msra.mxu0 %v476
      %546 = vmatprep.subr.bf16.mxu0 0
      %547 = vmatpush1.bf16.xpose.msra.mxu0 0
      %548 = vmatprep.subr.bf16.mxu0 0
      %549 = vmatpush1.bf16.xpose.msra.mxu0 0
      %550 = vmatprep.subr.bf16.mxu0 0
      %551 = vmatpush1.bf16.xpose.msra.mxu0 0
      %552 = vmatprep.subr.bf16.mxu0 0
      %553 = vmatpush1.bf16.xpose.msra.mxu0 0
      %554 = vmatprep.subr.bf16.mxu0 0
      %555 = vmatpush1.bf16.xpose.msra.mxu0 0
      %556 = vmatprep.subr.bf16.mxu0 0
      %557 = vmatpush1.bf16.xpose.msra.mxu0 0
      %558 = vmatprep.subr.bf16.mxu0 0
      %559 = vmatpush1.bf16.xpose.msra.mxu0 0
      %560 = vmatprep.subr.bf16.mxu0 0
      %561 = vmatpush1.bf16.xpose.msra.mxu0 0
      %562 = vmatprep.subr.bf16.mxu0 0
      %563 = vmatpush1.bf16.xpose.msra.mxu0 0
      %564 = vmatprep.subr.bf16.mxu0 0
      %565 = vmatpush1.bf16.xpose.msra.mxu0 0
      %566 = vmatprep.subr.bf16.mxu0 0
      %567 = vmatpush1.bf16.xpose.msra.mxu0 0
      %568 = vmatprep.subr.bf16.mxu0 0
      %569 = vmatpush1.bf16.xpose.msra.mxu0 0
      %570 = vmatprep.subr.bf16.mxu0 0
      %571 = vmatpush1.bf16.xpose.msra.mxu0 0
      %572 = vmatprep.subr.bf16.mxu0 0
      %573 = vmatpush1.bf16.xpose.msra.mxu0 0
      %574 = vmatprep.subr.bf16.mxu0 0
      %575 = vmatpush1.bf16.xpose.msra.mxu0 0
      %576 = vmatprep.mubr.bf16.mxu0 0
      %577 = vmatmul.mubr.bf16.gmra.mrb[0].mxu0 %v542
      %v578 = vpop.f32.mrb[0].mxu0
      %v579 = vadd.f32 %v297, %v578
      %v580 = vpop.f32.mrb[0].mxu0
      %v581 = vpop.f32.mrb[0].mxu0
      %v582 = vadd.f32 %v300, %v581
      %v583 = vpop.f32.mrb[0].mxu0
      %584 = vdwg.mxu0
      %v585 = vmul.f32 %v303, %v470
      %v586 = vmul.f32 %v306, %v471
      %v587 = vsub.f32 %v579, %v585
      %v588 = vsub.f32 %v582, %v586
      %v589 = vmul.f32 %v539, 0.125
      %v590 = vmul.f32 %v540, 0.125
      %v591 = vmul.f32 %v587, %v589
      %v592 = vmul.f32 %v588, %v590
      %v593 = vsel %vm269, 16843009, 0
      %v594 = vsel %vm270, 16843009, 0
      %v595 = vunpack.c.0.s8 %v593
      %v596 = vunpack.c.0.s8 %v594
      %vm597 = vcmp.ne.s32.totalorder %v595, 0
      %vm598 = vcmp.ne.s32.totalorder %v596, 0
      %v599 = vsel %vm597, -inf, %v591
      %v600 = vsel %vm598, -inf, %v592
      %vm601 = vcmask 130048
      %v602 = vsel %vm601, %v599, -inf
      %603 = vmax.xlane.f32.xlu0 %v602
      %v604 = vpop.xlane.xlu0 %603
      %v605 = vsel %vm601, %v600, -inf
      %606 = vmax.xlane.f32.xlu0 %v605
      %v607 = vpop.xlane.xlu0 %606
      %v608 = vsub.f32 %v599, %v604
      %v609 = vsub.f32 %v600, %v607
      %v610 = vmul.f32 %v608, 1.442695
      %v611 = vpow.pop %v610
      %v612 = vmul.f32 %v609, 1.442695
      %v613 = vpow.pop %v612
      %v614 = vsel %vm601, %v611, 0.0
      %615 = vadd.xlane.f32.xlu0 %v614
      %v616 = vpop.xlane.xlu0 %615
      %v617 = vsel %vm601, %v613, 0.0
      %618 = vadd.xlane.f32.xlu0 %v617
      %v619 = vpop.xlane.xlu0 %618
      %v620 = vrcp.pop %v616
      %v621 = vmul.f32 1.0, %v620
      %v622 = vrcp.pop %v619
      %v623 = vmul.f32 1.0, %v622
      %v624 = vmul.f32 %v611, %v621
      %v625 = vmul.f32 %v613, %v623
      %v626 = vmul.f32 %v624, %v539
      %v627 = vmul.f32 %v625, %v540
      %v628 = vpack.c.bf16 %v627, %v626
      %v630 = vsel %vm601, %v628, 0
      %632 = vmatprep.subr.bf16.mxu0 0
      %633 = vmatpush1.bf16.msra.mxu0 %v273
      %634 = vmatprep.subr.bf16.mxu0 0
      %635 = vmatpush1.bf16.msra.mxu0 0
      %636 = vmatprep.subr.bf16.mxu0 0
      %637 = vmatpush1.bf16.msra.mxu0 0
      %638 = vmatprep.subr.bf16.mxu0 0
      %639 = vmatpush1.bf16.msra.mxu0 0
      %640 = vmatprep.subr.bf16.mxu0 0
      %641 = vmatpush1.bf16.msra.mxu0 0
      %642 = vmatprep.subr.bf16.mxu0 0
      %643 = vmatpush1.bf16.msra.mxu0 0
      %644 = vmatprep.subr.bf16.mxu0 0
      %645 = vmatpush1.bf16.msra.mxu0 0
      %646 = vmatprep.subr.bf16.mxu0 0
      %647 = vmatpush1.bf16.msra.mxu0 0
      %648 = vmatprep.subr.bf16.mxu0 0
      %649 = vmatpush1.bf16.msra.mxu0 0
      %650 = vmatprep.subr.bf16.mxu0 0
      %651 = vmatpush1.bf16.msra.mxu0 0
      %652 = vmatprep.subr.bf16.mxu0 0
      %653 = vmatpush1.bf16.msra.mxu0 0
      %654 = vmatprep.subr.bf16.mxu0 0
      %655 = vmatpush1.bf16.msra.mxu0 0
      %656 = vmatprep.subr.bf16.mxu0 0
      %657 = vmatpush1.bf16.msra.mxu0 0
      %658 = vmatprep.subr.bf16.mxu0 0
      %659 = vmatpush1.bf16.msra.mxu0 0
      %660 = vmatprep.subr.bf16.mxu0 0
      %661 = vmatpush1.bf16.msra.mxu0 0
      %662 = vmatprep.subr.bf16.mxu0 0
      %663 = vmatpush1.bf16.msra.mxu0 0
      %664 = vmatprep.mubr.bf16.mxu0 0
      %665 = vmatmul.mubr.bf16.gmra.mrb[0].mxu0 %v630
      %v666 = vpop.f32.mrb[0].mxu0
      %v667 = vadd.f32 0.0, %v666
      %v668 = vpop.f32.mrb[0].mxu0
      %v669 = vpop.f32.mrb[0].mxu0
      %v670 = vadd.f32 0.0, %v669
      %v671 = vpop.f32.mrb[0].mxu0
      %672 = vdwg.mxu0
      %v673 = vmul.f32 %v470, %v626
      %v674 = vmul.f32 %v471, %v627
      %v675 = vsel %vm601, %v673, 0.0
      %676 = vadd.xlane.f32.xlu0 %v675
      %v677 = vpop.xlane.xlu0 %676
      %v678 = vsel %vm601, %v674, 0.0
      %679 = vadd.xlane.f32.xlu0 %v678
      %v680 = vpop.xlane.xlu0 %679
      %v681 = vsub.f32 %v667, %v677
      %v682 = vsub.f32 %v670, %v680
      %v683 = vsel %vm601, %v626, 0.0
      %684 = vadd.xlane.f32.xlu0 %v683
      %v685 = vpop.xlane.xlu0 %684
      %v686 = vsel %vm601, %v627, 0.0
      %687 = vadd.xlane.f32.xlu0 %v686
      %v688 = vpop.xlane.xlu0 %687
      %v689 = vmul.f32 %v685, %v263
      %v690 = vmul.f32 %v688, %v264
      %v691 = vadd.f32 %v681, %v689
      %v692 = vadd.f32 %v682, %v690
      %693 = vst.msk [vmem:[%s257] sm:$0xff] %vm274, %v691
      %694 = vst.msk [vmem:[%s257 + $0x8] sm:$0xff] %vm274, %v692
      %v695 = vld [vmem:[%s237] sm:$0xff]
      %v696 = vld [vmem:[%s237 + $0x8] sm:$0xff]
      %v697 = vld [vmem:[%s242] sm:$0xff]
      %v698 = vld [vmem:[%s242 + $0x8] sm:$0xff]
      %v699 = vld [vmem:[%s247] sm:$0xff]
      %v700 = vld [vmem:[%s247 + $0x8] sm:$0xff]
      %s701 = scalar_lea.vmem %s252, 4
      %v702 = vld [vmem:[%s701] sm:$0x3]
      %v703 = vld [vmem:[%s701 + $0x2] sm:$0x3]
      %vm704 = vnez %v702
      %vm705 = vnez %v703
      %v706 = vpack.c.bf16 %v696, %v695
      %v707 = vpack.c.bf16 %v698, %v697
      %v708 = vpack.c.bf16 %v700, %v699
      %711 = vrot.lane.b32.xlu0 %v697, 64
      %v712 = vpop.permute.xlu0 %711
      %713 = vrot.lane.b32.xlu0 %v698, 64
      %v714 = vpop.permute.xlu0 %713
      %v717 = vsel %vm274, %v712, 0.0
      %718 = vadd.xlane.f32.xlu0 %v717
      %v719 = vpop.xlane.xlu0 %718
      %v720 = vsel %vm274, %v714, 0.0
      %721 = vadd.xlane.f32.xlu0 %v720
      %v722 = vpop.xlane.xlu0 %721
      %v723 = vmul.f32 %v719, 0.015625
      %v724 = vmul.f32 %v722, 0.015625
      %v725 = vmul.f32 %v697, %v697
      %v726 = vmul.f32 %v698, %v698
      %729 = vrot.lane.b32.xlu0 %v725, 64
      %v730 = vpop.permute.xlu0 %729
      %731 = vrot.lane.b32.xlu0 %v726, 64
      %v732 = vpop.permute.xlu0 %731
      %v735 = vsel %vm274, %v730, 0.0
      %736 = vadd.xlane.f32.xlu0 %v735
      %v737 = vpop.xlane.xlu0 %736
      %v738 = vsel %vm274, %v732, 0.0
      %739 = vadd.xlane.f32.xlu0 %v738
      %v740 = vpop.xlane.xlu0 %739
      %v741 = vmul.f32 %v737, 0.015625
      %v742 = vmul.f32 %v740, 0.015625
      %v743 = vmul.f32 %v695, %v697
      %v744 = vmul.f32 %v696, %v698
      %747 = vrot.lane.b32.xlu0 %v743, 64
      %v748 = vpop.permute.xlu0 %747
      %749 = vrot.lane.b32.xlu0 %v744, 64
      %v750 = vpop.permute.xlu0 %749
      %v753 = vsel %vm274, %v748, 0.0
      %754 = vadd.xlane.f32.xlu0 %v753
      %v755 = vpop.xlane.xlu0 %754
      %v756 = vsel %vm274, %v750, 0.0
      %757 = vadd.xlane.f32.xlu0 %v756
      %v758 = vpop.xlane.xlu0 %757
      %761 = vrot.lane.b32.xlu0 %v695, 64
      %v762 = vpop.permute.xlu0 %761
      %763 = vrot.lane.b32.xlu0 %v696, 64
      %v764 = vpop.permute.xlu0 %763
      %v767 = vsel %vm274, %v762, 0.0
      %768 = vadd.xlane.f32.xlu0 %v767
      %v769 = vpop.xlane.xlu0 %768
      %v770 = vsel %vm274, %v764, 0.0
      %771 = vadd.xlane.f32.xlu0 %v770
      %v772 = vpop.xlane.xlu0 %771
      %775 = vrot.lane.b32.xlu0 %v699, 64
      %v776 = vpop.permute.xlu0 %775
      %777 = vrot.lane.b32.xlu0 %v700, 64
      %v778 = vpop.permute.xlu0 %777
      %v779 = vsel %vm274, %v776, 0
      %v781 = vsel %vm274, %v778, 0
      %783 = vmatprep.subr.mxu0 0.0
      %784 = vmatpush1.xpose.msra.mxu0 %v779
      %785 = vmatprep.subr.mxu0 0.0
      %786 = vmatpush1.xpose.msra.mxu0 %v781
      %787 = vmatprep.subr.mxu0 0.0
      %788 = vmatpush1.xpose.msra.mxu0 0.0
      %789 = vmatprep.subr.mxu0 0.0
      %790 = vmatpush1.xpose.msra.mxu0 0.0
      %791 = vmatprep.subr.mxu0 0.0
      %792 = vmatpush1.xpose.msra.mxu0 0.0
      %793 = vmatprep.subr.mxu0 0.0
      %794 = vmatpush1.xpose.msra.mxu0 0.0
      %795 = vmatprep.subr.mxu0 0.0
      %796 = vmatpush1.xpose.msra.mxu0 0.0
      %797 = vmatprep.subr.mxu0 0.0
      %798 = vmatpush1.xpose.msra.mxu0 0.0
      %799 = vmatprep.subr.mxu0 0.0
      %800 = vmatpush1.xpose.msra.mxu0 0.0
      %801 = vmatprep.subr.mxu0 0.0
      %802 = vmatpush1.xpose.msra.mxu0 0.0
      %803 = vmatprep.subr.mxu0 0.0
      %804 = vmatpush1.xpose.msra.mxu0 0.0
      %805 = vmatprep.subr.mxu0 0.0
      %806 = vmatpush1.xpose.msra.mxu0 0.0
      %807 = vmatprep.subr.mxu0 0.0
      %808 = vmatpush1.xpose.msra.mxu0 0.0
      %809 = vmatprep.subr.mxu0 0.0
      %810 = vmatpush1.xpose.msra.mxu0 0.0
      %811 = vmatprep.subr.mxu0 0.0
      %812 = vmatpush1.xpose.msra.mxu0 0.0
      %813 = vmatprep.subr.mxu0 0.0
      %814 = vmatpush1.xpose.msra.mxu0 0.0
      %815 = vmatprep.subr.mxu0 0.0
      %816 = vmatpush1.xpose.msra.mxu0 0.0
      %817 = vmatprep.subr.mxu0 0.0
      %818 = vmatpush1.xpose.msra.mxu0 0.0
      %819 = vmatprep.subr.mxu0 0.0
      %820 = vmatpush1.xpose.msra.mxu0 0.0
      %821 = vmatprep.subr.mxu0 0.0
      %822 = vmatpush1.xpose.msra.mxu0 0.0
      %823 = vmatprep.subr.mxu0 0.0
      %824 = vmatpush1.xpose.msra.mxu0 0.0
      %825 = vmatprep.subr.mxu0 0.0
      %826 = vmatpush1.xpose.msra.mxu0 0.0
      %827 = vmatprep.subr.mxu0 0.0
      %828 = vmatpush1.xpose.msra.mxu0 0.0
      %829 = vmatprep.subr.mxu0 0.0
      %830 = vmatpush1.xpose.msra.mxu0 0.0
      %831 = vmatprep.subr.mxu0 0.0
      %832 = vmatpush1.xpose.msra.mxu0 0.0
      %833 = vmatprep.subr.mxu0 0.0
      %834 = vmatpush1.xpose.msra.mxu0 0.0
      %835 = vmatprep.subr.mxu0 0.0
      %836 = vmatpush1.xpose.msra.mxu0 0.0
      %837 = vmatprep.subr.mxu0 0.0
      %838 = vmatpush1.xpose.msra.mxu0 0.0
      %839 = vmatprep.subr.mxu0 0.0
      %840 = vmatpush1.xpose.msra.mxu0 0.0
      %841 = vmatprep.subr.mxu0 0.0
      %842 = vmatpush1.xpose.msra.mxu0 0.0
      %843 = vmatprep.subr.mxu0 0.0
      %844 = vmatpush1.xpose.msra.mxu0 0.0
      %845 = vmatprep.subr.mxu0 0.0
      %846 = vmatpush1.xpose.msra.mxu0 0.0
      %847 = vmatprep.mubr.f32.mxu0 0.0
      %848 = vmatmul.mubr.f32.gmra.mrb[0].mxu0 %v308
      %v849 = vpop.f32.mrb[0].mxu0
      %v850 = vadd.f32 0.0, %v849
      %v851 = vpop.f32.mrb[0].mxu0
      %852 = vdwg.mxu0
      %v853 = vmul.f32 %v850, 0.015625
      %v854 = vmul.f32 %v699, %v699
      %v855 = vmul.f32 %v700, %v700
      %858 = vrot.lane.b32.xlu0 %v854, 64
      %v859 = vpop.permute.xlu0 %858
      %860 = vrot.lane.b32.xlu0 %v855, 64
      %v861 = vpop.permute.xlu0 %860
      %v862 = vsel %vm274, %v859, 0
      %v864 = vsel %vm274, %v861, 0
      %866 = vmatprep.subr.mxu0 0.0
      %867 = vmatpush1.xpose.msra.mxu0 %v862
      %868 = vmatprep.subr.mxu0 0.0
      %869 = vmatpush1.xpose.msra.mxu0 %v864
      %870 = vmatprep.subr.mxu0 0.0
      %871 = vmatpush1.xpose.msra.mxu0 0.0
      %872 = vmatprep.subr.mxu0 0.0
      %873 = vmatpush1.xpose.msra.mxu0 0.0
      %874 = vmatprep.subr.mxu0 0.0
      %875 = vmatpush1.xpose.msra.mxu0 0.0
      %876 = vmatprep.subr.mxu0 0.0
      %877 = vmatpush1.xpose.msra.mxu0 0.0
      %878 = vmatprep.subr.mxu0 0.0
      %879 = vmatpush1.xpose.msra.mxu0 0.0
      %880 = vmatprep.subr.mxu0 0.0
      %881 = vmatpush1.xpose.msra.mxu0 0.0
      %882 = vmatprep.subr.mxu0 0.0
      %883 = vmatpush1.xpose.msra.mxu0 0.0
      %884 = vmatprep.subr.mxu0 0.0
      %885 = vmatpush1.xpose.msra.mxu0 0.0
      %886 = vmatprep.subr.mxu0 0.0
      %887 = vmatpush1.xpose.msra.mxu0 0.0
      %888 = vmatprep.subr.mxu0 0.0
      %889 = vmatpush1.xpose.msra.mxu0 0.0
      %890 = vmatprep.subr.mxu0 0.0
      %891 = vmatpush1.xpose.msra.mxu0 0.0
      %892 = vmatprep.subr.mxu0 0.0
      %893 = vmatpush1.xpose.msra.mxu0 0.0
      %894 = vmatprep.subr.mxu0 0.0
      %895 = vmatpush1.xpose.msra.mxu0 0.0
      %896 = vmatprep.subr.mxu0 0.0
      %897 = vmatpush1.xpose.msra.mxu0 0.0
      %898 = vmatprep.subr.mxu0 0.0
      %899 = vmatpush1.xpose.msra.mxu0 0.0
      %900 = vmatprep.subr.mxu0 0.0
      %901 = vmatpush1.xpose.msra.mxu0 0.0
      %902 = vmatprep.subr.mxu0 0.0
      %903 = vmatpush1.xpose.msra.mxu0 0.0
      %904 = vmatprep.subr.mxu0 0.0
      %905 = vmatpush1.xpose.msra.mxu0 0.0
      %906 = vmatprep.subr.mxu0 0.0
      %907 = vmatpush1.xpose.msra.mxu0 0.0
      %908 = vmatprep.subr.mxu0 0.0
      %909 = vmatpush1.xpose.msra.mxu0 0.0
      %910 = vmatprep.subr.mxu0 0.0
      %911 = vmatpush1.xpose.msra.mxu0 0.0
      %912 = vmatprep.subr.mxu0 0.0
      %913 = vmatpush1.xpose.msra.mxu0 0.0
      %914 = vmatprep.subr.mxu0 0.0
      %915 = vmatpush1.xpose.msra.mxu0 0.0
      %916 = vmatprep.subr.mxu0 0.0
      %917 = vmatpush1.xpose.msra.mxu0 0.0
      %918 = vmatprep.subr.mxu0 0.0
      %919 = vmatpush1.xpose.msra.mxu0 0.0
      %920 = vmatprep.subr.mxu0 0.0
      %921 = vmatpush1.xpose.msra.mxu0 0.0
      %922 = vmatprep.subr.mxu0 0.0
      %923 = vmatpush1.xpose.msra.mxu0 0.0
      %924 = vmatprep.subr.mxu0 0.0
      %925 = vmatpush1.xpose.msra.mxu0 0.0
      %926 = vmatprep.subr.mxu0 0.0
      %927 = vmatpush1.xpose.msra.mxu0 0.0
      %928 = vmatprep.subr.mxu0 0.0
      %929 = vmatpush1.xpose.msra.mxu0 0.0
      %930 = vmatprep.mubr.f32.mxu0 0.0
      %931 = vmatmul.mubr.f32.gmra.mrb[0].mxu0 %v308
      %v932 = vpop.f32.mrb[0].mxu0
      %v933 = vadd.f32 0.0, %v932
      %v934 = vpop.f32.mrb[0].mxu0
      %935 = vdwg.mxu0
      %v936 = vmul.f32 %v933, 0.015625
      %v937 = vlaneseq
      %v938 = vshrl.u32 %v937, 7
      %v939 = vsub.s32 0, %v938
      %v940 = vrot.slane %v853, %v939
      %v941 = vadd.f32 %v723, %v940
      %v942 = vadd.f32 %v724, %v940
      %944 = vrot.lane.b32.xlu0 %v707, 64
      %v945 = vpop.permute.xlu0 %944
      %947 = vrot.lane.b32.xlu0 %v708, 64
      %v948 = vpop.permute.xlu0 %947
      %v950 = vsel %vm274, %v945, 0
      %v953 = vsel %vm274, %v948, 0
      %955 = vmatprep.subr.bf16.mxu0 0
      %956 = vmatpush1.bf16.xpose.msra.mxu0 %v953
      %957 = vmatprep.subr.bf16.mxu0 0
      %958 = vmatpush1.bf16.xpose.msra.mxu0 0
      %959 = vmatprep.subr.bf16.mxu0 0
      %960 = vmatpush1.bf16.xpose.msra.mxu0 0
      %961 = vmatprep.subr.bf16.mxu0 0
      %962 = vmatpush1.bf16.xpose.msra.mxu0 0
      %963 = vmatprep.subr.bf16.mxu0 0
      %964 = vmatpush1.bf16.xpose.msra.mxu0 0
      %965 = vmatprep.subr.bf16.mxu0 0
      %966 = vmatpush1.bf16.xpose.msra.mxu0 0
      %967 = vmatprep.subr.bf16.mxu0 0
      %968 = vmatpush1.bf16.xpose.msra.mxu0 0
      %969 = vmatprep.subr.bf16.mxu0 0
      %970 = vmatpush1.bf16.xpose.msra.mxu0 0
      %971 = vmatprep.subr.bf16.mxu0 0
      %972 = vmatpush1.bf16.xpose.msra.mxu0 0
      %973 = vmatprep.subr.bf16.mxu0 0
      %974 = vmatpush1.bf16.xpose.msra.mxu0 0
      %975 = vmatprep.subr.bf16.mxu0 0
      %976 = vmatpush1.bf16.xpose.msra.mxu0 0
      %977 = vmatprep.subr.bf16.mxu0 0
      %978 = vmatpush1.bf16.xpose.msra.mxu0 0
      %979 = vmatprep.subr.bf16.mxu0 0
      %980 = vmatpush1.bf16.xpose.msra.mxu0 0
      %981 = vmatprep.subr.bf16.mxu0 0
      %982 = vmatpush1.bf16.xpose.msra.mxu0 0
      %983 = vmatprep.subr.bf16.mxu0 0
      %984 = vmatpush1.bf16.xpose.msra.mxu0 0
      %985 = vmatprep.subr.bf16.mxu0 0
      %986 = vmatpush1.bf16.xpose.msra.mxu0 0
      %987 = vmatprep.mubr.bf16.mxu0 0
      %988 = vmatmul.mubr.bf16.gmra.mrb[0].mxu0 %v950
      %v989 = vpop.f32.mrb[0].mxu0
      %v990 = vadd.f32 0.0, %v989
      %v991 = vpop.f32.mrb[0].mxu0
      %v992 = vpop.f32.mrb[0].mxu0
      %v993 = vadd.f32 0.0, %v992
      %v994 = vpop.f32.mrb[0].mxu0
      %995 = vdwg.mxu0
      %v996 = vmul.f32 %v990, 0.015625
      %v997 = vmul.f32 %v993, 0.015625
      %v998 = vmul.f32 %v996, 2.0
      %v999 = vmul.f32 %v997, 2.0
      %v1000 = vadd.f32 %v741, %v998
      %v1001 = vadd.f32 %v742, %v999
      %v1002 = vlaneseq
      %v1003 = vshrl.u32 %v1002, 7
      %v1004 = vsub.s32 0, %v1003
      %v1005 = vrot.slane %v936, %v1004
      %v1006 = vadd.f32 %v1000, %v1005
      %v1007 = vadd.f32 %v1001, %v1005
      %v1008 = vmul.f32 %v941, %v941
      %v1009 = vmul.f32 %v942, %v942
      %v1010 = vsub.f32 %v1006, %v1008
      %v1011 = vsub.f32 %v1007, %v1009
      %v1012 = vmax.f32 %v1010, 0.0
      %v1013 = vmax.f32 %v1011, 0.0
      %v1014 = vadd.f32 %v1012, 1e-05
      %v1015 = vadd.f32 %v1013, 1e-05
      %v1016 = vrsqrt.pop %v1014
      %v1017 = vrsqrt.pop %v1015
      %1019 = vrot.lane.b32.xlu0 %v706, 64
      %v1020 = vpop.permute.xlu0 %1019
      %v1022 = vsel %vm274, %v1020, 0
      %1024 = vmatprep.subr.bf16.mxu0 0
      %1025 = vmatpush1.bf16.xpose.msra.mxu0 %v953
      %1026 = vmatprep.subr.bf16.mxu0 0
      %1027 = vmatpush1.bf16.xpose.msra.mxu0 0
      %1028 = vmatprep.subr.bf16.mxu0 0
      %1029 = vmatpush1.bf16.xpose.msra.mxu0 0
      %1030 = vmatprep.subr.bf16.mxu0 0
      %1031 = vmatpush1.bf16.xpose.msra.mxu0 0
      %1032 = vmatprep.subr.bf16.mxu0 0
      %1033 = vmatpush1.bf16.xpose.msra.mxu0 0
      %1034 = vmatprep.subr.bf16.mxu0 0
      %1035 = vmatpush1.bf16.xpose.msra.mxu0 0
      %1036 = vmatprep.subr.bf16.mxu0 0
      %1037 = vmatpush1.bf16.xpose.msra.mxu0 0
      %1038 = vmatprep.subr.bf16.mxu0 0
      %1039 = vmatpush1.bf16.xpose.msra.mxu0 0
      %1040 = vmatprep.subr.bf16.mxu0 0
      %1041 = vmatpush1.bf16.xpose.msra.mxu0 0
      %1042 = vmatprep.subr.bf16.mxu0 0
      %1043 = vmatpush1.bf16.xpose.msra.mxu0 0
      %1044 = vmatprep.subr.bf16.mxu0 0
      %1045 = vmatpush1.bf16.xpose.msra.mxu0 0
      %1046 = vmatprep.subr.bf16.mxu0 0
      %1047 = vmatpush1.bf16.xpose.msra.mxu0 0
      %1048 = vmatprep.subr.bf16.mxu0 0
      %1049 = vmatpush1.bf16.xpose.msra.mxu0 0
      %1050 = vmatprep.subr.bf16.mxu0 0
      %1051 = vmatpush1.bf16.xpose.msra.mxu0 0
      %1052 = vmatprep.subr.bf16.mxu0 0
      %1053 = vmatpush1.bf16.xpose.msra.mxu0 0
      %1054 = vmatprep.subr.bf16.mxu0 0
      %1055 = vmatpush1.bf16.xpose.msra.mxu0 0
      %1056 = vmatprep.mubr.bf16.mxu0 0
      %1057 = vmatmul.mubr.bf16.gmra.mrb[0].mxu0 %v1022
      %v1058 = vpop.f32.mrb[0].mxu0
      %v1059 = vadd.f32 %v755, %v1058
      %v1060 = vpop.f32.mrb[0].mxu0
      %v1061 = vpop.f32.mrb[0].mxu0
      %v1062 = vadd.f32 %v758, %v1061
      %v1063 = vpop.f32.mrb[0].mxu0
      %1064 = vdwg.mxu0
      %v1065 = vmul.f32 %v769, %v941
      %v1066 = vmul.f32 %v772, %v942
      %v1067 = vsub.f32 %v1059, %v1065
      %v1068 = vsub.f32 %v1062, %v1066
      %v1069 = vmul.f32 %v1016, 0.125
      %v1070 = vmul.f32 %v1017, 0.125
      %v1071 = vmul.f32 %v1067, %v1069
      %v1072 = vmul.f32 %v1068, %v1070
      %v1073 = vsel %vm704, 16843009, 0
      %v1074 = vsel %vm705, 16843009, 0
      %v1075 = vunpack.c.0.s8 %v1073
      %v1076 = vunpack.c.0.s8 %v1074
      %vm1077 = vcmp.ne.s32.totalorder %v1075, 0
      %vm1078 = vcmp.ne.s32.totalorder %v1076, 0
      %v1079 = vsel %vm1077, -inf, %v1071
      %v1080 = vsel %vm1078, -inf, %v1072
      %v1081 = vsel %vm601, %v1079, -inf
      %1082 = vmax.xlane.f32.xlu0 %v1081
      %v1083 = vpop.xlane.xlu0 %1082
      %v1084 = vsel %vm601, %v1080, -inf
      %1085 = vmax.xlane.f32.xlu0 %v1084
      %v1086 = vpop.xlane.xlu0 %1085
      %v1087 = vsub.f32 %v1079, %v1083
      %v1088 = vsub.f32 %v1080, %v1086
      %v1089 = vmul.f32 %v1087, 1.442695
      %v1090 = vpow.pop %v1089
      %v1091 = vmul.f32 %v1088, 1.442695
      %v1092 = vpow.pop %v1091
      %v1093 = vsel %vm601, %v1090, 0.0
      %1094 = vadd.xlane.f32.xlu0 %v1093
      %v1095 = vpop.xlane.xlu0 %1094
      %v1096 = vsel %vm601, %v1092, 0.0
      %1097 = vadd.xlane.f32.xlu0 %v1096
      %v1098 = vpop.xlane.xlu0 %1097
      %v1099 = vrcp.pop %v1095
      %v1100 = vmul.f32 1.0, %v1099
      %v1101 = vrcp.pop %v1098
      %v1102 = vmul.f32 1.0, %v1101
      %v1103 = vmul.f32 %v1090, %v1100
      %v1104 = vmul.f32 %v1092, %v1102
      %v1105 = vmul.f32 %v1103, %v1016
      %v1106 = vmul.f32 %v1104, %v1017
      %v1107 = vpack.c.bf16 %v1106, %v1105
      %v1110 = vsel %vm601, %v1107, 0
      %1112 = vmatprep.subr.bf16.mxu0 0
      %1113 = vmatpush1.bf16.msra.mxu0 %v948
      %1114 = vmatprep.subr.bf16.mxu0 0
      %1115 = vmatpush1.bf16.msra.mxu0 0
      %1116 = vmatprep.subr.bf16.mxu0 0
      %1117 = vmatpush1.bf16.msra.mxu0 0
      %1118 = vmatprep.subr.bf16.mxu0 0
      %1119 = vmatpush1.bf16.msra.mxu0 0
      %1120 = vmatprep.subr.bf16.mxu0 0
      %1121 = vmatpush1.bf16.msra.mxu0 0
      %1122 = vmatprep.subr.bf16.mxu0 0
      %1123 = vmatpush1.bf16.msra.mxu0 0
      %1124 = vmatprep.subr.bf16.mxu0 0
      %1125 = vmatpush1.bf16.msra.mxu0 0
      %1126 = vmatprep.subr.bf16.mxu0 0
      %1127 = vmatpush1.bf16.msra.mxu0 0
      %1128 = vmatprep.subr.bf16.mxu0 0
      %1129 = vmatpush1.bf16.msra.mxu0 0
      %1130 = vmatprep.subr.bf16.mxu0 0
      %1131 = vmatpush1.bf16.msra.mxu0 0
      %1132 = vmatprep.subr.bf16.mxu0 0
      %1133 = vmatpush1.bf16.msra.mxu0 0
      %1134 = vmatprep.subr.bf16.mxu0 0
      %1135 = vmatpush1.bf16.msra.mxu0 0
      %1136 = vmatprep.subr.bf16.mxu0 0
      %1137 = vmatpush1.bf16.msra.mxu0 0
      %1138 = vmatprep.subr.bf16.mxu0 0
      %1139 = vmatpush1.bf16.msra.mxu0 0
      %1140 = vmatprep.subr.bf16.mxu0 0
      %1141 = vmatpush1.bf16.msra.mxu0 0
      %1142 = vmatprep.subr.bf16.mxu0 0
      %1143 = vmatpush1.bf16.msra.mxu0 0
      %1144 = vmatprep.mubr.bf16.mxu0 0
      %1145 = vmatmul.mubr.bf16.gmra.mrb[0].mxu0 %v1110
      %v1146 = vpop.f32.mrb[0].mxu0
      %v1147 = vadd.f32 0.0, %v1146
      %v1148 = vpop.f32.mrb[0].mxu0
      %v1149 = vpop.f32.mrb[0].mxu0
      %v1150 = vadd.f32 0.0, %v1149
      %v1151 = vpop.f32.mrb[0].mxu0
      %1152 = vdwg.mxu0
      %v1153 = vmul.f32 %v941, %v1105
      %v1154 = vmul.f32 %v942, %v1106
      %v1155 = vsel %vm601, %v1153, 0.0
      %1156 = vadd.xlane.f32.xlu0 %v1155
      %v1157 = vpop.xlane.xlu0 %1156
      %v1158 = vsel %vm601, %v1154, 0.0
      %1159 = vadd.xlane.f32.xlu0 %v1158
      %v1160 = vpop.xlane.xlu0 %1159
      %v1161 = vsub.f32 %v1147, %v1157
      %v1162 = vsub.f32 %v1150, %v1160
      %v1163 = vsel %vm601, %v1105, 0.0
      %1164 = vadd.xlane.f32.xlu0 %v1163
      %v1165 = vpop.xlane.xlu0 %1164
      %v1166 = vsel %vm601, %v1106, 0.0
      %1167 = vadd.xlane.f32.xlu0 %v1166
      %v1168 = vpop.xlane.xlu0 %1167
      %v1169 = vmul.f32 %v1165, %v697
      %v1170 = vmul.f32 %v1168, %v698
      %1173 = vrot.lane.b32.xlu0 %v1169, 64
      %v1174 = vpop.permute.xlu0 %1173
      %1175 = vrot.lane.b32.xlu0 %v1170, 64
      %v1176 = vpop.permute.xlu0 %1175
      %v1179 = vadd.f32 %v1161, %v1174
      %v1180 = vadd.f32 %v1162, %v1176
      %1183 = vrot.lane.b32.xlu0 %v1179, 64
      %v1184 = vpop.permute.xlu0 %1183
      %1185 = vrot.lane.b32.xlu0 %v1180, 64
      %v1186 = vpop.permute.xlu0 %1185
      %vm1189 = vcmask 1048064
      %1190 = vst.msk [vmem:[%s257] sm:$0xff] %vm1189, %v1184
      %1191 = vst.msk [vmem:[%s257 + $0x8] sm:$0xff] %vm1189, %v1186
      %p1192 = scmp.lt.s32.totalorder %s15, 1
      %s1193 = scalar_select %p1192, %s15, 1
      %s1194 = smul.addr %s1193, 2
      %s1195 = smul.addr %s1194, 8
      %s1196 = scalar_lea.vmem %s4, %s1195
      // Predicated region
      $region37: #{attention_tie_forward.4} parent=35 // pred_check
        %p1197 = pneg %p137
      $region38: #{attention_tie_forward.4} parent=35 // pred_check_branch
        %1199 = sbr.rel (%p1197) target = $region40
      $region39: #{attention_tie_forward.4} parent=35 // pred_region
        _
      $region40: #{attention_tie_forward.4} parent=35 // pred_fallthru
        _
    $region36: #{attention_tie_forward.4} parent=5 // pred_fallthru
      _
    %p1200 = scmp.le.s32.totalorder 2, %s10
    // Predicated region
    $region41: #{attention_tie_forward.4} parent=5 // pred_check
      %p1201 = pneg %p1200
    $region42: #{attention_tie_forward.4} parent=5 // pred_check_branch
      %1203 = sbr.rel (%p1201) target = $region44
    $region43: #{attention_tie_forward.4} parent=5 // pred_region
      %s1204 = ssub.s32 %s10, 2
      // Predicated region
      $region45: #{attention_tie_forward.4} parent=43 // pred_check
        %p1205 = pneg %p143
      $region46: #{attention_tie_forward.4} parent=43 // pred_check_branch
        %1207 = sbr.rel (%p1205) target = $region48
      $region47: #{attention_tie_forward.4} parent=43 // pred_region
        %p1208 = scmp.lt.s32.totalorder %s16, 1
        %s1209 = scalar_select %p1208, %s16, 1
        %s1210 = smul.addr %s1209, 2
        %s1211 = smul.addr %s1210, 8
        %s1212 = scalar_lea.vmem %s4, %s1211
      $region48: #{attention_tie_forward.4} parent=43 // pred_fallthru
        _
    $region44: #{attention_tie_forward.4} parent=5 // pred_fallthru
      _
  $region6: #{attention_tie_forward.4} parent=0 // loop_footer
    %s14 = sadd.s32 1, %s10
  $region7: #{attention_tie_forward.4} parent=0 // loop_footer_branch
    %9 = sbr.rel target = $region3
  $region8: #{attention_tie_forward.4} parent=0 // loop_exit
    _

</llo_original>
